<compile_context>
chip_gen: v6e
topology: v6e:2x2x1
jax: 0.10.0
libtpu: 0.0.40
codegen_flags: <defaults>
</compile_context>

<pallas_src>
import functools
import numpy as np

import jax
import jax.numpy as jnp
from jax import lax
from jax.experimental import pallas as pl
from jax.experimental.pallas import tpu as pltpu

NUM_MASK = 4
LANES = 128
NCOEF = 18          # a0 b0 c0  a1 b1 c1  az bz cz  ar br cr  ag bg cg  ab bb cb


# ------------------------------------------------------------------------
# Kernel 1 (fused geometry): RotateAxisAngle(180,'Z') + world->view + pinhole
# projection + per-face barycentric/z plane coefficients + per-face normals,
# on pre-gathered face vertices.  tri_ref is (1, 9, F_pad) with rows
# [v0x v0y v0z v1x v1y v1z v2x v2y v2z], faces on the lane axis.
# Output rows: 0..8 = a0,b0,c0,a1,b1,c1,az,bz,cz ; 9..11 = face normal.
# ------------------------------------------------------------------------
def _geom_kernel(camt_ref, tri_ref, out_ref, *, focal, cx, cy):
    b = pl.program_id(0)
    # get_train_camera negates x/y of the translation; R = identity
    tx = -camt_ref[3 * b + 0]
    ty = -camt_ref[3 * b + 1]
    tz = camt_ref[3 * b + 2]

    sx, sy, sz = [], [], []
    xr, yr, zr = [], [], []
    for s in range(3):                                   # static vertex-slot loop
        x = tri_ref[0, 3 * s + 0, :]
        y = tri_ref[0, 3 * s + 1, :]
        z = tri_ref[0, 3 * s + 2, :]
        # RotateAxisAngle(180, 'Z'): (x, y, z) -> (-x, -y, z)
        xm, ym, zm = -x, -y, z
        xr.append(xm); yr.append(ym); zr.append(zm)
        # view transform (translation only), then pinhole projection
        xv = xm + tx
        yv = ym + ty
        zv = zm + tz
        zsafe = jnp.where(jnp.abs(zv) < 1e-8,
                          jnp.where(zv < 0.0, jnp.float32(-1e-8), jnp.float32(1e-8)),
                          zv)
        inv_z = 1.0 / zsafe
        sx.append(focal * xv * inv_z + cx)
        sy.append(focal * yv * inv_z + cy)
        sz.append(zv)

    # per-face normal n = (v1-v0) x (v2-v0) on the rotated mesh (translation
    # does not affect edges) -> same value PyTorch3D pushes to all 3 vertices.
    d1x = xr[1] - xr[0]; d1y = yr[1] - yr[0]; d1z = zr[1] - zr[0]
    d2x = xr[2] - xr[0]; d2y = yr[2] - yr[0]; d2z = zr[2] - zr[0]
    nx = d1y * d2z - d1z * d2y
    ny = d1z * d2x - d1x * d2z
    nz = d1x * d2y - d1y * d2x

    # barycentric plane coefficients: w0 = a0*px + b0*py + c0, etc.
    x0, x1, x2 = sx
    y0, y1, y2 = sy
    z0, z1, z2 = sz
    e0x = y1 - y2; e0y = x2 - x1
    e1x = y2 - y0; e1y = x0 - x2
    denom = e0x * (x0 - x2) + e0y * (y0 - y2)
    valid = jnp.abs(denom) > 1e-9                        # cull degenerate/sliver faces
    inv = 1.0 / jnp.where(valid, denom, jnp.ones_like(denom))

    a0 = e0x * inv; b0 = e0y * inv
    c0 = -(a0 * x2 + b0 * y2)
    a1 = e1x * inv; b1 = e1y * inv
    c1 = -(a1 * x2 + b1 * y2)
    # z-plane (perspective_correct=False -> screen-space linear interpolation)
    dz0 = z0 - z2; dz1 = z1 - z2
    az = a0 * dz0 + a1 * dz1
    bz = b0 * dz0 + b1 * dz1
    cz = c0 * dz0 + c1 * dz1 + z2

    zero = jnp.zeros_like(denom)
    cull = jnp.full_like(denom, -1.0)                    # w0 = -1 everywhere -> never inside
    out_ref[0, 0, :] = jnp.where(valid, a0, zero)
    out_ref[0, 1, :] = jnp.where(valid, b0, zero)
    out_ref[0, 2, :] = jnp.where(valid, c0, cull)
    out_ref[0, 3, :] = jnp.where(valid, a1, zero)
    out_ref[0, 4, :] = jnp.where(valid, b1, zero)
    out_ref[0, 5, :] = jnp.where(valid, c1, zero)
    out_ref[0, 6, :] = jnp.where(valid, az, zero)
    out_ref[0, 7, :] = jnp.where(valid, bz, zero)
    out_ref[0, 8, :] = jnp.where(valid, cz, zero)
    out_ref[0, 9, :] = nx
    out_ref[0, 10, :] = ny
    out_ref[0, 11, :] = nz


def _geometry(tri_soa, cam_t_flat, *, focal, img_res):
    B, _, Fp = tri_soa.shape
    cx = cy = float(img_res // 2)
    return pl.pallas_call(
        functools.partial(_geom_kernel, focal=focal, cx=cx, cy=cy),
        grid=(B,),
        in_specs=[pl.BlockSpec(memory_space=pltpu.MemorySpace.SMEM),
                  pl.BlockSpec((1, 9, Fp), lambda b: (b, 0, 0))],
        out_specs=pl.BlockSpec((1, 12, Fp), lambda b: (b, 0, 0)),
        out_shape=jax.ShapeDtypeStruct((B, 12, Fp), jnp.float32),
        compiler_params=pltpu.CompilerParams(dimension_semantics=("parallel",)),
    )(cam_t_flat, tri_soa)


# ------------------------------------------------------------------------
# Kernel 2: hard rasterizer (blur_radius=0, faces_per_pixel=1) consuming the
# precomputed per-face plane coefficients.  Pixels are processed in lane-dense
# (tile_rows, 128) tiles; the coefficient table is a flat 1-D SMEM array,
# coefficient j of face f in batch b at  b*NCOEF*f_stride + j*f_stride + f.
# ------------------------------------------------------------------------
def _raster_kernel(tab_ref, out_ref, *, n_faces, f_stride, width, tile_rows, unroll):
    b = pl.program_id(0)
    t = pl.program_id(1)

    row = lax.broadcasted_iota(jnp.int32, (tile_rows, LANES), 0)
    col = lax.broadcasted_iota(jnp.int32, (tile_rows, LANES), 1)
    flat = (t * tile_rows + row) * LANES + col
    if (width & (width - 1)) == 0:
        # power-of-two width: exact integer row/col via shift/mask
        sh = width.bit_length() - 1
        py = (flat >> sh).astype(jnp.float32) + 0.5
        px = (flat & (width - 1)).astype(jnp.float32) + 0.5
    else:
        # TODO(synk): float fallback relies on H*W << 2^24
        flat_f = flat.astype(jnp.float32)
        w_f = jnp.float32(width)
        py_f = jnp.floor(flat_f / w_f)
        px = flat_f - py_f * w_f + 0.5
        py = py_f + 0.5

    zfar = jnp.float32(1e10)
    zeros = jnp.zeros((tile_rows, LANES), jnp.float32)
    init = (jnp.full((tile_rows, LANES), zfar, jnp.float32), zeros, zeros, zeros)
    base = b * (NCOEF * f_stride)

    def body(f, carry):
        zbuf, r, g, bl = carry
        k = base + f
        a0 = tab_ref[k]
        b0 = tab_ref[k + f_stride]
        c0 = tab_ref[k + 2 * f_stride]
        a1 = tab_ref[k + 3 * f_stride]
        b1 = tab_ref[k + 4 * f_stride]
        c1 = tab_ref[k + 5 * f_stride]
        az = tab_ref[k + 6 * f_stride]
        bz = tab_ref[k + 7 * f_stride]
        cz = tab_ref[k + 8 * f_stride]
        ar = tab_ref[k + 9 * f_stride]
        br = tab_ref[k + 10 * f_stride]
        cr = tab_ref[k + 11 * f_stride]
        ag = tab_ref[k + 12 * f_stride]
        bg = tab_ref[k + 13 * f_stride]
        cg = tab_ref[k + 14 * f_stride]
        ab = tab_ref[k + 15 * f_stride]
        bb = tab_ref[k + 16 * f_stride]
        cb = tab_ref[k + 17 * f_stride]

        w0 = a0 * px + b0 * py + c0
        w1 = a1 * px + b1 * py + c1
        w2 = 1.0 - w0 - w1
        zf = az * px + bz * py + cz
        inside = (w0 >= 0.0) & (w1 >= 0.0) & (w2 >= 0.0) & (zf > 1e-6)
        closer = inside & (zf < zbuf)

        rf = ar * px + br * py + cr
        gf = ag * px + bg * py + cg
        bf = ab * px + bb * py + cb

        zbuf = jnp.where(closer, zf, zbuf)
        r = jnp.where(closer, rf, r)
        g = jnp.where(closer, gf, g)
        bl = jnp.where(closer, bf, bl)
        return (zbuf, r, g, bl)

    zbuf, r, g, bl = lax.fori_loop(0, n_faces, body, init, unroll=unroll)

    # AmbientLights((1,1,1)) => shaded color == interpolated texture;
    # background (0,0,0); alpha = coverage derived from the z-buffer sentinel.
    alpha = (zbuf < jnp.float32(1e9)).astype(jnp.float32)
    out_ref[0, 0, :, :] = r
    out_ref[0, 1, :, :] = g
    out_ref[0, 2, :, :] = bl
    out_ref[0, 3, :, :] = alpha


def _rasterize(table_flat, *, batch, n_faces, f_stride, img_res, tile_rows_max=16):
    H = W = img_res
    n_pix = H * W
    rows = pl.cdiv(n_pix, LANES)
    tile_rows = min(rows, tile_rows_max)           # (16,128) tile; full rows if smaller
    num_tiles = pl.cdiv(rows, tile_rows)
    rows_padded = num_tiles * tile_rows
    # deeper unroll hides face f+1 scalar loads under face f vector selects
    unroll = True if n_faces <= 64 else 8

    out = pl.pallas_call(
        functools.partial(_raster_kernel, n_faces=n_faces, f_stride=f_stride,
                          width=W, tile_rows=tile_rows, unroll=unroll),
        grid=(batch, num_tiles),
        in_specs=[pl.BlockSpec(memory_space=pltpu.MemorySpace.SMEM)],
        out_specs=pl.BlockSpec((1, 4, tile_rows, LANES), lambda b, t: (b, 0, t, 0)),
        out_shape=jax.ShapeDtypeStruct((batch, 4, rows_padded, LANES), jnp.float32),
        compiler_params=pltpu.CompilerParams(
            dimension_semantics=("parallel", "parallel")),
    )(table_flat)

    img = out.reshape(batch, 4, rows_padded * LANES)[:, :, :n_pix]
    return img.reshape(batch, 4, H, W)            # NCHW, matches rearrange('b h w c -> b c h w')


# ------------------------------------------------------------------------
# Full forward (SoftRenderer.forward equivalent, use_parts_mask=False)
# ------------------------------------------------------------------------
def soft_renderer_forward(vertices, camera_translation, faces, body_part_texture,
                          *, img_res=16, focal_length=16.0):
    B, V, _ = vertices.shape
    Fc = faces.shape[0]
    F_pad = ((Fc + LANES - 1) // LANES) * LANES    # lane-dense face axis

    # SoA lane-dense per-face vertex table built by three small gathers on the
    # transposed (B,3,V) vertices (no transpose of the big gathered tensor).
    verts_t = jnp.transpose(vertices, (0, 2, 1)).astype(jnp.float32)   # (B,3,V)
    tri_soa = jnp.concatenate([verts_t[:, :, faces[:, 0]],
                               verts_t[:, :, faces[:, 1]],
                               verts_t[:, :, faces[:, 2]]], axis=1)    # (B,9,F)
    if F_pad != Fc:
        tri_soa = jnp.pad(tri_soa, ((0, 0), (0, 0), (0, F_pad - Fc)))  # zero faces -> culled

    cam_flat = camera_translation.reshape(-1).astype(jnp.float32)

    geom = _geometry(tri_soa, cam_flat, focal=focal_length, img_res=img_res)  # (B,12,F_pad)
    coef_geo = geom[:, :9, :]                      # a0 b0 c0 a1 b1 c1 az bz cz
    fnorm = geom[:, 9:12, :Fc]                     # (B,3,F) unnormalized face normals

    # TODO(synk): vertex-normal scatter-add (index_add over faces) stays in plain
    # JAX -- data-dependent scatter has no clean Pallas TPU equivalent here.
    flat_idx = faces.reshape(-1)                                   # (F*3,) (f, slot) order
    fn_rep = jnp.repeat(fnorm, 3, axis=2)                          # (B,3,F*3)
    vert_norm = jnp.zeros((B, 3, V), jnp.float32).at[:, :, flat_idx].add(fn_rep)

    # F.normalize(..., eps=1e-6) per vertex, then per-vertex texture scale.
    nrm = jnp.sqrt(jnp.sum(vert_norm * vert_norm, axis=1, keepdims=True))
    col_v = (vert_norm / jnp.maximum(nrm, 1e-6)) * body_part_texture[None, None, :]  # (B,3,V)

    # Fold the RGB interpolation into per-face plane coefficients using the
    # barycentric coefficients from the geometry kernel:
    #   u(px,py) = a_u*px + b_u*py + c_u,  a_u = a0*(u0-u2) + a1*(u1-u2), etc.
    u0 = col_v[:, :, faces[:, 0]]                                  # (B,3,F)
    u1 = col_v[:, :, faces[:, 1]]
    u2 = col_v[:, :, faces[:, 2]]
    d0 = u0 - u2
    d1 = u1 - u2
    a0 = coef_geo[:, 0, :Fc][:, None, :]; b0 = coef_geo[:, 1, :Fc][:, None, :]
    c0 = coef_geo[:, 2, :Fc][:, None, :]
    a1 = coef_geo[:, 3, :Fc][:, None, :]; b1 = coef_geo[:, 4, :Fc][:, None, :]
    c1 = coef_geo[:, 5, :Fc][:, None, :]
    a_rgb = a0 * d0 + a1 * d1                                      # (B,3,F)
    b_rgb = b0 * d0 + b1 * d1
    c_rgb = c0 * d0 + c1 * d1 + u2

    rgb_rows = jnp.stack([a_rgb[:, 0], b_rgb[:, 0], c_rgb[:, 0],
                          a_rgb[:, 1], b_rgb[:, 1], c_rgb[:, 1],
                          a_rgb[:, 2], b_rgb[:, 2], c_rgb[:, 2]], axis=1)   # (B,9,F)
    if F_pad != Fc:
        rgb_rows = jnp.pad(rgb_rows, ((0, 0), (0, 0), (0, F_pad - Fc)))

    # Flat coefficient-major SMEM table: index = b*18*F_pad + coef*F_pad + f.
    # TODO(synk): at SMPL scale stream this per (batch, face-chunk) instead of
    # whole-array SMEM (next-pow2 SMEM padding cliff), and bin faces per tile.
    table_flat = jnp.concatenate([coef_geo, rgb_rows], axis=1).reshape(-1)  # (B*18*F_pad,)

    rend_img = _rasterize(table_flat, batch=B, n_faces=Fc, f_stride=F_pad,
                          img_res=img_res)
    return {"rend_img": rend_img}


# ------------------------------------------------------------------------
# Deterministic synthetic mesh / parameters
# ------------------------------------------------------------------------
def make_mesh(n=4):
    xs = np.linspace(-0.8, 0.8, n)
    ys = np.linspace(-0.8, 0.8, n)
    verts = []
    for y in ys:
        for x in xs:
            verts.append([x, y, 0.1 * np.sin(3.0 * x) * np.cos(2.0 * y)])
    verts = np.asarray(verts, np.float32)
    faces = []
    for i in range(n - 1):
        for j in range(n - 1):
            a = i * n + j
            b = a + 1
            c = a + n
            d = c + 1
            faces.append([a, b, c])
            faces.append([b, d, c])
    return verts, np.asarray(faces, np.int32)


if __name__ == "__main__":
    IMG_RES = 16
    FOCAL = 16.0
    B = 2

    verts_np, faces_np = make_mesh(4)                    # V=16, F=18
    V = verts_np.shape[0]

    key = jax.random.PRNGKey(0)
    vertices = jnp.asarray(verts_np)[None] + 0.01 * jax.random.normal(
        key, (B, V, 3), jnp.float32)
    camera_translation = jnp.array([[0.05, -0.05, 2.5],
                                    [-0.05, 0.05, 2.8]], jnp.float32)
    faces = jnp.asarray(faces_np)
    # synthetic stand-in for get_body_part_texture(): labels in {1..num_mask}
    body_part_texture = jnp.asarray(
        ((np.arange(V) % NUM_MASK) + 1).astype(np.float32))

    fwd = jax.jit(functools.partial(soft_renderer_forward,
                                    img_res=IMG_RES, focal_length=FOCAL))
    out = fwd(vertices, camera_translation, faces, body_part_texture)
    rend_img = jax.block_until_ready(out["rend_img"])
    assert rend_img.shape == (B, 4, IMG_RES, IMG_RES)
    assert rend_img.dtype == jnp.float32
    print("KERNEL_OK")
</pallas_src>

<mosaic_0001>
module attributes {stable_mosaic.version = 11 : i64} {
  func.func @_geom_kernel(%arg0: i32, %arg1: memref<6xf32, #tpu.memory_space<smem>>, %arg2: memref<1x9x128xf32, #tpu.memory_space<vmem>>, %arg3: memref<1x12x128xf32, #tpu.memory_space<vmem>>) attributes {dimension_semantics = [#tpu.dimension_semantics<parallel>], iteration_bounds = array<i64: 2>, scalar_prefetch = 0 : i64, scratch_operands = 0 : i64, tpu.core_type = #tpu.core_type<tc>, window_params = [{transform_indices = @transform_0, window_bounds = array<i64: 6>}, {transform_indices = @transform_1, window_bounds = array<i64: 1, 9, 128>}, {transform_indices = @transform_2, window_bounds = array<i64: 1, 12, 128>}]} {
    %c3_i32 = arith.constant 3 : i32
    %0 = arith.muli %c3_i32, %arg0 : i32
    %c0_i32 = arith.constant 0 : i32
    %1 = arith.addi %0, %c0_i32 : i32
    %2 = arith.index_cast %1 : i32 to index
    %3 = memref.load %arg1[%2] : memref<6xf32, #tpu.memory_space<smem>>
    %cst = arith.constant 0.000000e+00 : f32
    %4 = arith.subf %cst, %3 : f32
    %c3_i32_0 = arith.constant 3 : i32
    %5 = arith.muli %c3_i32_0, %arg0 : i32
    %c1_i32 = arith.constant 1 : i32
    %6 = arith.addi %5, %c1_i32 : i32
    %7 = arith.index_cast %6 : i32 to index
    %8 = memref.load %arg1[%7] : memref<6xf32, #tpu.memory_space<smem>>
    %cst_1 = arith.constant 0.000000e+00 : f32
    %9 = arith.subf %cst_1, %8 : f32
    %c3_i32_2 = arith.constant 3 : i32
    %10 = arith.muli %c3_i32_2, %arg0 : i32
    %c2_i32 = arith.constant 2 : i32
    %11 = arith.addi %10, %c2_i32 : i32
    %12 = arith.index_cast %11 : i32 to index
    %13 = memref.load %arg1[%12] : memref<6xf32, #tpu.memory_space<smem>>
    %c0 = arith.constant 0 : index
    %c0_3 = arith.constant 0 : index
    %c0_4 = arith.constant 0 : index
    %14 = vector.load %arg2[%c0, %c0_3, %c0_4] : memref<1x9x128xf32, #tpu.memory_space<vmem>>, vector<1x1x128xf32>
    %15 = vector.shape_cast %14 : vector<1x1x128xf32> to vector<128xf32>
    %c0_5 = arith.constant 0 : index
    %c1 = arith.constant 1 : index
    %c0_6 = arith.constant 0 : index
    %16 = vector.load %arg2[%c0_5, %c1, %c0_6] : memref<1x9x128xf32, #tpu.memory_space<vmem>>, vector<1x1x128xf32>
    %17 = vector.shape_cast %16 : vector<1x1x128xf32> to vector<128xf32>
    %c0_7 = arith.constant 0 : index
    %c2 = arith.constant 2 : index
    %c0_8 = arith.constant 0 : index
    %18 = vector.load %arg2[%c0_7, %c2, %c0_8] : memref<1x9x128xf32, #tpu.memory_space<vmem>>, vector<1x1x128xf32>
    %19 = vector.shape_cast %18 : vector<1x1x128xf32> to vector<128xf32>
    %cst_9 = arith.constant 0.000000e+00 : f32
    %20 = vector.broadcast %cst_9 : f32 to vector<128xf32>
    %21 = arith.subf %20, %15 : vector<128xf32>
    %cst_10 = arith.constant 0.000000e+00 : f32
    %22 = vector.broadcast %cst_10 : f32 to vector<128xf32>
    %23 = arith.subf %22, %17 : vector<128xf32>
    %24 = vector.broadcast %4 : f32 to vector<128xf32>
    %25 = arith.addf %21, %24 : vector<128xf32>
    %26 = vector.broadcast %9 : f32 to vector<128xf32>
    %27 = arith.addf %23, %26 : vector<128xf32>
    %28 = vector.broadcast %13 : f32 to vector<128xf32>
    %29 = arith.addf %19, %28 : vector<128xf32>
    %30 = math.absf %29 : vector<128xf32>
    %cst_11 = arith.constant 9.99999993E-9 : f32
    %31 = vector.broadcast %cst_11 : f32 to vector<128xf32>
    %32 = arith.cmpf olt, %30, %31 : vector<128xf32>
    %cst_12 = arith.constant 0.000000e+00 : f32
    %33 = vector.broadcast %cst_12 : f32 to vector<128xf32>
    %34 = arith.cmpf olt, %29, %33 : vector<128xf32>
    %cst_13 = arith.constant -9.99999993E-9 : f32
    %cst_14 = arith.constant 9.99999993E-9 : f32
    %35 = vector.broadcast %cst_13 : f32 to vector<128xf32>
    %36 = vector.broadcast %cst_14 : f32 to vector<128xf32>
    %37 = arith.select %34, %35, %36 : vector<128xi1>, vector<128xf32>
    %38 = arith.select %32, %37, %29 : vector<128xi1>, vector<128xf32>
    %cst_15 = arith.constant 1.000000e+00 : f32
    %39 = vector.broadcast %cst_15 : f32 to vector<128xf32>
    %40 = arith.divf %39, %38 : vector<128xf32>
    %cst_16 = arith.constant 1.600000e+01 : f32
    %41 = vector.broadcast %cst_16 : f32 to vector<128xf32>
    %42 = arith.mulf %41, %25 : vector<128xf32>
    %43 = arith.mulf %42, %40 : vector<128xf32>
    %cst_17 = arith.constant 8.000000e+00 : f32
    %44 = vector.broadcast %cst_17 : f32 to vector<128xf32>
    %45 = arith.addf %43, %44 : vector<128xf32>
    %cst_18 = arith.constant 1.600000e+01 : f32
    %46 = vector.broadcast %cst_18 : f32 to vector<128xf32>
    %47 = arith.mulf %46, %27 : vector<128xf32>
    %48 = arith.mulf %47, %40 : vector<128xf32>
    %cst_19 = arith.constant 8.000000e+00 : f32
    %49 = vector.broadcast %cst_19 : f32 to vector<128xf32>
    %50 = arith.addf %48, %49 : vector<128xf32>
    %c0_20 = arith.constant 0 : index
    %c3 = arith.constant 3 : index
    %c0_21 = arith.constant 0 : index
    %51 = vector.load %arg2[%c0_20, %c3, %c0_21] : memref<1x9x128xf32, #tpu.memory_space<vmem>>, vector<1x1x128xf32>
    %52 = vector.shape_cast %51 : vector<1x1x128xf32> to vector<128xf32>
    %c0_22 = arith.constant 0 : index
    %c4 = arith.constant 4 : index
    %c0_23 = arith.constant 0 : index
    %53 = vector.load %arg2[%c0_22, %c4, %c0_23] : memref<1x9x128xf32, #tpu.memory_space<vmem>>, vector<1x1x128xf32>
    %54 = vector.shape_cast %53 : vector<1x1x128xf32> to vector<128xf32>
    %c0_24 = arith.constant 0 : index
    %c5 = arith.constant 5 : index
    %c0_25 = arith.constant 0 : index
    %55 = vector.load %arg2[%c0_24, %c5, %c0_25] : memref<1x9x128xf32, #tpu.memory_space<vmem>>, vector<1x1x128xf32>
    %56 = vector.shape_cast %55 : vector<1x1x128xf32> to vector<128xf32>
    %cst_26 = arith.constant 0.000000e+00 : f32
    %57 = vector.broadcast %cst_26 : f32 to vector<128xf32>
    %58 = arith.subf %57, %52 : vector<128xf32>
    %cst_27 = arith.constant 0.000000e+00 : f32
    %59 = vector.broadcast %cst_27 : f32 to vector<128xf32>
    %60 = arith.subf %59, %54 : vector<128xf32>
    %61 = vector.broadcast %4 : f32 to vector<128xf32>
    %62 = arith.addf %58, %61 : vector<128xf32>
    %63 = vector.broadcast %9 : f32 to vector<128xf32>
    %64 = arith.addf %60, %63 : vector<128xf32>
    %65 = vector.broadcast %13 : f32 to vector<128xf32>
    %66 = arith.addf %56, %65 : vector<128xf32>
    %67 = math.absf %66 : vector<128xf32>
    %cst_28 = arith.constant 9.99999993E-9 : f32
    %68 = vector.broadcast %cst_28 : f32 to vector<128xf32>
    %69 = arith.cmpf olt, %67, %68 : vector<128xf32>
    %cst_29 = arith.constant 0.000000e+00 : f32
    %70 = vector.broadcast %cst_29 : f32 to vector<128xf32>
    %71 = arith.cmpf olt, %66, %70 : vector<128xf32>
    %cst_30 = arith.constant -9.99999993E-9 : f32
    %cst_31 = arith.constant 9.99999993E-9 : f32
    %72 = vector.broadcast %cst_30 : f32 to vector<128xf32>
    %73 = vector.broadcast %cst_31 : f32 to vector<128xf32>
    %74 = arith.select %71, %72, %73 : vector<128xi1>, vector<128xf32>
    %75 = arith.select %69, %74, %66 : vector<128xi1>, vector<128xf32>
    %cst_32 = arith.constant 1.000000e+00 : f32
    %76 = vector.broadcast %cst_32 : f32 to vector<128xf32>
    %77 = arith.divf %76, %75 : vector<128xf32>
    %cst_33 = arith.constant 1.600000e+01 : f32
    %78 = vector.broadcast %cst_33 : f32 to vector<128xf32>
    %79 = arith.mulf %78, %62 : vector<128xf32>
    %80 = arith.mulf %79, %77 : vector<128xf32>
    %cst_34 = arith.constant 8.000000e+00 : f32
    %81 = vector.broadcast %cst_34 : f32 to vector<128xf32>
    %82 = arith.addf %80, %81 : vector<128xf32>
    %cst_35 = arith.constant 1.600000e+01 : f32
    %83 = vector.broadcast %cst_35 : f32 to vector<128xf32>
    %84 = arith.mulf %83, %64 : vector<128xf32>
    %85 = arith.mulf %84, %77 : vector<128xf32>
    %cst_36 = arith.constant 8.000000e+00 : f32
    %86 = vector.broadcast %cst_36 : f32 to vector<128xf32>
    %87 = arith.addf %85, %86 : vector<128xf32>
    %c0_37 = arith.constant 0 : index
    %c6 = arith.constant 6 : index
    %c0_38 = arith.constant 0 : index
    %88 = vector.load %arg2[%c0_37, %c6, %c0_38] : memref<1x9x128xf32, #tpu.memory_space<vmem>>, vector<1x1x128xf32>
    %89 = vector.shape_cast %88 : vector<1x1x128xf32> to vector<128xf32>
    %c0_39 = arith.constant 0 : index
    %c7 = arith.constant 7 : index
    %c0_40 = arith.constant 0 : index
    %90 = vector.load %arg2[%c0_39, %c7, %c0_40] : memref<1x9x128xf32, #tpu.memory_space<vmem>>, vector<1x1x128xf32>
    %91 = vector.shape_cast %90 : vector<1x1x128xf32> to vector<128xf32>
    %c0_41 = arith.constant 0 : index
    %c8 = arith.constant 8 : index
    %c0_42 = arith.constant 0 : index
    %92 = vector.load %arg2[%c0_41, %c8, %c0_42] : memref<1x9x128xf32, #tpu.memory_space<vmem>>, vector<1x1x128xf32>
    %93 = vector.shape_cast %92 : vector<1x1x128xf32> to vector<128xf32>
    %cst_43 = arith.constant 0.000000e+00 : f32
    %94 = vector.broadcast %cst_43 : f32 to vector<128xf32>
    %95 = arith.subf %94, %89 : vector<128xf32>
    %cst_44 = arith.constant 0.000000e+00 : f32
    %96 = vector.broadcast %cst_44 : f32 to vector<128xf32>
    %97 = arith.subf %96, %91 : vector<128xf32>
    %98 = vector.broadcast %4 : f32 to vector<128xf32>
    %99 = arith.addf %95, %98 : vector<128xf32>
    %100 = vector.broadcast %9 : f32 to vector<128xf32>
    %101 = arith.addf %97, %100 : vector<128xf32>
    %102 = vector.broadcast %13 : f32 to vector<128xf32>
    %103 = arith.addf %93, %102 : vector<128xf32>
    %104 = math.absf %103 : vector<128xf32>
    %cst_45 = arith.constant 9.99999993E-9 : f32
    %105 = vector.broadcast %cst_45 : f32 to vector<128xf32>
    %106 = arith.cmpf olt, %104, %105 : vector<128xf32>
    %cst_46 = arith.constant 0.000000e+00 : f32
    %107 = vector.broadcast %cst_46 : f32 to vector<128xf32>
    %108 = arith.cmpf olt, %103, %107 : vector<128xf32>
    %cst_47 = arith.constant -9.99999993E-9 : f32
    %cst_48 = arith.constant 9.99999993E-9 : f32
    %109 = vector.broadcast %cst_47 : f32 to vector<128xf32>
    %110 = vector.broadcast %cst_48 : f32 to vector<128xf32>
    %111 = arith.select %108, %109, %110 : vector<128xi1>, vector<128xf32>
    %112 = arith.select %106, %111, %103 : vector<128xi1>, vector<128xf32>
    %cst_49 = arith.constant 1.000000e+00 : f32
    %113 = vector.broadcast %cst_49 : f32 to vector<128xf32>
    %114 = arith.divf %113, %112 : vector<128xf32>
    %cst_50 = arith.constant 1.600000e+01 : f32
    %115 = vector.broadcast %cst_50 : f32 to vector<128xf32>
    %116 = arith.mulf %115, %99 : vector<128xf32>
    %117 = arith.mulf %116, %114 : vector<128xf32>
    %cst_51 = arith.constant 8.000000e+00 : f32
    %118 = vector.broadcast %cst_51 : f32 to vector<128xf32>
    %119 = arith.addf %117, %118 : vector<128xf32>
    %cst_52 = arith.constant 1.600000e+01 : f32
    %120 = vector.broadcast %cst_52 : f32 to vector<128xf32>
    %121 = arith.mulf %120, %101 : vector<128xf32>
    %122 = arith.mulf %121, %114 : vector<128xf32>
    %cst_53 = arith.constant 8.000000e+00 : f32
    %123 = vector.broadcast %cst_53 : f32 to vector<128xf32>
    %124 = arith.addf %122, %123 : vector<128xf32>
    %125 = arith.subf %58, %21 : vector<128xf32>
    %126 = arith.subf %60, %23 : vector<128xf32>
    %127 = arith.subf %56, %19 : vector<128xf32>
    %128 = arith.subf %95, %21 : vector<128xf32>
    %129 = arith.subf %97, %23 : vector<128xf32>
    %130 = arith.subf %93, %19 : vector<128xf32>
    %131 = arith.mulf %126, %130 : vector<128xf32>
    %132 = arith.mulf %127, %129 : vector<128xf32>
    %133 = arith.subf %131, %132 : vector<128xf32>
    %134 = arith.mulf %127, %128 : vector<128xf32>
    %135 = arith.mulf %125, %130 : vector<128xf32>
    %136 = arith.subf %134, %135 : vector<128xf32>
    %137 = arith.mulf %125, %129 : vector<128xf32>
    %138 = arith.mulf %126, %128 : vector<128xf32>
    %139 = arith.subf %137, %138 : vector<128xf32>
    %140 = arith.subf %87, %124 : vector<128xf32>
    %141 = arith.subf %119, %82 : vector<128xf32>
    %142 = arith.subf %124, %50 : vector<128xf32>
    %143 = arith.subf %45, %119 : vector<128xf32>
    %144 = arith.subf %45, %119 : vector<128xf32>
    %145 = arith.mulf %140, %144 : vector<128xf32>
    %146 = arith.subf %50, %124 : vector<128xf32>
    %147 = arith.mulf %141, %146 : vector<128xf32>
    %148 = arith.addf %145, %147 : vector<128xf32>
    %149 = math.absf %148 : vector<128xf32>
    %cst_54 = arith.constant 9.99999971E-10 : f32
    %150 = vector.broadcast %cst_54 : f32 to vector<128xf32>
    %151 = arith.cmpf ogt, %149, %150 : vector<128xf32>
    %cst_55 = arith.constant 1.000000e+00 : f32
    %152 = vector.broadcast %cst_55 : f32 to vector<128xf32>
    %153 = arith.select %151, %148, %152 : vector<128xi1>, vector<128xf32>
    %cst_56 = arith.constant 1.000000e+00 : f32
    %154 = vector.broadcast %cst_56 : f32 to vector<128xf32>
    %155 = arith.divf %154, %153 : vector<128xf32>
    %156 = arith.mulf %140, %155 : vector<128xf32>
    %157 = arith.mulf %141, %155 : vector<128xf32>
    %158 = arith.mulf %156, %119 : vector<128xf32>
    %159 = arith.mulf %157, %124 : vector<128xf32>
    %160 = arith.addf %158, %159 : vector<128xf32>
    %cst_57 = arith.constant 0.000000e+00 : f32
    %161 = vector.broadcast %cst_57 : f32 to vector<128xf32>
    %162 = arith.subf %161, %160 : vector<128xf32>
    %163 = arith.mulf %142, %155 : vector<128xf32>
    %164 = arith.mulf %143, %155 : vector<128xf32>
    %165 = arith.mulf %163, %119 : vector<128xf32>
    %166 = arith.mulf %164, %124 : vector<128xf32>
    %167 = arith.addf %165, %166 : vector<128xf32>
    %cst_58 = arith.constant 0.000000e+00 : f32
    %168 = vector.broadcast %cst_58 : f32 to vector<128xf32>
    %169 = arith.subf %168, %167 : vector<128xf32>
    %170 = arith.subf %29, %103 : vector<128xf32>
    %171 = arith.subf %66, %103 : vector<128xf32>
    %172 = arith.mulf %156, %170 : vector<128xf32>
    %173 = arith.mulf %163, %171 : vector<128xf32>
    %174 = arith.addf %172, %173 : vector<128xf32>
    %175 = arith.mulf %157, %170 : vector<128xf32>
    %176 = arith.mulf %164, %171 : vector<128xf32>
    %177 = arith.addf %175, %176 : vector<128xf32>
    %178 = arith.mulf %162, %170 : vector<128xf32>
    %179 = arith.mulf %169, %171 : vector<128xf32>
    %180 = arith.addf %178, %179 : vector<128xf32>
    %181 = arith.addf %180, %103 : vector<128xf32>
    %cst_59 = arith.constant 0.000000e+00 : f32
    %182 = vector.broadcast %cst_59 : f32 to vector<128xf32>
    %cst_60 = arith.constant -1.000000e+00 : f32
    %183 = vector.broadcast %cst_60 : f32 to vector<128xf32>
    %184 = arith.select %151, %156, %182 : vector<128xi1>, vector<128xf32>
    %c0_61 = arith.constant 0 : index
    %c0_62 = arith.constant 0 : index
    %c0_63 = arith.constant 0 : index
    %185 = vector.load %arg3[%c0_61, %c0_62, %c0_63] : memref<1x12x128xf32, #tpu.memory_space<vmem>>, vector<1x1x128xf32>
    %186 = vector.shape_cast %185 : vector<1x1x128xf32> to vector<128xf32>
    %187 = vector.shape_cast %184 : vector<128xf32> to vector<1x1x128xf32>
    tpu.vector_store %arg3[%c0_61, %c0_62, %c0_63], %187 {strides = array<i32>} : memref<1x12x128xf32, #tpu.memory_space<vmem>>, vector<1x1x128xf32>,
    %188 = arith.select %151, %157, %182 : vector<128xi1>, vector<128xf32>
    %c0_64 = arith.constant 0 : index
    %c1_65 = arith.constant 1 : index
    %c0_66 = arith.constant 0 : index
    %189 = vector.load %arg3[%c0_64, %c1_65, %c0_66] : memref<1x12x128xf32, #tpu.memory_space<vmem>>, vector<1x1x128xf32>
    %190 = vector.shape_cast %189 : vector<1x1x128xf32> to vector<128xf32>
    %191 = vector.shape_cast %188 : vector<128xf32> to vector<1x1x128xf32>
    tpu.vector_store %arg3[%c0_64, %c1_65, %c0_66], %191 {strides = array<i32>} : memref<1x12x128xf32, #tpu.memory_space<vmem>>, vector<1x1x128xf32>,
    %192 = arith.select %151, %162, %183 : vector<128xi1>, vector<128xf32>
    %c0_67 = arith.constant 0 : index
    %c2_68 = arith.constant 2 : index
    %c0_69 = arith.constant 0 : index
    %193 = vector.load %arg3[%c0_67, %c2_68, %c0_69] : memref<1x12x128xf32, #tpu.memory_space<vmem>>, vector<1x1x128xf32>
    %194 = vector.shape_cast %193 : vector<1x1x128xf32> to vector<128xf32>
    %195 = vector.shape_cast %192 : vector<128xf32> to vector<1x1x128xf32>
    tpu.vector_store %arg3[%c0_67, %c2_68, %c0_69], %195 {strides = array<i32>} : memref<1x12x128xf32, #tpu.memory_space<vmem>>, vector<1x1x128xf32>,
    %196 = arith.select %151, %163, %182 : vector<128xi1>, vector<128xf32>
    %c0_70 = arith.constant 0 : index
    %c3_71 = arith.constant 3 : index
    %c0_72 = arith.constant 0 : index
    %197 = vector.load %arg3[%c0_70, %c3_71, %c0_72] : memref<1x12x128xf32, #tpu.memory_space<vmem>>, vector<1x1x128xf32>
    %198 = vector.shape_cast %197 : vector<1x1x128xf32> to vector<128xf32>
    %199 = vector.shape_cast %196 : vector<128xf32> to vector<1x1x128xf32>
    tpu.vector_store %arg3[%c0_70, %c3_71, %c0_72], %199 {strides = array<i32>} : memref<1x12x128xf32, #tpu.memory_space<vmem>>, vector<1x1x128xf32>,
    %200 = arith.select %151, %164, %182 : vector<128xi1>, vector<128xf32>
    %c0_73 = arith.constant 0 : index
    %c4_74 = arith.constant 4 : index
    %c0_75 = arith.constant 0 : index
    %201 = vector.load %arg3[%c0_73, %c4_74, %c0_75] : memref<1x12x128xf32, #tpu.memory_space<vmem>>, vector<1x1x128xf32>
    %202 = vector.shape_cast %201 : vector<1x1x128xf32> to vector<128xf32>
    %203 = vector.shape_cast %200 : vector<128xf32> to vector<1x1x128xf32>
    tpu.vector_store %arg3[%c0_73, %c4_74, %c0_75], %203 {strides = array<i32>} : memref<1x12x128xf32, #tpu.memory_space<vmem>>, vector<1x1x128xf32>,
    %204 = arith.select %151, %169, %182 : vector<128xi1>, vector<128xf32>
    %c0_76 = arith.constant 0 : index
    %c5_77 = arith.constant 5 : index
    %c0_78 = arith.constant 0 : index
    %205 = vector.load %arg3[%c0_76, %c5_77, %c0_78] : memref<1x12x128xf32, #tpu.memory_space<vmem>>, vector<1x1x128xf32>
    %206 = vector.shape_cast %205 : vector<1x1x128xf32> to vector<128xf32>
    %207 = vector.shape_cast %204 : vector<128xf32> to vector<1x1x128xf32>
    tpu.vector_store %arg3[%c0_76, %c5_77, %c0_78], %207 {strides = array<i32>} : memref<1x12x128xf32, #tpu.memory_space<vmem>>, vector<1x1x128xf32>,
    %208 = arith.select %151, %174, %182 : vector<128xi1>, vector<128xf32>
    %c0_79 = arith.constant 0 : index
    %c6_80 = arith.constant 6 : index
    %c0_81 = arith.constant 0 : index
    %209 = vector.load %arg3[%c0_79, %c6_80, %c0_81] : memref<1x12x128xf32, #tpu.memory_space<vmem>>, vector<1x1x128xf32>
    %210 = vector.shape_cast %209 : vector<1x1x128xf32> to vector<128xf32>
    %211 = vector.shape_cast %208 : vector<128xf32> to vector<1x1x128xf32>
    tpu.vector_store %arg3[%c0_79, %c6_80, %c0_81], %211 {strides = array<i32>} : memref<1x12x128xf32, #tpu.memory_space<vmem>>, vector<1x1x128xf32>,
    %212 = arith.select %151, %177, %182 : vector<128xi1>, vector<128xf32>
    %c0_82 = arith.constant 0 : index
    %c7_83 = arith.constant 7 : index
    %c0_84 = arith.constant 0 : index
    %213 = vector.load %arg3[%c0_82, %c7_83, %c0_84] : memref<1x12x128xf32, #tpu.memory_space<vmem>>, vector<1x1x128xf32>
    %214 = vector.shape_cast %213 : vector<1x1x128xf32> to vector<128xf32>
    %215 = vector.shape_cast %212 : vector<128xf32> to vector<1x1x128xf32>
    tpu.vector_store %arg3[%c0_82, %c7_83, %c0_84], %215 {strides = array<i32>} : memref<1x12x128xf32, #tpu.memory_space<vmem>>, vector<1x1x128xf32>,
    %216 = arith.select %151, %181, %182 : vector<128xi1>, vector<128xf32>
    %c0_85 = arith.constant 0 : index
    %c8_86 = arith.constant 8 : index
    %c0_87 = arith.constant 0 : index
    %217 = vector.load %arg3[%c0_85, %c8_86, %c0_87] : memref<1x12x128xf32, #tpu.memory_space<vmem>>, vector<1x1x128xf32>
    %218 = vector.shape_cast %217 : vector<1x1x128xf32> to vector<128xf32>
    %219 = vector.shape_cast %216 : vector<128xf32> to vector<1x1x128xf32>
    tpu.vector_store %arg3[%c0_85, %c8_86, %c0_87], %219 {strides = array<i32>} : memref<1x12x128xf32, #tpu.memory_space<vmem>>, vector<1x1x128xf32>,
    %c0_88 = arith.constant 0 : index
    %c9 = arith.constant 9 : index
    %c0_89 = arith.constant 0 : index
    %220 = vector.load %arg3[%c0_88, %c9, %c0_89] : memref<1x12x128xf32, #tpu.memory_space<vmem>>, vector<1x1x128xf32>
    %221 = vector.shape_cast %220 : vector<1x1x128xf32> to vector<128xf32>
    %222 = vector.shape_cast %133 : vector<128xf32> to vector<1x1x128xf32>
    tpu.vector_store %arg3[%c0_88, %c9, %c0_89], %222 {strides = array<i32>} : memref<1x12x128xf32, #tpu.memory_space<vmem>>, vector<1x1x128xf32>,
    %c0_90 = arith.constant 0 : index
    %c10 = arith.constant 10 : index
    %c0_91 = arith.constant 0 : index
    %223 = vector.load %arg3[%c0_90, %c10, %c0_91] : memref<1x12x128xf32, #tpu.memory_space<vmem>>, vector<1x1x128xf32>
    %224 = vector.shape_cast %223 : vector<1x1x128xf32> to vector<128xf32>
    %225 = vector.shape_cast %136 : vector<128xf32> to vector<1x1x128xf32>
    tpu.vector_store %arg3[%c0_90, %c10, %c0_91], %225 {strides = array<i32>} : memref<1x12x128xf32, #tpu.memory_space<vmem>>, vector<1x1x128xf32>,
    %c0_92 = arith.constant 0 : index
    %c11 = arith.constant 11 : index
    %c0_93 = arith.constant 0 : index
    %226 = vector.load %arg3[%c0_92, %c11, %c0_93] : memref<1x12x128xf32, #tpu.memory_space<vmem>>, vector<1x1x128xf32>
    %227 = vector.shape_cast %226 : vector<1x1x128xf32> to vector<128xf32>
    %228 = vector.shape_cast %139 : vector<128xf32> to vector<1x1x128xf32>
    tpu.vector_store %arg3[%c0_92, %c11, %c0_93], %228 {strides = array<i32>} : memref<1x12x128xf32, #tpu.memory_space<vmem>>, vector<1x1x128xf32>,
    return
  }
  func.func @transform_0(%arg0: i32) -> i32 {
    %c0_i32 = arith.constant 0 : i32
    %c0_i32_0 = arith.constant 0 : i32
    return %c0_i32 : i32
  }
  func.func @transform_1(%arg0: i32) -> (i32, i32, i32) {
    %c0_i32 = arith.constant 0 : i32
    %c0_i32_0 = arith.constant 0 : i32
    %c0_i32_1 = arith.constant 0 : i32
    return %arg0, %c0_i32, %c0_i32_0 : i32, i32, i32
  }
  func.func @transform_2(%arg0: i32) -> (i32, i32, i32) {
    %c0_i32 = arith.constant 0 : i32
    %c0_i32_0 = arith.constant 0 : i32
    %c0_i32_1 = arith.constant 0 : i32
    return %arg0, %c0_i32, %c0_i32_0 : i32, i32, i32
  }
}

module attributes {stable_mosaic.version = 11 : i64} {
  func.func @_raster_kernel(%arg0: i32, %arg1: i32, %arg2: memref<4608xf32, #tpu.memory_space<smem>>, %arg3: memref<1x4x2x128xf32, #tpu.memory_space<vmem>>) attributes {dimension_semantics = [#tpu.dimension_semantics<parallel>, #tpu.dimension_semantics<parallel>], iteration_bounds = array<i64: 2, 1>, scalar_prefetch = 0 : i64, scratch_operands = 0 : i64, tpu.core_type = #tpu.core_type<tc>, window_params = [{transform_indices = @transform_0, window_bounds = array<i64: 4608>}, {transform_indices = @transform_1, window_bounds = array<i64: 1, 4, 2, 128>}]} {
    %0 = tpu.iota {dimensions = array<i32: 0>} : vector<2x128xi32>
    %1 = tpu.iota {dimensions = array<i32: 1>} : vector<2x128xi32>
    %c2_i32 = arith.constant 2 : i32
    %2 = arith.muli %arg1, %c2_i32 : i32
    %3 = vector.broadcast %2 : i32 to vector<2x128xi32>
    %4 = arith.addi %3, %0 : vector<2x128xi32>
    %c128_i32 = arith.constant 128 : i32
    %5 = vector.broadcast %c128_i32 : i32 to vector<2x128xi32>
    %6 = arith.muli %4, %5 : vector<2x128xi32>
    %7 = arith.addi %6, %1 : vector<2x128xi32>
    %c4_i32 = arith.constant 4 : i32
    %8 = vector.broadcast %c4_i32 : i32 to vector<2x128xi32>
    %9 = arith.shrsi %7, %8 : vector<2x128xi32>
    %10 = arith.sitofp %9 : vector<2x128xi32> to vector<2x128xf32>
    %cst = arith.constant 5.000000e-01 : f32
    %11 = vector.broadcast %cst : f32 to vector<2x128xf32>
    %12 = arith.addf %10, %11 : vector<2x128xf32>
    %c15_i32 = arith.constant 15 : i32
    %13 = vector.broadcast %c15_i32 : i32 to vector<2x128xi32>
    %14 = arith.andi %7, %13 : vector<2x128xi32>
    %15 = arith.sitofp %14 : vector<2x128xi32> to vector<2x128xf32>
    %cst_0 = arith.constant 5.000000e-01 : f32
    %16 = vector.broadcast %cst_0 : f32 to vector<2x128xf32>
    %17 = arith.addf %15, %16 : vector<2x128xf32>
    %cst_1 = arith.constant 0.000000e+00 : f32
    %18 = vector.broadcast %cst_1 : f32 to vector<2x128xf32>
    %cst_2 = arith.constant 1.000000e+10 : f32
    %19 = vector.broadcast %cst_2 : f32 to vector<2x128xf32>
    %c2304_i32 = arith.constant 2304 : i32
    %20 = arith.muli %arg0, %c2304_i32 : i32
    %c0_i32 = arith.constant 0 : i32
    %21 = arith.addi %20, %c0_i32 : i32
    %22 = arith.index_cast %21 : i32 to index
    %23 = memref.load %arg2[%22] : memref<4608xf32, #tpu.memory_space<smem>>
    %c128_i32_3 = arith.constant 128 : i32
    %24 = arith.addi %21, %c128_i32_3 : i32
    %25 = arith.index_cast %24 : i32 to index
    %26 = memref.load %arg2[%25] : memref<4608xf32, #tpu.memory_space<smem>>
    %c256_i32 = arith.constant 256 : i32
    %27 = arith.addi %21, %c256_i32 : i32
    %28 = arith.index_cast %27 : i32 to index
    %29 = memref.load %arg2[%28] : memref<4608xf32, #tpu.memory_space<smem>>
    %c384_i32 = arith.constant 384 : i32
    %30 = arith.addi %21, %c384_i32 : i32
    %31 = arith.index_cast %30 : i32 to index
    %32 = memref.load %arg2[%31] : memref<4608xf32, #tpu.memory_space<smem>>
    %c512_i32 = arith.constant 512 : i32
    %33 = arith.addi %21, %c512_i32 : i32
    %34 = arith.index_cast %33 : i32 to index
    %35 = memref.load %arg2[%34] : memref<4608xf32, #tpu.memory_space<smem>>
    %c640_i32 = arith.constant 640 : i32
    %36 = arith.addi %21, %c640_i32 : i32
    %37 = arith.index_cast %36 : i32 to index
    %38 = memref.load %arg2[%37] : memref<4608xf32, #tpu.memory_space<smem>>
    %c768_i32 = arith.constant 768 : i32
    %39 = arith.addi %21, %c768_i32 : i32
    %40 = arith.index_cast %39 : i32 to index
    %41 = memref.load %arg2[%40] : memref<4608xf32, #tpu.memory_space<smem>>
    %c896_i32 = arith.constant 896 : i32
    %42 = arith.addi %21, %c896_i32 : i32
    %43 = arith.index_cast %42 : i32 to index
    %44 = memref.load %arg2[%43] : memref<4608xf32, #tpu.memory_space<smem>>
    %c1024_i32 = arith.constant 1024 : i32
    %45 = arith.addi %21, %c1024_i32 : i32
    %46 = arith.index_cast %45 : i32 to index
    %47 = memref.load %arg2[%46] : memref<4608xf32, #tpu.memory_space<smem>>
    %c1152_i32 = arith.constant 1152 : i32
    %48 = arith.addi %21, %c1152_i32 : i32
    %49 = arith.index_cast %48 : i32 to index
    %50 = memref.load %arg2[%49] : memref<4608xf32, #tpu.memory_space<smem>>
    %c1280_i32 = arith.constant 1280 : i32
    %51 = arith.addi %21, %c1280_i32 : i32
    %52 = arith.index_cast %51 : i32 to index
    %53 = memref.load %arg2[%52] : memref<4608xf32, #tpu.memory_space<smem>>
    %c1408_i32 = arith.constant 1408 : i32
    %54 = arith.addi %21, %c1408_i32 : i32
    %55 = arith.index_cast %54 : i32 to index
    %56 = memref.load %arg2[%55] : memref<4608xf32, #tpu.memory_space<smem>>
    %c1536_i32 = arith.constant 1536 : i32
    %57 = arith.addi %21, %c1536_i32 : i32
    %58 = arith.index_cast %57 : i32 to index
    %59 = memref.load %arg2[%58] : memref<4608xf32, #tpu.memory_space<smem>>
    %c1664_i32 = arith.constant 1664 : i32
    %60 = arith.addi %21, %c1664_i32 : i32
    %61 = arith.index_cast %60 : i32 to index
    %62 = memref.load %arg2[%61] : memref<4608xf32, #tpu.memory_space<smem>>
    %c1792_i32 = arith.constant 1792 : i32
    %63 = arith.addi %21, %c1792_i32 : i32
    %64 = arith.index_cast %63 : i32 to index
    %65 = memref.load %arg2[%64] : memref<4608xf32, #tpu.memory_space<smem>>
    %c1920_i32 = arith.constant 1920 : i32
    %66 = arith.addi %21, %c1920_i32 : i32
    %67 = arith.index_cast %66 : i32 to index
    %68 = memref.load %arg2[%67] : memref<4608xf32, #tpu.memory_space<smem>>
    %c2048_i32 = arith.constant 2048 : i32
    %69 = arith.addi %21, %c2048_i32 : i32
    %70 = arith.index_cast %69 : i32 to index
    %71 = memref.load %arg2[%70] : memref<4608xf32, #tpu.memory_space<smem>>
    %c2176_i32 = arith.constant 2176 : i32
    %72 = arith.addi %21, %c2176_i32 : i32
    %73 = arith.index_cast %72 : i32 to index
    %74 = memref.load %arg2[%73] : memref<4608xf32, #tpu.memory_space<smem>>
    %75 = vector.broadcast %23 : f32 to vector<2x128xf32>
    %76 = arith.mulf %75, %17 : vector<2x128xf32>
    %77 = vector.broadcast %26 : f32 to vector<2x128xf32>
    %78 = arith.mulf %77, %12 : vector<2x128xf32>
    %79 = arith.addf %76, %78 : vector<2x128xf32>
    %80 = vector.broadcast %29 : f32 to vector<2x128xf32>
    %81 = arith.addf %79, %80 : vector<2x128xf32>
    %82 = vector.broadcast %32 : f32 to vector<2x128xf32>
    %83 = arith.mulf %82, %17 : vector<2x128xf32>
    %84 = vector.broadcast %35 : f32 to vector<2x128xf32>
    %85 = arith.mulf %84, %12 : vector<2x128xf32>
    %86 = arith.addf %83, %85 : vector<2x128xf32>
    %87 = vector.broadcast %38 : f32 to vector<2x128xf32>
    %88 = arith.addf %86, %87 : vector<2x128xf32>
    %cst_4 = arith.constant 1.000000e+00 : f32
    %89 = vector.broadcast %cst_4 : f32 to vector<2x128xf32>
    %90 = arith.subf %89, %81 : vector<2x128xf32>
    %91 = arith.subf %90, %88 : vector<2x128xf32>
    %92 = vector.broadcast %41 : f32 to vector<2x128xf32>
    %93 = arith.mulf %92, %17 : vector<2x128xf32>
    %94 = vector.broadcast %44 : f32 to vector<2x128xf32>
    %95 = arith.mulf %94, %12 : vector<2x128xf32>
    %96 = arith.addf %93, %95 : vector<2x128xf32>
    %97 = vector.broadcast %47 : f32 to vector<2x128xf32>
    %98 = arith.addf %96, %97 : vector<2x128xf32>
    %cst_5 = arith.constant 0.000000e+00 : f32
    %99 = vector.broadcast %cst_5 : f32 to vector<2x128xf32>
    %100 = arith.cmpf oge, %81, %99 : vector<2x128xf32>
    %cst_6 = arith.constant 0.000000e+00 : f32
    %101 = vector.broadcast %cst_6 : f32 to vector<2x128xf32>
    %102 = arith.cmpf oge, %88, %101 : vector<2x128xf32>
    %103 = arith.andi %100, %102 : vector<2x128xi1>
    %cst_7 = arith.constant 0.000000e+00 : f32
    %104 = vector.broadcast %cst_7 : f32 to vector<2x128xf32>
    %105 = arith.cmpf oge, %91, %104 : vector<2x128xf32>
    %106 = arith.andi %103, %105 : vector<2x128xi1>
    %cst_8 = arith.constant 9.99999997E-7 : f32
    %107 = vector.broadcast %cst_8 : f32 to vector<2x128xf32>
    %108 = arith.cmpf ogt, %98, %107 : vector<2x128xf32>
    %109 = arith.andi %106, %108 : vector<2x128xi1>
    %110 = arith.cmpf olt, %98, %19 : vector<2x128xf32>
    %111 = arith.andi %109, %110 : vector<2x128xi1>
    %112 = vector.broadcast %50 : f32 to vector<2x128xf32>
    %113 = arith.mulf %112, %17 : vector<2x128xf32>
    %114 = vector.broadcast %53 : f32 to vector<2x128xf32>
    %115 = arith.mulf %114, %12 : vector<2x128xf32>
    %116 = arith.addf %113, %115 : vector<2x128xf32>
    %117 = vector.broadcast %56 : f32 to vector<2x128xf32>
    %118 = arith.addf %116, %117 : vector<2x128xf32>
    %119 = vector.broadcast %59 : f32 to vector<2x128xf32>
    %120 = arith.mulf %119, %17 : vector<2x128xf32>
    %121 = vector.broadcast %62 : f32 to vector<2x128xf32>
    %122 = arith.mulf %121, %12 : vector<2x128xf32>
    %123 = arith.addf %120, %122 : vector<2x128xf32>
    %124 = vector.broadcast %65 : f32 to vector<2x128xf32>
    %125 = arith.addf %123, %124 : vector<2x128xf32>
    %126 = vector.broadcast %68 : f32 to vector<2x128xf32>
    %127 = arith.mulf %126, %17 : vector<2x128xf32>
    %128 = vector.broadcast %71 : f32 to vector<2x128xf32>
    %129 = arith.mulf %128, %12 : vector<2x128xf32>
    %130 = arith.addf %127, %129 : vector<2x128xf32>
    %131 = vector.broadcast %74 : f32 to vector<2x128xf32>
    %132 = arith.addf %130, %131 : vector<2x128xf32>
    %133 = arith.select %111, %98, %19 : vector<2x128xi1>, vector<2x128xf32>
    %134 = arith.select %111, %118, %18 : vector<2x128xi1>, vector<2x128xf32>
    %135 = arith.select %111, %125, %18 : vector<2x128xi1>, vector<2x128xf32>
    %136 = arith.select %111, %132, %18 : vector<2x128xi1>, vector<2x128xf32>
    %c1_i32 = arith.constant 1 : i32
    %137 = arith.addi %20, %c1_i32 : i32
    %138 = arith.index_cast %137 : i32 to index
    %139 = memref.load %arg2[%138] : memref<4608xf32, #tpu.memory_space<smem>>
    %c128_i32_9 = arith.constant 128 : i32
    %140 = arith.addi %137, %c128_i32_9 : i32
    %141 = arith.index_cast %140 : i32 to index
    %142 = memref.load %arg2[%141] : memref<4608xf32, #tpu.memory_space<smem>>
    %c256_i32_10 = arith.constant 256 : i32
    %143 = arith.addi %137, %c256_i32_10 : i32
    %144 = arith.index_cast %143 : i32 to index
    %145 = memref.load %arg2[%144] : memref<4608xf32, #tpu.memory_space<smem>>
    %c384_i32_11 = arith.constant 384 : i32
    %146 = arith.addi %137, %c384_i32_11 : i32
    %147 = arith.index_cast %146 : i32 to index
    %148 = memref.load %arg2[%147] : memref<4608xf32, #tpu.memory_space<smem>>
    %c512_i32_12 = arith.constant 512 : i32
    %149 = arith.addi %137, %c512_i32_12 : i32
    %150 = arith.index_cast %149 : i32 to index
    %151 = memref.load %arg2[%150] : memref<4608xf32, #tpu.memory_space<smem>>
    %c640_i32_13 = arith.constant 640 : i32
    %152 = arith.addi %137, %c640_i32_13 : i32
    %153 = arith.index_cast %152 : i32 to index
    %154 = memref.load %arg2[%153] : memref<4608xf32, #tpu.memory_space<smem>>
    %c768_i32_14 = arith.constant 768 : i32
    %155 = arith.addi %137, %c768_i32_14 : i32
    %156 = arith.index_cast %155 : i32 to index
    %157 = memref.load %arg2[%156] : memref<4608xf32, #tpu.memory_space<smem>>
    %c896_i32_15 = arith.constant 896 : i32
    %158 = arith.addi %137, %c896_i32_15 : i32
    %159 = arith.index_cast %158 : i32 to index
    %160 = memref.load %arg2[%159] : memref<4608xf32, #tpu.memory_space<smem>>
    %c1024_i32_16 = arith.constant 1024 : i32
    %161 = arith.addi %137, %c1024_i32_16 : i32
    %162 = arith.index_cast %161 : i32 to index
    %163 = memref.load %arg2[%162] : memref<4608xf32, #tpu.memory_space<smem>>
    %c1152_i32_17 = arith.constant 1152 : i32
    %164 = arith.addi %137, %c1152_i32_17 : i32
    %165 = arith.index_cast %164 : i32 to index
    %166 = memref.load %arg2[%165] : memref<4608xf32, #tpu.memory_space<smem>>
    %c1280_i32_18 = arith.constant 1280 : i32
    %167 = arith.addi %137, %c1280_i32_18 : i32
    %168 = arith.index_cast %167 : i32 to index
    %169 = memref.load %arg2[%168] : memref<4608xf32, #tpu.memory_space<smem>>
    %c1408_i32_19 = arith.constant 1408 : i32
    %170 = arith.addi %137, %c1408_i32_19 : i32
    %171 = arith.index_cast %170 : i32 to index
    %172 = memref.load %arg2[%171] : memref<4608xf32, #tpu.memory_space<smem>>
    %c1536_i32_20 = arith.constant 1536 : i32
    %173 = arith.addi %137, %c1536_i32_20 : i32
    %174 = arith.index_cast %173 : i32 to index
    %175 = memref.load %arg2[%174] : memref<4608xf32, #tpu.memory_space<smem>>
    %c1664_i32_21 = arith.constant 1664 : i32
    %176 = arith.addi %137, %c1664_i32_21 : i32
    %177 = arith.index_cast %176 : i32 to index
    %178 = memref.load %arg2[%177] : memref<4608xf32, #tpu.memory_space<smem>>
    %c1792_i32_22 = arith.constant 1792 : i32
    %179 = arith.addi %137, %c1792_i32_22 : i32
    %180 = arith.index_cast %179 : i32 to index
    %181 = memref.load %arg2[%180] : memref<4608xf32, #tpu.memory_space<smem>>
    %c1920_i32_23 = arith.constant 1920 : i32
    %182 = arith.addi %137, %c1920_i32_23 : i32
    %183 = arith.index_cast %182 : i32 to index
    %184 = memref.load %arg2[%183] : memref<4608xf32, #tpu.memory_space<smem>>
    %c2048_i32_24 = arith.constant 2048 : i32
    %185 = arith.addi %137, %c2048_i32_24 : i32
    %186 = arith.index_cast %185 : i32 to index
    %187 = memref.load %arg2[%186] : memref<4608xf32, #tpu.memory_space<smem>>
    %c2176_i32_25 = arith.constant 2176 : i32
    %188 = arith.addi %137, %c2176_i32_25 : i32
    %189 = arith.index_cast %188 : i32 to index
    %190 = memref.load %arg2[%189] : memref<4608xf32, #tpu.memory_space<smem>>
    %191 = vector.broadcast %139 : f32 to vector<2x128xf32>
    %192 = arith.mulf %191, %17 : vector<2x128xf32>
    %193 = vector.broadcast %142 : f32 to vector<2x128xf32>
    %194 = arith.mulf %193, %12 : vector<2x128xf32>
    %195 = arith.addf %192, %194 : vector<2x128xf32>
    %196 = vector.broadcast %145 : f32 to vector<2x128xf32>
    %197 = arith.addf %195, %196 : vector<2x128xf32>
    %198 = vector.broadcast %148 : f32 to vector<2x128xf32>
    %199 = arith.mulf %198, %17 : vector<2x128xf32>
    %200 = vector.broadcast %151 : f32 to vector<2x128xf32>
    %201 = arith.mulf %200, %12 : vector<2x128xf32>
    %202 = arith.addf %199, %201 : vector<2x128xf32>
    %203 = vector.broadcast %154 : f32 to vector<2x128xf32>
    %204 = arith.addf %202, %203 : vector<2x128xf32>
    %cst_26 = arith.constant 1.000000e+00 : f32
    %205 = vector.broadcast %cst_26 : f32 to vector<2x128xf32>
    %206 = arith.subf %205, %197 : vector<2x128xf32>
    %207 = arith.subf %206, %204 : vector<2x128xf32>
    %208 = vector.broadcast %157 : f32 to vector<2x128xf32>
    %209 = arith.mulf %208, %17 : vector<2x128xf32>
    %210 = vector.broadcast %160 : f32 to vector<2x128xf32>
    %211 = arith.mulf %210, %12 : vector<2x128xf32>
    %212 = arith.addf %209, %211 : vector<2x128xf32>
    %213 = vector.broadcast %163 : f32 to vector<2x128xf32>
    %214 = arith.addf %212, %213 : vector<2x128xf32>
    %cst_27 = arith.constant 0.000000e+00 : f32
    %215 = vector.broadcast %cst_27 : f32 to vector<2x128xf32>
    %216 = arith.cmpf oge, %197, %215 : vector<2x128xf32>
    %cst_28 = arith.constant 0.000000e+00 : f32
    %217 = vector.broadcast %cst_28 : f32 to vector<2x128xf32>
    %218 = arith.cmpf oge, %204, %217 : vector<2x128xf32>
    %219 = arith.andi %216, %218 : vector<2x128xi1>
    %cst_29 = arith.constant 0.000000e+00 : f32
    %220 = vector.broadcast %cst_29 : f32 to vector<2x128xf32>
    %221 = arith.cmpf oge, %207, %220 : vector<2x128xf32>
    %222 = arith.andi %219, %221 : vector<2x128xi1>
    %cst_30 = arith.constant 9.99999997E-7 : f32
    %223 = vector.broadcast %cst_30 : f32 to vector<2x128xf32>
    %224 = arith.cmpf ogt, %214, %223 : vector<2x128xf32>
    %225 = arith.andi %222, %224 : vector<2x128xi1>
    %226 = arith.cmpf olt, %214, %133 : vector<2x128xf32>
    %227 = arith.andi %225, %226 : vector<2x128xi1>
    %228 = vector.broadcast %166 : f32 to vector<2x128xf32>
    %229 = arith.mulf %228, %17 : vector<2x128xf32>
    %230 = vector.broadcast %169 : f32 to vector<2x128xf32>
    %231 = arith.mulf %230, %12 : vector<2x128xf32>
    %232 = arith.addf %229, %231 : vector<2x128xf32>
    %233 = vector.broadcast %172 : f32 to vector<2x128xf32>
    %234 = arith.addf %232, %233 : vector<2x128xf32>
    %235 = vector.broadcast %175 : f32 to vector<2x128xf32>
    %236 = arith.mulf %235, %17 : vector<2x128xf32>
    %237 = vector.broadcast %178 : f32 to vector<2x128xf32>
    %238 = arith.mulf %237, %12 : vector<2x128xf32>
    %239 = arith.addf %236, %238 : vector<2x128xf32>
    %240 = vector.broadcast %181 : f32 to vector<2x128xf32>
    %241 = arith.addf %239, %240 : vector<2x128xf32>
    %242 = vector.broadcast %184 : f32 to vector<2x128xf32>
    %243 = arith.mulf %242, %17 : vector<2x128xf32>
    %244 = vector.broadcast %187 : f32 to vector<2x128xf32>
    %245 = arith.mulf %244, %12 : vector<2x128xf32>
    %246 = arith.addf %243, %245 : vector<2x128xf32>
    %247 = vector.broadcast %190 : f32 to vector<2x128xf32>
    %248 = arith.addf %246, %247 : vector<2x128xf32>
    %249 = arith.select %227, %214, %133 : vector<2x128xi1>, vector<2x128xf32>
    %250 = arith.select %227, %234, %134 : vector<2x128xi1>, vector<2x128xf32>
    %251 = arith.select %227, %241, %135 : vector<2x128xi1>, vector<2x128xf32>
    %252 = arith.select %227, %248, %136 : vector<2x128xi1>, vector<2x128xf32>
    %c2_i32_31 = arith.constant 2 : i32
    %253 = arith.addi %20, %c2_i32_31 : i32
    %254 = arith.index_cast %253 : i32 to index
    %255 = memref.load %arg2[%254] : memref<4608xf32, #tpu.memory_space<smem>>
    %c128_i32_32 = arith.constant 128 : i32
    %256 = arith.addi %253, %c128_i32_32 : i32
    %257 = arith.index_cast %256 : i32 to index
    %258 = memref.load %arg2[%257] : memref<4608xf32, #tpu.memory_space<smem>>
    %c256_i32_33 = arith.constant 256 : i32
    %259 = arith.addi %253, %c256_i32_33 : i32
    %260 = arith.index_cast %259 : i32 to index
    %261 = memref.load %arg2[%260] : memref<4608xf32, #tpu.memory_space<smem>>
    %c384_i32_34 = arith.constant 384 : i32
    %262 = arith.addi %253, %c384_i32_34 : i32
    %263 = arith.index_cast %262 : i32 to index
    %264 = memref.load %arg2[%263] : memref<4608xf32, #tpu.memory_space<smem>>
    %c512_i32_35 = arith.constant 512 : i32
    %265 = arith.addi %253, %c512_i32_35 : i32
    %266 = arith.index_cast %265 : i32 to index
    %267 = memref.load %arg2[%266] : memref<4608xf32, #tpu.memory_space<smem>>
    %c640_i32_36 = arith.constant 640 : i32
    %268 = arith.addi %253, %c640_i32_36 : i32
    %269 = arith.index_cast %268 : i32 to index
    %270 = memref.load %arg2[%269] : memref<4608xf32, #tpu.memory_space<smem>>
    %c768_i32_37 = arith.constant 768 : i32
    %271 = arith.addi %253, %c768_i32_37 : i32
    %272 = arith.index_cast %271 : i32 to index
    %273 = memref.load %arg2[%272] : memref<4608xf32, #tpu.memory_space<smem>>
    %c896_i32_38 = arith.constant 896 : i32
    %274 = arith.addi %253, %c896_i32_38 : i32
    %275 = arith.index_cast %274 : i32 to index
    %276 = memref.load %arg2[%275] : memref<4608xf32, #tpu.memory_space<smem>>
    %c1024_i32_39 = arith.constant 1024 : i32
    %277 = arith.addi %253, %c1024_i32_39 : i32
    %278 = arith.index_cast %277 : i32 to index
    %279 = memref.load %arg2[%278] : memref<4608xf32, #tpu.memory_space<smem>>
    %c1152_i32_40 = arith.constant 1152 : i32
    %280 = arith.addi %253, %c1152_i32_40 : i32
    %281 = arith.index_cast %280 : i32 to index
    %282 = memref.load %arg2[%281] : memref<4608xf32, #tpu.memory_space<smem>>
    %c1280_i32_41 = arith.constant 1280 : i32
    %283 = arith.addi %253, %c1280_i32_41 : i32
    %284 = arith.index_cast %283 : i32 to index
    %285 = memref.load %arg2[%284] : memref<4608xf32, #tpu.memory_space<smem>>
    %c1408_i32_42 = arith.constant 1408 : i32
    %286 = arith.addi %253, %c1408_i32_42 : i32
    %287 = arith.index_cast %286 : i32 to index
    %288 = memref.load %arg2[%287] : memref<4608xf32, #tpu.memory_space<smem>>
    %c1536_i32_43 = arith.constant 1536 : i32
    %289 = arith.addi %253, %c1536_i32_43 : i32
    %290 = arith.index_cast %289 : i32 to index
    %291 = memref.load %arg2[%290] : memref<4608xf32, #tpu.memory_space<smem>>
    %c1664_i32_44 = arith.constant 1664 : i32
    %292 = arith.addi %253, %c1664_i32_44 : i32
    %293 = arith.index_cast %292 : i32 to index
    %294 = memref.load %arg2[%293] : memref<4608xf32, #tpu.memory_space<smem>>
    %c1792_i32_45 = arith.constant 1792 : i32
    %295 = arith.addi %253, %c1792_i32_45 : i32
    %296 = arith.index_cast %295 : i32 to index
    %297 = memref.load %arg2[%296] : memref<4608xf32, #tpu.memory_space<smem>>
    %c1920_i32_46 = arith.constant 1920 : i32
    %298 = arith.addi %253, %c1920_i32_46 : i32
    %299 = arith.index_cast %298 : i32 to index
    %300 = memref.load %arg2[%299] : memref<4608xf32, #tpu.memory_space<smem>>
    %c2048_i32_47 = arith.constant 2048 : i32
    %301 = arith.addi %253, %c2048_i32_47 : i32
    %302 = arith.index_cast %301 : i32 to index
    %303 = memref.load %arg2[%302] : memref<4608xf32, #tpu.memory_space<smem>>
    %c2176_i32_48 = arith.constant 2176 : i32
    %304 = arith.addi %253, %c2176_i32_48 : i32
    %305 = arith.index_cast %304 : i32 to index
    %306 = memref.load %arg2[%305] : memref<4608xf32, #tpu.memory_space<smem>>
    %307 = vector.broadcast %255 : f32 to vector<2x128xf32>
    %308 = arith.mulf %307, %17 : vector<2x128xf32>
    %309 = vector.broadcast %258 : f32 to vector<2x128xf32>
    %310 = arith.mulf %309, %12 : vector<2x128xf32>
    %311 = arith.addf %308, %310 : vector<2x128xf32>
    %312 = vector.broadcast %261 : f32 to vector<2x128xf32>
    %313 = arith.addf %311, %312 : vector<2x128xf32>
    %314 = vector.broadcast %264 : f32 to vector<2x128xf32>
    %315 = arith.mulf %314, %17 : vector<2x128xf32>
    %316 = vector.broadcast %267 : f32 to vector<2x128xf32>
    %317 = arith.mulf %316, %12 : vector<2x128xf32>
    %318 = arith.addf %315, %317 : vector<2x128xf32>
    %319 = vector.broadcast %270 : f32 to vector<2x128xf32>
    %320 = arith.addf %318, %319 : vector<2x128xf32>
    %cst_49 = arith.constant 1.000000e+00 : f32
    %321 = vector.broadcast %cst_49 : f32 to vector<2x128xf32>
    %322 = arith.subf %321, %313 : vector<2x128xf32>
    %323 = arith.subf %322, %320 : vector<2x128xf32>
    %324 = vector.broadcast %273 : f32 to vector<2x128xf32>
    %325 = arith.mulf %324, %17 : vector<2x128xf32>
    %326 = vector.broadcast %276 : f32 to vector<2x128xf32>
    %327 = arith.mulf %326, %12 : vector<2x128xf32>
    %328 = arith.addf %325, %327 : vector<2x128xf32>
    %329 = vector.broadcast %279 : f32 to vector<2x128xf32>
    %330 = arith.addf %328, %329 : vector<2x128xf32>
    %cst_50 = arith.constant 0.000000e+00 : f32
    %331 = vector.broadcast %cst_50 : f32 to vector<2x128xf32>
    %332 = arith.cmpf oge, %313, %331 : vector<2x128xf32>
    %cst_51 = arith.constant 0.000000e+00 : f32
    %333 = vector.broadcast %cst_51 : f32 to vector<2x128xf32>
    %334 = arith.cmpf oge, %320, %333 : vector<2x128xf32>
    %335 = arith.andi %332, %334 : vector<2x128xi1>
    %cst_52 = arith.constant 0.000000e+00 : f32
    %336 = vector.broadcast %cst_52 : f32 to vector<2x128xf32>
    %337 = arith.cmpf oge, %323, %336 : vector<2x128xf32>
    %338 = arith.andi %335, %337 : vector<2x128xi1>
    %cst_53 = arith.constant 9.99999997E-7 : f32
    %339 = vector.broadcast %cst_53 : f32 to vector<2x128xf32>
    %340 = arith.cmpf ogt, %330, %339 : vector<2x128xf32>
    %341 = arith.andi %338, %340 : vector<2x128xi1>
    %342 = arith.cmpf olt, %330, %249 : vector<2x128xf32>
    %343 = arith.andi %341, %342 : vector<2x128xi1>
    %344 = vector.broadcast %282 : f32 to vector<2x128xf32>
    %345 = arith.mulf %344, %17 : vector<2x128xf32>
    %346 = vector.broadcast %285 : f32 to vector<2x128xf32>
    %347 = arith.mulf %346, %12 : vector<2x128xf32>
    %348 = arith.addf %345, %347 : vector<2x128xf32>
    %349 = vector.broadcast %288 : f32 to vector<2x128xf32>
    %350 = arith.addf %348, %349 : vector<2x128xf32>
    %351 = vector.broadcast %291 : f32 to vector<2x128xf32>
    %352 = arith.mulf %351, %17 : vector<2x128xf32>
    %353 = vector.broadcast %294 : f32 to vector<2x128xf32>
    %354 = arith.mulf %353, %12 : vector<2x128xf32>
    %355 = arith.addf %352, %354 : vector<2x128xf32>
    %356 = vector.broadcast %297 : f32 to vector<2x128xf32>
    %357 = arith.addf %355, %356 : vector<2x128xf32>
    %358 = vector.broadcast %300 : f32 to vector<2x128xf32>
    %359 = arith.mulf %358, %17 : vector<2x128xf32>
    %360 = vector.broadcast %303 : f32 to vector<2x128xf32>
    %361 = arith.mulf %360, %12 : vector<2x128xf32>
    %362 = arith.addf %359, %361 : vector<2x128xf32>
    %363 = vector.broadcast %306 : f32 to vector<2x128xf32>
    %364 = arith.addf %362, %363 : vector<2x128xf32>
    %365 = arith.select %343, %330, %249 : vector<2x128xi1>, vector<2x128xf32>
    %366 = arith.select %343, %350, %250 : vector<2x128xi1>, vector<2x128xf32>
    %367 = arith.select %343, %357, %251 : vector<2x128xi1>, vector<2x128xf32>
    %368 = arith.select %343, %364, %252 : vector<2x128xi1>, vector<2x128xf32>
    %c3_i32 = arith.constant 3 : i32
    %369 = arith.addi %20, %c3_i32 : i32
    %370 = arith.index_cast %369 : i32 to index
    %371 = memref.load %arg2[%370] : memref<4608xf32, #tpu.memory_space<smem>>
    %c128_i32_54 = arith.constant 128 : i32
    %372 = arith.addi %369, %c128_i32_54 : i32
    %373 = arith.index_cast %372 : i32 to index
    %374 = memref.load %arg2[%373] : memref<4608xf32, #tpu.memory_space<smem>>
    %c256_i32_55 = arith.constant 256 : i32
    %375 = arith.addi %369, %c256_i32_55 : i32
    %376 = arith.index_cast %375 : i32 to index
    %377 = memref.load %arg2[%376] : memref<4608xf32, #tpu.memory_space<smem>>
    %c384_i32_56 = arith.constant 384 : i32
    %378 = arith.addi %369, %c384_i32_56 : i32
    %379 = arith.index_cast %378 : i32 to index
    %380 = memref.load %arg2[%379] : memref<4608xf32, #tpu.memory_space<smem>>
    %c512_i32_57 = arith.constant 512 : i32
    %381 = arith.addi %369, %c512_i32_57 : i32
    %382 = arith.index_cast %381 : i32 to index
    %383 = memref.load %arg2[%382] : memref<4608xf32, #tpu.memory_space<smem>>
    %c640_i32_58 = arith.constant 640 : i32
    %384 = arith.addi %369, %c640_i32_58 : i32
    %385 = arith.index_cast %384 : i32 to index
    %386 = memref.load %arg2[%385] : memref<4608xf32, #tpu.memory_space<smem>>
    %c768_i32_59 = arith.constant 768 : i32
    %387 = arith.addi %369, %c768_i32_59 : i32
    %388 = arith.index_cast %387 : i32 to index
    %389 = memref.load %arg2[%388] : memref<4608xf32, #tpu.memory_space<smem>>
    %c896_i32_60 = arith.constant 896 : i32
    %390 = arith.addi %369, %c896_i32_60 : i32
    %391 = arith.index_cast %390 : i32 to index
    %392 = memref.load %arg2[%391] : memref<4608xf32, #tpu.memory_space<smem>>
    %c1024_i32_61 = arith.constant 1024 : i32
    %393 = arith.addi %369, %c1024_i32_61 : i32
    %394 = arith.index_cast %393 : i32 to index
    %395 = memref.load %arg2[%394] : memref<4608xf32, #tpu.memory_space<smem>>
    %c1152_i32_62 = arith.constant 1152 : i32
    %396 = arith.addi %369, %c1152_i32_62 : i32
    %397 = arith.index_cast %396 : i32 to index
    %398 = memref.load %arg2[%397] : memref<4608xf32, #tpu.memory_space<smem>>
    %c1280_i32_63 = arith.constant 1280 : i32
    %399 = arith.addi %369, %c1280_i32_63 : i32
    %400 = arith.index_cast %399 : i32 to index
    %401 = memref.load %arg2[%400] : memref<4608xf32, #tpu.memory_space<smem>>
    %c1408_i32_64 = arith.constant 1408 : i32
    %402 = arith.addi %369, %c1408_i32_64 : i32
    %403 = arith.index_cast %402 : i32 to index
    %404 = memref.load %arg2[%403] : memref<4608xf32, #tpu.memory_space<smem>>
    %c1536_i32_65 = arith.constant 1536 : i32
    %405 = arith.addi %369, %c1536_i32_65 : i32
    %406 = arith.index_cast %405 : i32 to index
    %407 = memref.load %arg2[%406] : memref<4608xf32, #tpu.memory_space<smem>>
    %c1664_i32_66 = arith.constant 1664 : i32
    %408 = arith.addi %369, %c1664_i32_66 : i32
    %409 = arith.index_cast %408 : i32 to index
    %410 = memref.load %arg2[%409] : memref<4608xf32, #tpu.memory_space<smem>>
    %c1792_i32_67 = arith.constant 1792 : i32
    %411 = arith.addi %369, %c1792_i32_67 : i32
    %412 = arith.index_cast %411 : i32 to index
    %413 = memref.load %arg2[%412] : memref<4608xf32, #tpu.memory_space<smem>>
    %c1920_i32_68 = arith.constant 1920 : i32
    %414 = arith.addi %369, %c1920_i32_68 : i32
    %415 = arith.index_cast %414 : i32 to index
    %416 = memref.load %arg2[%415] : memref<4608xf32, #tpu.memory_space<smem>>
    %c2048_i32_69 = arith.constant 2048 : i32
    %417 = arith.addi %369, %c2048_i32_69 : i32
    %418 = arith.index_cast %417 : i32 to index
    %419 = memref.load %arg2[%418] : memref<4608xf32, #tpu.memory_space<smem>>
    %c2176_i32_70 = arith.constant 2176 : i32
    %420 = arith.addi %369, %c2176_i32_70 : i32
    %421 = arith.index_cast %420 : i32 to index
    %422 = memref.load %arg2[%421] : memref<4608xf32, #tpu.memory_space<smem>>
    %423 = vector.broadcast %371 : f32 to vector<2x128xf32>
    %424 = arith.mulf %423, %17 : vector<2x128xf32>
    %425 = vector.broadcast %374 : f32 to vector<2x128xf32>
    %426 = arith.mulf %425, %12 : vector<2x128xf32>
    %427 = arith.addf %424, %426 : vector<2x128xf32>
    %428 = vector.broadcast %377 : f32 to vector<2x128xf32>
    %429 = arith.addf %427, %428 : vector<2x128xf32>
    %430 = vector.broadcast %380 : f32 to vector<2x128xf32>
    %431 = arith.mulf %430, %17 : vector<2x128xf32>
    %432 = vector.broadcast %383 : f32 to vector<2x128xf32>
    %433 = arith.mulf %432, %12 : vector<2x128xf32>
    %434 = arith.addf %431, %433 : vector<2x128xf32>
    %435 = vector.broadcast %386 : f32 to vector<2x128xf32>
    %436 = arith.addf %434, %435 : vector<2x128xf32>
    %cst_71 = arith.constant 1.000000e+00 : f32
    %437 = vector.broadcast %cst_71 : f32 to vector<2x128xf32>
    %438 = arith.subf %437, %429 : vector<2x128xf32>
    %439 = arith.subf %438, %436 : vector<2x128xf32>
    %440 = vector.broadcast %389 : f32 to vector<2x128xf32>
    %441 = arith.mulf %440, %17 : vector<2x128xf32>
    %442 = vector.broadcast %392 : f32 to vector<2x128xf32>
    %443 = arith.mulf %442, %12 : vector<2x128xf32>
    %444 = arith.addf %441, %443 : vector<2x128xf32>
    %445 = vector.broadcast %395 : f32 to vector<2x128xf32>
    %446 = arith.addf %444, %445 : vector<2x128xf32>
    %cst_72 = arith.constant 0.000000e+00 : f32
    %447 = vector.broadcast %cst_72 : f32 to vector<2x128xf32>
    %448 = arith.cmpf oge, %429, %447 : vector<2x128xf32>
    %cst_73 = arith.constant 0.000000e+00 : f32
    %449 = vector.broadcast %cst_73 : f32 to vector<2x128xf32>
    %450 = arith.cmpf oge, %436, %449 : vector<2x128xf32>
    %451 = arith.andi %448, %450 : vector<2x128xi1>
    %cst_74 = arith.constant 0.000000e+00 : f32
    %452 = vector.broadcast %cst_74 : f32 to vector<2x128xf32>
    %453 = arith.cmpf oge, %439, %452 : vector<2x128xf32>
    %454 = arith.andi %451, %453 : vector<2x128xi1>
    %cst_75 = arith.constant 9.99999997E-7 : f32
    %455 = vector.broadcast %cst_75 : f32 to vector<2x128xf32>
    %456 = arith.cmpf ogt, %446, %455 : vector<2x128xf32>
    %457 = arith.andi %454, %456 : vector<2x128xi1>
    %458 = arith.cmpf olt, %446, %365 : vector<2x128xf32>
    %459 = arith.andi %457, %458 : vector<2x128xi1>
    %460 = vector.broadcast %398 : f32 to vector<2x128xf32>
    %461 = arith.mulf %460, %17 : vector<2x128xf32>
    %462 = vector.broadcast %401 : f32 to vector<2x128xf32>
    %463 = arith.mulf %462, %12 : vector<2x128xf32>
    %464 = arith.addf %461, %463 : vector<2x128xf32>
    %465 = vector.broadcast %404 : f32 to vector<2x128xf32>
    %466 = arith.addf %464, %465 : vector<2x128xf32>
    %467 = vector.broadcast %407 : f32 to vector<2x128xf32>
    %468 = arith.mulf %467, %17 : vector<2x128xf32>
    %469 = vector.broadcast %410 : f32 to vector<2x128xf32>
    %470 = arith.mulf %469, %12 : vector<2x128xf32>
    %471 = arith.addf %468, %470 : vector<2x128xf32>
    %472 = vector.broadcast %413 : f32 to vector<2x128xf32>
    %473 = arith.addf %471, %472 : vector<2x128xf32>
    %474 = vector.broadcast %416 : f32 to vector<2x128xf32>
    %475 = arith.mulf %474, %17 : vector<2x128xf32>
    %476 = vector.broadcast %419 : f32 to vector<2x128xf32>
    %477 = arith.mulf %476, %12 : vector<2x128xf32>
    %478 = arith.addf %475, %477 : vector<2x128xf32>
    %479 = vector.broadcast %422 : f32 to vector<2x128xf32>
    %480 = arith.addf %478, %479 : vector<2x128xf32>
    %481 = arith.select %459, %446, %365 : vector<2x128xi1>, vector<2x128xf32>
    %482 = arith.select %459, %466, %366 : vector<2x128xi1>, vector<2x128xf32>
    %483 = arith.select %459, %473, %367 : vector<2x128xi1>, vector<2x128xf32>
    %484 = arith.select %459, %480, %368 : vector<2x128xi1>, vector<2x128xf32>
    %c4_i32_76 = arith.constant 4 : i32
    %485 = arith.addi %20, %c4_i32_76 : i32
    %486 = arith.index_cast %485 : i32 to index
    %487 = memref.load %arg2[%486] : memref<4608xf32, #tpu.memory_space<smem>>
    %c128_i32_77 = arith.constant 128 : i32
    %488 = arith.addi %485, %c128_i32_77 : i32
    %489 = arith.index_cast %488 : i32 to index
    %490 = memref.load %arg2[%489] : memref<4608xf32, #tpu.memory_space<smem>>
    %c256_i32_78 = arith.constant 256 : i32
    %491 = arith.addi %485, %c256_i32_78 : i32
    %492 = arith.index_cast %491 : i32 to index
    %493 = memref.load %arg2[%492] : memref<4608xf32, #tpu.memory_space<smem>>
    %c384_i32_79 = arith.constant 384 : i32
    %494 = arith.addi %485, %c384_i32_79 : i32
    %495 = arith.index_cast %494 : i32 to index
    %496 = memref.load %arg2[%495] : memref<4608xf32, #tpu.memory_space<smem>>
    %c512_i32_80 = arith.constant 512 : i32
    %497 = arith.addi %485, %c512_i32_80 : i32
    %498 = arith.index_cast %497 : i32 to index
    %499 = memref.load %arg2[%498] : memref<4608xf32, #tpu.memory_space<smem>>
    %c640_i32_81 = arith.constant 640 : i32
    %500 = arith.addi %485, %c640_i32_81 : i32
    %501 = arith.index_cast %500 : i32 to index
    %502 = memref.load %arg2[%501] : memref<4608xf32, #tpu.memory_space<smem>>
    %c768_i32_82 = arith.constant 768 : i32
    %503 = arith.addi %485, %c768_i32_82 : i32
    %504 = arith.index_cast %503 : i32 to index
    %505 = memref.load %arg2[%504] : memref<4608xf32, #tpu.memory_space<smem>>
    %c896_i32_83 = arith.constant 896 : i32
    %506 = arith.addi %485, %c896_i32_83 : i32
    %507 = arith.index_cast %506 : i32 to index
    %508 = memref.load %arg2[%507] : memref<4608xf32, #tpu.memory_space<smem>>
    %c1024_i32_84 = arith.constant 1024 : i32
    %509 = arith.addi %485, %c1024_i32_84 : i32
    %510 = arith.index_cast %509 : i32 to index
    %511 = memref.load %arg2[%510] : memref<4608xf32, #tpu.memory_space<smem>>
    %c1152_i32_85 = arith.constant 1152 : i32
    %512 = arith.addi %485, %c1152_i32_85 : i32
    %513 = arith.index_cast %512 : i32 to index
    %514 = memref.load %arg2[%513] : memref<4608xf32, #tpu.memory_space<smem>>
    %c1280_i32_86 = arith.constant 1280 : i32
    %515 = arith.addi %485, %c1280_i32_86 : i32
    %516 = arith.index_cast %515 : i32 to index
    %517 = memref.load %arg2[%516] : memref<4608xf32, #tpu.memory_space<smem>>
    %c1408_i32_87 = arith.constant 1408 : i32
    %518 = arith.addi %485, %c1408_i32_87 : i32
    %519 = arith.index_cast %518 : i32 to index
    %520 = memref.load %arg2[%519] : memref<4608xf32, #tpu.memory_space<smem>>
    %c1536_i32_88 = arith.constant 1536 : i32
    %521 = arith.addi %485, %c1536_i32_88 : i32
    %522 = arith.index_cast %521 : i32 to index
    %523 = memref.load %arg2[%522] : memref<4608xf32, #tpu.memory_space<smem>>
    %c1664_i32_89 = arith.constant 1664 : i32
    %524 = arith.addi %485, %c1664_i32_89 : i32
    %525 = arith.index_cast %524 : i32 to index
    %526 = memref.load %arg2[%525] : memref<4608xf32, #tpu.memory_space<smem>>
    %c1792_i32_90 = arith.constant 1792 : i32
    %527 = arith.addi %485, %c1792_i32_90 : i32
    %528 = arith.index_cast %527 : i32 to index
    %529 = memref.load %arg2[%528] : memref<4608xf32, #tpu.memory_space<smem>>
    %c1920_i32_91 = arith.constant 1920 : i32
    %530 = arith.addi %485, %c1920_i32_91 : i32
    %531 = arith.index_cast %530 : i32 to index
    %532 = memref.load %arg2[%531] : memref<4608xf32, #tpu.memory_space<smem>>
    %c2048_i32_92 = arith.constant 2048 : i32
    %533 = arith.addi %485, %c2048_i32_92 : i32
    %534 = arith.index_cast %533 : i32 to index
    %535 = memref.load %arg2[%534] : memref<4608xf32, #tpu.memory_space<smem>>
    %c2176_i32_93 = arith.constant 2176 : i32
    %536 = arith.addi %485, %c2176_i32_93 : i32
    %537 = arith.index_cast %536 : i32 to index
    %538 = memref.load %arg2[%537] : memref<4608xf32, #tpu.memory_space<smem>>
    %539 = vector.broadcast %487 : f32 to vector<2x128xf32>
    %540 = arith.mulf %539, %17 : vector<2x128xf32>
    %541 = vector.broadcast %490 : f32 to vector<2x128xf32>
    %542 = arith.mulf %541, %12 : vector<2x128xf32>
    %543 = arith.addf %540, %542 : vector<2x128xf32>
    %544 = vector.broadcast %493 : f32 to vector<2x128xf32>
    %545 = arith.addf %543, %544 : vector<2x128xf32>
    %546 = vector.broadcast %496 : f32 to vector<2x128xf32>
    %547 = arith.mulf %546, %17 : vector<2x128xf32>
    %548 = vector.broadcast %499 : f32 to vector<2x128xf32>
    %549 = arith.mulf %548, %12 : vector<2x128xf32>
    %550 = arith.addf %547, %549 : vector<2x128xf32>
    %551 = vector.broadcast %502 : f32 to vector<2x128xf32>
    %552 = arith.addf %550, %551 : vector<2x128xf32>
    %cst_94 = arith.constant 1.000000e+00 : f32
    %553 = vector.broadcast %cst_94 : f32 to vector<2x128xf32>
    %554 = arith.subf %553, %545 : vector<2x128xf32>
    %555 = arith.subf %554, %552 : vector<2x128xf32>
    %556 = vector.broadcast %505 : f32 to vector<2x128xf32>
    %557 = arith.mulf %556, %17 : vector<2x128xf32>
    %558 = vector.broadcast %508 : f32 to vector<2x128xf32>
    %559 = arith.mulf %558, %12 : vector<2x128xf32>
    %560 = arith.addf %557, %559 : vector<2x128xf32>
    %561 = vector.broadcast %511 : f32 to vector<2x128xf32>
    %562 = arith.addf %560, %561 : vector<2x128xf32>
    %cst_95 = arith.constant 0.000000e+00 : f32
    %563 = vector.broadcast %cst_95 : f32 to vector<2x128xf32>
    %564 = arith.cmpf oge, %545, %563 : vector<2x128xf32>
    %cst_96 = arith.constant 0.000000e+00 : f32
    %565 = vector.broadcast %cst_96 : f32 to vector<2x128xf32>
    %566 = arith.cmpf oge, %552, %565 : vector<2x128xf32>
    %567 = arith.andi %564, %566 : vector<2x128xi1>
    %cst_97 = arith.constant 0.000000e+00 : f32
    %568 = vector.broadcast %cst_97 : f32 to vector<2x128xf32>
    %569 = arith.cmpf oge, %555, %568 : vector<2x128xf32>
    %570 = arith.andi %567, %569 : vector<2x128xi1>
    %cst_98 = arith.constant 9.99999997E-7 : f32
    %571 = vector.broadcast %cst_98 : f32 to vector<2x128xf32>
    %572 = arith.cmpf ogt, %562, %571 : vector<2x128xf32>
    %573 = arith.andi %570, %572 : vector<2x128xi1>
    %574 = arith.cmpf olt, %562, %481 : vector<2x128xf32>
    %575 = arith.andi %573, %574 : vector<2x128xi1>
    %576 = vector.broadcast %514 : f32 to vector<2x128xf32>
    %577 = arith.mulf %576, %17 : vector<2x128xf32>
    %578 = vector.broadcast %517 : f32 to vector<2x128xf32>
    %579 = arith.mulf %578, %12 : vector<2x128xf32>
    %580 = arith.addf %577, %579 : vector<2x128xf32>
    %581 = vector.broadcast %520 : f32 to vector<2x128xf32>
    %582 = arith.addf %580, %581 : vector<2x128xf32>
    %583 = vector.broadcast %523 : f32 to vector<2x128xf32>
    %584 = arith.mulf %583, %17 : vector<2x128xf32>
    %585 = vector.broadcast %526 : f32 to vector<2x128xf32>
    %586 = arith.mulf %585, %12 : vector<2x128xf32>
    %587 = arith.addf %584, %586 : vector<2x128xf32>
    %588 = vector.broadcast %529 : f32 to vector<2x128xf32>
    %589 = arith.addf %587, %588 : vector<2x128xf32>
    %590 = vector.broadcast %532 : f32 to vector<2x128xf32>
    %591 = arith.mulf %590, %17 : vector<2x128xf32>
    %592 = vector.broadcast %535 : f32 to vector<2x128xf32>
    %593 = arith.mulf %592, %12 : vector<2x128xf32>
    %594 = arith.addf %591, %593 : vector<2x128xf32>
    %595 = vector.broadcast %538 : f32 to vector<2x128xf32>
    %596 = arith.addf %594, %595 : vector<2x128xf32>
    %597 = arith.select %575, %562, %481 : vector<2x128xi1>, vector<2x128xf32>
    %598 = arith.select %575, %582, %482 : vector<2x128xi1>, vector<2x128xf32>
    %599 = arith.select %575, %589, %483 : vector<2x128xi1>, vector<2x128xf32>
    %600 = arith.select %575, %596, %484 : vector<2x128xi1>, vector<2x128xf32>
    %c5_i32 = arith.constant 5 : i32
    %601 = arith.addi %20, %c5_i32 : i32
    %602 = arith.index_cast %601 : i32 to index
    %603 = memref.load %arg2[%602] : memref<4608xf32, #tpu.memory_space<smem>>
    %c128_i32_99 = arith.constant 128 : i32
    %604 = arith.addi %601, %c128_i32_99 : i32
    %605 = arith.index_cast %604 : i32 to index
    %606 = memref.load %arg2[%605] : memref<4608xf32, #tpu.memory_space<smem>>
    %c256_i32_100 = arith.constant 256 : i32
    %607 = arith.addi %601, %c256_i32_100 : i32
    %608 = arith.index_cast %607 : i32 to index
    %609 = memref.load %arg2[%608] : memref<4608xf32, #tpu.memory_space<smem>>
    %c384_i32_101 = arith.constant 384 : i32
    %610 = arith.addi %601, %c384_i32_101 : i32
    %611 = arith.index_cast %610 : i32 to index
    %612 = memref.load %arg2[%611] : memref<4608xf32, #tpu.memory_space<smem>>
    %c512_i32_102 = arith.constant 512 : i32
    %613 = arith.addi %601, %c512_i32_102 : i32
    %614 = arith.index_cast %613 : i32 to index
    %615 = memref.load %arg2[%614] : memref<4608xf32, #tpu.memory_space<smem>>
    %c640_i32_103 = arith.constant 640 : i32
    %616 = arith.addi %601, %c640_i32_103 : i32
    %617 = arith.index_cast %616 : i32 to index
    %618 = memref.load %arg2[%617] : memref<4608xf32, #tpu.memory_space<smem>>
    %c768_i32_104 = arith.constant 768 : i32
    %619 = arith.addi %601, %c768_i32_104 : i32
    %620 = arith.index_cast %619 : i32 to index
    %621 = memref.load %arg2[%620] : memref<4608xf32, #tpu.memory_space<smem>>
    %c896_i32_105 = arith.constant 896 : i32
    %622 = arith.addi %601, %c896_i32_105 : i32
    %623 = arith.index_cast %622 : i32 to index
    %624 = memref.load %arg2[%623] : memref<4608xf32, #tpu.memory_space<smem>>
    %c1024_i32_106 = arith.constant 1024 : i32
    %625 = arith.addi %601, %c1024_i32_106 : i32
    %626 = arith.index_cast %625 : i32 to index
    %627 = memref.load %arg2[%626] : memref<4608xf32, #tpu.memory_space<smem>>
    %c1152_i32_107 = arith.constant 1152 : i32
    %628 = arith.addi %601, %c1152_i32_107 : i32
    %629 = arith.index_cast %628 : i32 to index
    %630 = memref.load %arg2[%629] : memref<4608xf32, #tpu.memory_space<smem>>
    %c1280_i32_108 = arith.constant 1280 : i32
    %631 = arith.addi %601, %c1280_i32_108 : i32
    %632 = arith.index_cast %631 : i32 to index
    %633 = memref.load %arg2[%632] : memref<4608xf32, #tpu.memory_space<smem>>
    %c1408_i32_109 = arith.constant 1408 : i32
    %634 = arith.addi %601, %c1408_i32_109 : i32
    %635 = arith.index_cast %634 : i32 to index
    %636 = memref.load %arg2[%635] : memref<4608xf32, #tpu.memory_space<smem>>
    %c1536_i32_110 = arith.constant 1536 : i32
    %637 = arith.addi %601, %c1536_i32_110 : i32
    %638 = arith.index_cast %637 : i32 to index
    %639 = memref.load %arg2[%638] : memref<4608xf32, #tpu.memory_space<smem>>
    %c1664_i32_111 = arith.constant 1664 : i32
    %640 = arith.addi %601, %c1664_i32_111 : i32
    %641 = arith.index_cast %640 : i32 to index
    %642 = memref.load %arg2[%641] : memref<4608xf32, #tpu.memory_space<smem>>
    %c1792_i32_112 = arith.constant 1792 : i32
    %643 = arith.addi %601, %c1792_i32_112 : i32
    %644 = arith.index_cast %643 : i32 to index
    %645 = memref.load %arg2[%644] : memref<4608xf32, #tpu.memory_space<smem>>
    %c1920_i32_113 = arith.constant 1920 : i32
    %646 = arith.addi %601, %c1920_i32_113 : i32
    %647 = arith.index_cast %646 : i32 to index
    %648 = memref.load %arg2[%647] : memref<4608xf32, #tpu.memory_space<smem>>
    %c2048_i32_114 = arith.constant 2048 : i32
    %649 = arith.addi %601, %c2048_i32_114 : i32
    %650 = arith.index_cast %649 : i32 to index
    %651 = memref.load %arg2[%650] : memref<4608xf32, #tpu.memory_space<smem>>
    %c2176_i32_115 = arith.constant 2176 : i32
    %652 = arith.addi %601, %c2176_i32_115 : i32
    %653 = arith.index_cast %652 : i32 to index
    %654 = memref.load %arg2[%653] : memref<4608xf32, #tpu.memory_space<smem>>
    %655 = vector.broadcast %603 : f32 to vector<2x128xf32>
    %656 = arith.mulf %655, %17 : vector<2x128xf32>
    %657 = vector.broadcast %606 : f32 to vector<2x128xf32>
    %658 = arith.mulf %657, %12 : vector<2x128xf32>
    %659 = arith.addf %656, %658 : vector<2x128xf32>
    %660 = vector.broadcast %609 : f32 to vector<2x128xf32>
    %661 = arith.addf %659, %660 : vector<2x128xf32>
    %662 = vector.broadcast %612 : f32 to vector<2x128xf32>
    %663 = arith.mulf %662, %17 : vector<2x128xf32>
    %664 = vector.broadcast %615 : f32 to vector<2x128xf32>
    %665 = arith.mulf %664, %12 : vector<2x128xf32>
    %666 = arith.addf %663, %665 : vector<2x128xf32>
    %667 = vector.broadcast %618 : f32 to vector<2x128xf32>
    %668 = arith.addf %666, %667 : vector<2x128xf32>
    %cst_116 = arith.constant 1.000000e+00 : f32
    %669 = vector.broadcast %cst_116 : f32 to vector<2x128xf32>
    %670 = arith.subf %669, %661 : vector<2x128xf32>
    %671 = arith.subf %670, %668 : vector<2x128xf32>
    %672 = vector.broadcast %621 : f32 to vector<2x128xf32>
    %673 = arith.mulf %672, %17 : vector<2x128xf32>
    %674 = vector.broadcast %624 : f32 to vector<2x128xf32>
    %675 = arith.mulf %674, %12 : vector<2x128xf32>
    %676 = arith.addf %673, %675 : vector<2x128xf32>
    %677 = vector.broadcast %627 : f32 to vector<2x128xf32>
    %678 = arith.addf %676, %677 : vector<2x128xf32>
    %cst_117 = arith.constant 0.000000e+00 : f32
    %679 = vector.broadcast %cst_117 : f32 to vector<2x128xf32>
    %680 = arith.cmpf oge, %661, %679 : vector<2x128xf32>
    %cst_118 = arith.constant 0.000000e+00 : f32
    %681 = vector.broadcast %cst_118 : f32 to vector<2x128xf32>
    %682 = arith.cmpf oge, %668, %681 : vector<2x128xf32>
    %683 = arith.andi %680, %682 : vector<2x128xi1>
    %cst_119 = arith.constant 0.000000e+00 : f32
    %684 = vector.broadcast %cst_119 : f32 to vector<2x128xf32>
    %685 = arith.cmpf oge, %671, %684 : vector<2x128xf32>
    %686 = arith.andi %683, %685 : vector<2x128xi1>
    %cst_120 = arith.constant 9.99999997E-7 : f32
    %687 = vector.broadcast %cst_120 : f32 to vector<2x128xf32>
    %688 = arith.cmpf ogt, %678, %687 : vector<2x128xf32>
    %689 = arith.andi %686, %688 : vector<2x128xi1>
    %690 = arith.cmpf olt, %678, %597 : vector<2x128xf32>
    %691 = arith.andi %689, %690 : vector<2x128xi1>
    %692 = vector.broadcast %630 : f32 to vector<2x128xf32>
    %693 = arith.mulf %692, %17 : vector<2x128xf32>
    %694 = vector.broadcast %633 : f32 to vector<2x128xf32>
    %695 = arith.mulf %694, %12 : vector<2x128xf32>
    %696 = arith.addf %693, %695 : vector<2x128xf32>
    %697 = vector.broadcast %636 : f32 to vector<2x128xf32>
    %698 = arith.addf %696, %697 : vector<2x128xf32>
    %699 = vector.broadcast %639 : f32 to vector<2x128xf32>
    %700 = arith.mulf %699, %17 : vector<2x128xf32>
    %701 = vector.broadcast %642 : f32 to vector<2x128xf32>
    %702 = arith.mulf %701, %12 : vector<2x128xf32>
    %703 = arith.addf %700, %702 : vector<2x128xf32>
    %704 = vector.broadcast %645 : f32 to vector<2x128xf32>
    %705 = arith.addf %703, %704 : vector<2x128xf32>
    %706 = vector.broadcast %648 : f32 to vector<2x128xf32>
    %707 = arith.mulf %706, %17 : vector<2x128xf32>
    %708 = vector.broadcast %651 : f32 to vector<2x128xf32>
    %709 = arith.mulf %708, %12 : vector<2x128xf32>
    %710 = arith.addf %707, %709 : vector<2x128xf32>
    %711 = vector.broadcast %654 : f32 to vector<2x128xf32>
    %712 = arith.addf %710, %711 : vector<2x128xf32>
    %713 = arith.select %691, %678, %597 : vector<2x128xi1>, vector<2x128xf32>
    %714 = arith.select %691, %698, %598 : vector<2x128xi1>, vector<2x128xf32>
    %715 = arith.select %691, %705, %599 : vector<2x128xi1>, vector<2x128xf32>
    %716 = arith.select %691, %712, %600 : vector<2x128xi1>, vector<2x128xf32>
    %c6_i32 = arith.constant 6 : i32
    %717 = arith.addi %20, %c6_i32 : i32
    %718 = arith.index_cast %717 : i32 to index
    %719 = memref.load %arg2[%718] : memref<4608xf32, #tpu.memory_space<smem>>
    %c128_i32_121 = arith.constant 128 : i32
    %720 = arith.addi %717, %c128_i32_121 : i32
    %721 = arith.index_cast %720 : i32 to index
    %722 = memref.load %arg2[%721] : memref<4608xf32, #tpu.memory_space<smem>>
    %c256_i32_122 = arith.constant 256 : i32
    %723 = arith.addi %717, %c256_i32_122 : i32
    %724 = arith.index_cast %723 : i32 to index
    %725 = memref.load %arg2[%724] : memref<4608xf32, #tpu.memory_space<smem>>
    %c384_i32_123 = arith.constant 384 : i32
    %726 = arith.addi %717, %c384_i32_123 : i32
    %727 = arith.index_cast %726 : i32 to index
    %728 = memref.load %arg2[%727] : memref<4608xf32, #tpu.memory_space<smem>>
    %c512_i32_124 = arith.constant 512 : i32
    %729 = arith.addi %717, %c512_i32_124 : i32
    %730 = arith.index_cast %729 : i32 to index
    %731 = memref.load %arg2[%730] : memref<4608xf32, #tpu.memory_space<smem>>
    %c640_i32_125 = arith.constant 640 : i32
    %732 = arith.addi %717, %c640_i32_125 : i32
    %733 = arith.index_cast %732 : i32 to index
    %734 = memref.load %arg2[%733] : memref<4608xf32, #tpu.memory_space<smem>>
    %c768_i32_126 = arith.constant 768 : i32
    %735 = arith.addi %717, %c768_i32_126 : i32
    %736 = arith.index_cast %735 : i32 to index
    %737 = memref.load %arg2[%736] : memref<4608xf32, #tpu.memory_space<smem>>
    %c896_i32_127 = arith.constant 896 : i32
    %738 = arith.addi %717, %c896_i32_127 : i32
    %739 = arith.index_cast %738 : i32 to index
    %740 = memref.load %arg2[%739] : memref<4608xf32, #tpu.memory_space<smem>>
    %c1024_i32_128 = arith.constant 1024 : i32
    %741 = arith.addi %717, %c1024_i32_128 : i32
    %742 = arith.index_cast %741 : i32 to index
    %743 = memref.load %arg2[%742] : memref<4608xf32, #tpu.memory_space<smem>>
    %c1152_i32_129 = arith.constant 1152 : i32
    %744 = arith.addi %717, %c1152_i32_129 : i32
    %745 = arith.index_cast %744 : i32 to index
    %746 = memref.load %arg2[%745] : memref<4608xf32, #tpu.memory_space<smem>>
    %c1280_i32_130 = arith.constant 1280 : i32
    %747 = arith.addi %717, %c1280_i32_130 : i32
    %748 = arith.index_cast %747 : i32 to index
    %749 = memref.load %arg2[%748] : memref<4608xf32, #tpu.memory_space<smem>>
    %c1408_i32_131 = arith.constant 1408 : i32
    %750 = arith.addi %717, %c1408_i32_131 : i32
    %751 = arith.index_cast %750 : i32 to index
    %752 = memref.load %arg2[%751] : memref<4608xf32, #tpu.memory_space<smem>>
    %c1536_i32_132 = arith.constant 1536 : i32
    %753 = arith.addi %717, %c1536_i32_132 : i32
    %754 = arith.index_cast %753 : i32 to index
    %755 = memref.load %arg2[%754] : memref<4608xf32, #tpu.memory_space<smem>>
    %c1664_i32_133 = arith.constant 1664 : i32
    %756 = arith.addi %717, %c1664_i32_133 : i32
    %757 = arith.index_cast %756 : i32 to index
    %758 = memref.load %arg2[%757] : memref<4608xf32, #tpu.memory_space<smem>>
    %c1792_i32_134 = arith.constant 1792 : i32
    %759 = arith.addi %717, %c1792_i32_134 : i32
    %760 = arith.index_cast %759 : i32 to index
    %761 = memref.load %arg2[%760] : memref<4608xf32, #tpu.memory_space<smem>>
    %c1920_i32_135 = arith.constant 1920 : i32
    %762 = arith.addi %717, %c1920_i32_135 : i32
    %763 = arith.index_cast %762 : i32 to index
    %764 = memref.load %arg2[%763] : memref<4608xf32, #tpu.memory_space<smem>>
    %c2048_i32_136 = arith.constant 2048 : i32
    %765 = arith.addi %717, %c2048_i32_136 : i32
    %766 = arith.index_cast %765 : i32 to index
    %767 = memref.load %arg2[%766] : memref<4608xf32, #tpu.memory_space<smem>>
    %c2176_i32_137 = arith.constant 2176 : i32
    %768 = arith.addi %717, %c2176_i32_137 : i32
    %769 = arith.index_cast %768 : i32 to index
    %770 = memref.load %arg2[%769] : memref<4608xf32, #tpu.memory_space<smem>>
    %771 = vector.broadcast %719 : f32 to vector<2x128xf32>
    %772 = arith.mulf %771, %17 : vector<2x128xf32>
    %773 = vector.broadcast %722 : f32 to vector<2x128xf32>
    %774 = arith.mulf %773, %12 : vector<2x128xf32>
    %775 = arith.addf %772, %774 : vector<2x128xf32>
    %776 = vector.broadcast %725 : f32 to vector<2x128xf32>
    %777 = arith.addf %775, %776 : vector<2x128xf32>
    %778 = vector.broadcast %728 : f32 to vector<2x128xf32>
    %779 = arith.mulf %778, %17 : vector<2x128xf32>
    %780 = vector.broadcast %731 : f32 to vector<2x128xf32>
    %781 = arith.mulf %780, %12 : vector<2x128xf32>
    %782 = arith.addf %779, %781 : vector<2x128xf32>
    %783 = vector.broadcast %734 : f32 to vector<2x128xf32>
    %784 = arith.addf %782, %783 : vector<2x128xf32>
    %cst_138 = arith.constant 1.000000e+00 : f32
    %785 = vector.broadcast %cst_138 : f32 to vector<2x128xf32>
    %786 = arith.subf %785, %777 : vector<2x128xf32>
    %787 = arith.subf %786, %784 : vector<2x128xf32>
    %788 = vector.broadcast %737 : f32 to vector<2x128xf32>
    %789 = arith.mulf %788, %17 : vector<2x128xf32>
    %790 = vector.broadcast %740 : f32 to vector<2x128xf32>
    %791 = arith.mulf %790, %12 : vector<2x128xf32>
    %792 = arith.addf %789, %791 : vector<2x128xf32>
    %793 = vector.broadcast %743 : f32 to vector<2x128xf32>
    %794 = arith.addf %792, %793 : vector<2x128xf32>
    %cst_139 = arith.constant 0.000000e+00 : f32
    %795 = vector.broadcast %cst_139 : f32 to vector<2x128xf32>
    %796 = arith.cmpf oge, %777, %795 : vector<2x128xf32>
    %cst_140 = arith.constant 0.000000e+00 : f32
    %797 = vector.broadcast %cst_140 : f32 to vector<2x128xf32>
    %798 = arith.cmpf oge, %784, %797 : vector<2x128xf32>
    %799 = arith.andi %796, %798 : vector<2x128xi1>
    %cst_141 = arith.constant 0.000000e+00 : f32
    %800 = vector.broadcast %cst_141 : f32 to vector<2x128xf32>
    %801 = arith.cmpf oge, %787, %800 : vector<2x128xf32>
    %802 = arith.andi %799, %801 : vector<2x128xi1>
    %cst_142 = arith.constant 9.99999997E-7 : f32
    %803 = vector.broadcast %cst_142 : f32 to vector<2x128xf32>
    %804 = arith.cmpf ogt, %794, %803 : vector<2x128xf32>
    %805 = arith.andi %802, %804 : vector<2x128xi1>
    %806 = arith.cmpf olt, %794, %713 : vector<2x128xf32>
    %807 = arith.andi %805, %806 : vector<2x128xi1>
    %808 = vector.broadcast %746 : f32 to vector<2x128xf32>
    %809 = arith.mulf %808, %17 : vector<2x128xf32>
    %810 = vector.broadcast %749 : f32 to vector<2x128xf32>
    %811 = arith.mulf %810, %12 : vector<2x128xf32>
    %812 = arith.addf %809, %811 : vector<2x128xf32>
    %813 = vector.broadcast %752 : f32 to vector<2x128xf32>
    %814 = arith.addf %812, %813 : vector<2x128xf32>
    %815 = vector.broadcast %755 : f32 to vector<2x128xf32>
    %816 = arith.mulf %815, %17 : vector<2x128xf32>
    %817 = vector.broadcast %758 : f32 to vector<2x128xf32>
    %818 = arith.mulf %817, %12 : vector<2x128xf32>
    %819 = arith.addf %816, %818 : vector<2x128xf32>
    %820 = vector.broadcast %761 : f32 to vector<2x128xf32>
    %821 = arith.addf %819, %820 : vector<2x128xf32>
    %822 = vector.broadcast %764 : f32 to vector<2x128xf32>
    %823 = arith.mulf %822, %17 : vector<2x128xf32>
    %824 = vector.broadcast %767 : f32 to vector<2x128xf32>
    %825 = arith.mulf %824, %12 : vector<2x128xf32>
    %826 = arith.addf %823, %825 : vector<2x128xf32>
    %827 = vector.broadcast %770 : f32 to vector<2x128xf32>
    %828 = arith.addf %826, %827 : vector<2x128xf32>
    %829 = arith.select %807, %794, %713 : vector<2x128xi1>, vector<2x128xf32>
    %830 = arith.select %807, %814, %714 : vector<2x128xi1>, vector<2x128xf32>
    %831 = arith.select %807, %821, %715 : vector<2x128xi1>, vector<2x128xf32>
    %832 = arith.select %807, %828, %716 : vector<2x128xi1>, vector<2x128xf32>
    %c7_i32 = arith.constant 7 : i32
    %833 = arith.addi %20, %c7_i32 : i32
    %834 = arith.index_cast %833 : i32 to index
    %835 = memref.load %arg2[%834] : memref<4608xf32, #tpu.memory_space<smem>>
    %c128_i32_143 = arith.constant 128 : i32
    %836 = arith.addi %833, %c128_i32_143 : i32
    %837 = arith.index_cast %836 : i32 to index
    %838 = memref.load %arg2[%837] : memref<4608xf32, #tpu.memory_space<smem>>
    %c256_i32_144 = arith.constant 256 : i32
    %839 = arith.addi %833, %c256_i32_144 : i32
    %840 = arith.index_cast %839 : i32 to index
    %841 = memref.load %arg2[%840] : memref<4608xf32, #tpu.memory_space<smem>>
    %c384_i32_145 = arith.constant 384 : i32
    %842 = arith.addi %833, %c384_i32_145 : i32
    %843 = arith.index_cast %842 : i32 to index
    %844 = memref.load %arg2[%843] : memref<4608xf32, #tpu.memory_space<smem>>
    %c512_i32_146 = arith.constant 512 : i32
    %845 = arith.addi %833, %c512_i32_146 : i32
    %846 = arith.index_cast %845 : i32 to index
    %847 = memref.load %arg2[%846] : memref<4608xf32, #tpu.memory_space<smem>>
    %c640_i32_147 = arith.constant 640 : i32
    %848 = arith.addi %833, %c640_i32_147 : i32
    %849 = arith.index_cast %848 : i32 to index
    %850 = memref.load %arg2[%849] : memref<4608xf32, #tpu.memory_space<smem>>
    %c768_i32_148 = arith.constant 768 : i32
    %851 = arith.addi %833, %c768_i32_148 : i32
    %852 = arith.index_cast %851 : i32 to index
    %853 = memref.load %arg2[%852] : memref<4608xf32, #tpu.memory_space<smem>>
    %c896_i32_149 = arith.constant 896 : i32
    %854 = arith.addi %833, %c896_i32_149 : i32
    %855 = arith.index_cast %854 : i32 to index
    %856 = memref.load %arg2[%855] : memref<4608xf32, #tpu.memory_space<smem>>
    %c1024_i32_150 = arith.constant 1024 : i32
    %857 = arith.addi %833, %c1024_i32_150 : i32
    %858 = arith.index_cast %857 : i32 to index
    %859 = memref.load %arg2[%858] : memref<4608xf32, #tpu.memory_space<smem>>
    %c1152_i32_151 = arith.constant 1152 : i32
    %860 = arith.addi %833, %c1152_i32_151 : i32
    %861 = arith.index_cast %860 : i32 to index
    %862 = memref.load %arg2[%861] : memref<4608xf32, #tpu.memory_space<smem>>
    %c1280_i32_152 = arith.constant 1280 : i32
    %863 = arith.addi %833, %c1280_i32_152 : i32
    %864 = arith.index_cast %863 : i32 to index
    %865 = memref.load %arg2[%864] : memref<4608xf32, #tpu.memory_space<smem>>
    %c1408_i32_153 = arith.constant 1408 : i32
    %866 = arith.addi %833, %c1408_i32_153 : i32
    %867 = arith.index_cast %866 : i32 to index
    %868 = memref.load %arg2[%867] : memref<4608xf32, #tpu.memory_space<smem>>
    %c1536_i32_154 = arith.constant 1536 : i32
    %869 = arith.addi %833, %c1536_i32_154 : i32
    %870 = arith.index_cast %869 : i32 to index
    %871 = memref.load %arg2[%870] : memref<4608xf32, #tpu.memory_space<smem>>
    %c1664_i32_155 = arith.constant 1664 : i32
    %872 = arith.addi %833, %c1664_i32_155 : i32
    %873 = arith.index_cast %872 : i32 to index
    %874 = memref.load %arg2[%873] : memref<4608xf32, #tpu.memory_space<smem>>
    %c1792_i32_156 = arith.constant 1792 : i32
    %875 = arith.addi %833, %c1792_i32_156 : i32
    %876 = arith.index_cast %875 : i32 to index
    %877 = memref.load %arg2[%876] : memref<4608xf32, #tpu.memory_space<smem>>
    %c1920_i32_157 = arith.constant 1920 : i32
    %878 = arith.addi %833, %c1920_i32_157 : i32
    %879 = arith.index_cast %878 : i32 to index
    %880 = memref.load %arg2[%879] : memref<4608xf32, #tpu.memory_space<smem>>
    %c2048_i32_158 = arith.constant 2048 : i32
    %881 = arith.addi %833, %c2048_i32_158 : i32
    %882 = arith.index_cast %881 : i32 to index
    %883 = memref.load %arg2[%882] : memref<4608xf32, #tpu.memory_space<smem>>
    %c2176_i32_159 = arith.constant 2176 : i32
    %884 = arith.addi %833, %c2176_i32_159 : i32
    %885 = arith.index_cast %884 : i32 to index
    %886 = memref.load %arg2[%885] : memref<4608xf32, #tpu.memory_space<smem>>
    %887 = vector.broadcast %835 : f32 to vector<2x128xf32>
    %888 = arith.mulf %887, %17 : vector<2x128xf32>
    %889 = vector.broadcast %838 : f32 to vector<2x128xf32>
    %890 = arith.mulf %889, %12 : vector<2x128xf32>
    %891 = arith.addf %888, %890 : vector<2x128xf32>
    %892 = vector.broadcast %841 : f32 to vector<2x128xf32>
    %893 = arith.addf %891, %892 : vector<2x128xf32>
    %894 = vector.broadcast %844 : f32 to vector<2x128xf32>
    %895 = arith.mulf %894, %17 : vector<2x128xf32>
    %896 = vector.broadcast %847 : f32 to vector<2x128xf32>
    %897 = arith.mulf %896, %12 : vector<2x128xf32>
    %898 = arith.addf %895, %897 : vector<2x128xf32>
    %899 = vector.broadcast %850 : f32 to vector<2x128xf32>
    %900 = arith.addf %898, %899 : vector<2x128xf32>
    %cst_160 = arith.constant 1.000000e+00 : f32
    %901 = vector.broadcast %cst_160 : f32 to vector<2x128xf32>
    %902 = arith.subf %901, %893 : vector<2x128xf32>
    %903 = arith.subf %902, %900 : vector<2x128xf32>
    %904 = vector.broadcast %853 : f32 to vector<2x128xf32>
    %905 = arith.mulf %904, %17 : vector<2x128xf32>
    %906 = vector.broadcast %856 : f32 to vector<2x128xf32>
    %907 = arith.mulf %906, %12 : vector<2x128xf32>
    %908 = arith.addf %905, %907 : vector<2x128xf32>
    %909 = vector.broadcast %859 : f32 to vector<2x128xf32>
    %910 = arith.addf %908, %909 : vector<2x128xf32>
    %cst_161 = arith.constant 0.000000e+00 : f32
    %911 = vector.broadcast %cst_161 : f32 to vector<2x128xf32>
    %912 = arith.cmpf oge, %893, %911 : vector<2x128xf32>
    %cst_162 = arith.constant 0.000000e+00 : f32
    %913 = vector.broadcast %cst_162 : f32 to vector<2x128xf32>
    %914 = arith.cmpf oge, %900, %913 : vector<2x128xf32>
    %915 = arith.andi %912, %914 : vector<2x128xi1>
    %cst_163 = arith.constant 0.000000e+00 : f32
    %916 = vector.broadcast %cst_163 : f32 to vector<2x128xf32>
    %917 = arith.cmpf oge, %903, %916 : vector<2x128xf32>
    %918 = arith.andi %915, %917 : vector<2x128xi1>
    %cst_164 = arith.constant 9.99999997E-7 : f32
    %919 = vector.broadcast %cst_164 : f32 to vector<2x128xf32>
    %920 = arith.cmpf ogt, %910, %919 : vector<2x128xf32>
    %921 = arith.andi %918, %920 : vector<2x128xi1>
    %922 = arith.cmpf olt, %910, %829 : vector<2x128xf32>
    %923 = arith.andi %921, %922 : vector<2x128xi1>
    %924 = vector.broadcast %862 : f32 to vector<2x128xf32>
    %925 = arith.mulf %924, %17 : vector<2x128xf32>
    %926 = vector.broadcast %865 : f32 to vector<2x128xf32>
    %927 = arith.mulf %926, %12 : vector<2x128xf32>
    %928 = arith.addf %925, %927 : vector<2x128xf32>
    %929 = vector.broadcast %868 : f32 to vector<2x128xf32>
    %930 = arith.addf %928, %929 : vector<2x128xf32>
    %931 = vector.broadcast %871 : f32 to vector<2x128xf32>
    %932 = arith.mulf %931, %17 : vector<2x128xf32>
    %933 = vector.broadcast %874 : f32 to vector<2x128xf32>
    %934 = arith.mulf %933, %12 : vector<2x128xf32>
    %935 = arith.addf %932, %934 : vector<2x128xf32>
    %936 = vector.broadcast %877 : f32 to vector<2x128xf32>
    %937 = arith.addf %935, %936 : vector<2x128xf32>
    %938 = vector.broadcast %880 : f32 to vector<2x128xf32>
    %939 = arith.mulf %938, %17 : vector<2x128xf32>
    %940 = vector.broadcast %883 : f32 to vector<2x128xf32>
    %941 = arith.mulf %940, %12 : vector<2x128xf32>
    %942 = arith.addf %939, %941 : vector<2x128xf32>
    %943 = vector.broadcast %886 : f32 to vector<2x128xf32>
    %944 = arith.addf %942, %943 : vector<2x128xf32>
    %945 = arith.select %923, %910, %829 : vector<2x128xi1>, vector<2x128xf32>
    %946 = arith.select %923, %930, %830 : vector<2x128xi1>, vector<2x128xf32>
    %947 = arith.select %923, %937, %831 : vector<2x128xi1>, vector<2x128xf32>
    %948 = arith.select %923, %944, %832 : vector<2x128xi1>, vector<2x128xf32>
    %c8_i32 = arith.constant 8 : i32
    %949 = arith.addi %20, %c8_i32 : i32
    %950 = arith.index_cast %949 : i32 to index
    %951 = memref.load %arg2[%950] : memref<4608xf32, #tpu.memory_space<smem>>
    %c128_i32_165 = arith.constant 128 : i32
    %952 = arith.addi %949, %c128_i32_165 : i32
    %953 = arith.index_cast %952 : i32 to index
    %954 = memref.load %arg2[%953] : memref<4608xf32, #tpu.memory_space<smem>>
    %c256_i32_166 = arith.constant 256 : i32
    %955 = arith.addi %949, %c256_i32_166 : i32
    %956 = arith.index_cast %955 : i32 to index
    %957 = memref.load %arg2[%956] : memref<4608xf32, #tpu.memory_space<smem>>
    %c384_i32_167 = arith.constant 384 : i32
    %958 = arith.addi %949, %c384_i32_167 : i32
    %959 = arith.index_cast %958 : i32 to index
    %960 = memref.load %arg2[%959] : memref<4608xf32, #tpu.memory_space<smem>>
    %c512_i32_168 = arith.constant 512 : i32
    %961 = arith.addi %949, %c512_i32_168 : i32
    %962 = arith.index_cast %961 : i32 to index
    %963 = memref.load %arg2[%962] : memref<4608xf32, #tpu.memory_space<smem>>
    %c640_i32_169 = arith.constant 640 : i32
    %964 = arith.addi %949, %c640_i32_169 : i32
    %965 = arith.index_cast %964 : i32 to index
    %966 = memref.load %arg2[%965] : memref<4608xf32, #tpu.memory_space<smem>>
    %c768_i32_170 = arith.constant 768 : i32
    %967 = arith.addi %949, %c768_i32_170 : i32
    %968 = arith.index_cast %967 : i32 to index
    %969 = memref.load %arg2[%968] : memref<4608xf32, #tpu.memory_space<smem>>
    %c896_i32_171 = arith.constant 896 : i32
    %970 = arith.addi %949, %c896_i32_171 : i32
    %971 = arith.index_cast %970 : i32 to index
    %972 = memref.load %arg2[%971] : memref<4608xf32, #tpu.memory_space<smem>>
    %c1024_i32_172 = arith.constant 1024 : i32
    %973 = arith.addi %949, %c1024_i32_172 : i32
    %974 = arith.index_cast %973 : i32 to index
    %975 = memref.load %arg2[%974] : memref<4608xf32, #tpu.memory_space<smem>>
    %c1152_i32_173 = arith.constant 1152 : i32
    %976 = arith.addi %949, %c1152_i32_173 : i32
    %977 = arith.index_cast %976 : i32 to index
    %978 = memref.load %arg2[%977] : memref<4608xf32, #tpu.memory_space<smem>>
    %c1280_i32_174 = arith.constant 1280 : i32
    %979 = arith.addi %949, %c1280_i32_174 : i32
    %980 = arith.index_cast %979 : i32 to index
    %981 = memref.load %arg2[%980] : memref<4608xf32, #tpu.memory_space<smem>>
    %c1408_i32_175 = arith.constant 1408 : i32
    %982 = arith.addi %949, %c1408_i32_175 : i32
    %983 = arith.index_cast %982 : i32 to index
    %984 = memref.load %arg2[%983] : memref<4608xf32, #tpu.memory_space<smem>>
    %c1536_i32_176 = arith.constant 1536 : i32
    %985 = arith.addi %949, %c1536_i32_176 : i32
    %986 = arith.index_cast %985 : i32 to index
    %987 = memref.load %arg2[%986] : memref<4608xf32, #tpu.memory_space<smem>>
    %c1664_i32_177 = arith.constant 1664 : i32
    %988 = arith.addi %949, %c1664_i32_177 : i32
    %989 = arith.index_cast %988 : i32 to index
    %990 = memref.load %arg2[%989] : memref<4608xf32, #tpu.memory_space<smem>>
    %c1792_i32_178 = arith.constant 1792 : i32
    %991 = arith.addi %949, %c1792_i32_178 : i32
    %992 = arith.index_cast %991 : i32 to index
    %993 = memref.load %arg2[%992] : memref<4608xf32, #tpu.memory_space<smem>>
    %c1920_i32_179 = arith.constant 1920 : i32
    %994 = arith.addi %949, %c1920_i32_179 : i32
    %995 = arith.index_cast %994 : i32 to index
    %996 = memref.load %arg2[%995] : memref<4608xf32, #tpu.memory_space<smem>>
    %c2048_i32_180 = arith.constant 2048 : i32
    %997 = arith.addi %949, %c2048_i32_180 : i32
    %998 = arith.index_cast %997 : i32 to index
    %999 = memref.load %arg2[%998] : memref<4608xf32, #tpu.memory_space<smem>>
    %c2176_i32_181 = arith.constant 2176 : i32
    %1000 = arith.addi %949, %c2176_i32_181 : i32
    %1001 = arith.index_cast %1000 : i32 to index
    %1002 = memref.load %arg2[%1001] : memref<4608xf32, #tpu.memory_space<smem>>
    %1003 = vector.broadcast %951 : f32 to vector<2x128xf32>
    %1004 = arith.mulf %1003, %17 : vector<2x128xf32>
    %1005 = vector.broadcast %954 : f32 to vector<2x128xf32>
    %1006 = arith.mulf %1005, %12 : vector<2x128xf32>
    %1007 = arith.addf %1004, %1006 : vector<2x128xf32>
    %1008 = vector.broadcast %957 : f32 to vector<2x128xf32>
    %1009 = arith.addf %1007, %1008 : vector<2x128xf32>
    %1010 = vector.broadcast %960 : f32 to vector<2x128xf32>
    %1011 = arith.mulf %1010, %17 : vector<2x128xf32>
    %1012 = vector.broadcast %963 : f32 to vector<2x128xf32>
    %1013 = arith.mulf %1012, %12 : vector<2x128xf32>
    %1014 = arith.addf %1011, %1013 : vector<2x128xf32>
    %1015 = vector.broadcast %966 : f32 to vector<2x128xf32>
    %1016 = arith.addf %1014, %1015 : vector<2x128xf32>
    %cst_182 = arith.constant 1.000000e+00 : f32
    %1017 = vector.broadcast %cst_182 : f32 to vector<2x128xf32>
    %1018 = arith.subf %1017, %1009 : vector<2x128xf32>
    %1019 = arith.subf %1018, %1016 : vector<2x128xf32>
    %1020 = vector.broadcast %969 : f32 to vector<2x128xf32>
    %1021 = arith.mulf %1020, %17 : vector<2x128xf32>
    %1022 = vector.broadcast %972 : f32 to vector<2x128xf32>
    %1023 = arith.mulf %1022, %12 : vector<2x128xf32>
    %1024 = arith.addf %1021, %1023 : vector<2x128xf32>
    %1025 = vector.broadcast %975 : f32 to vector<2x128xf32>
    %1026 = arith.addf %1024, %1025 : vector<2x128xf32>
    %cst_183 = arith.constant 0.000000e+00 : f32
    %1027 = vector.broadcast %cst_183 : f32 to vector<2x128xf32>
    %1028 = arith.cmpf oge, %1009, %1027 : vector<2x128xf32>
    %cst_184 = arith.constant 0.000000e+00 : f32
    %1029 = vector.broadcast %cst_184 : f32 to vector<2x128xf32>
    %1030 = arith.cmpf oge, %1016, %1029 : vector<2x128xf32>
    %1031 = arith.andi %1028, %1030 : vector<2x128xi1>
    %cst_185 = arith.constant 0.000000e+00 : f32
    %1032 = vector.broadcast %cst_185 : f32 to vector<2x128xf32>
    %1033 = arith.cmpf oge, %1019, %1032 : vector<2x128xf32>
    %1034 = arith.andi %1031, %1033 : vector<2x128xi1>
    %cst_186 = arith.constant 9.99999997E-7 : f32
    %1035 = vector.broadcast %cst_186 : f32 to vector<2x128xf32>
    %1036 = arith.cmpf ogt, %1026, %1035 : vector<2x128xf32>
    %1037 = arith.andi %1034, %1036 : vector<2x128xi1>
    %1038 = arith.cmpf olt, %1026, %945 : vector<2x128xf32>
    %1039 = arith.andi %1037, %1038 : vector<2x128xi1>
    %1040 = vector.broadcast %978 : f32 to vector<2x128xf32>
    %1041 = arith.mulf %1040, %17 : vector<2x128xf32>
    %1042 = vector.broadcast %981 : f32 to vector<2x128xf32>
    %1043 = arith.mulf %1042, %12 : vector<2x128xf32>
    %1044 = arith.addf %1041, %1043 : vector<2x128xf32>
    %1045 = vector.broadcast %984 : f32 to vector<2x128xf32>
    %1046 = arith.addf %1044, %1045 : vector<2x128xf32>
    %1047 = vector.broadcast %987 : f32 to vector<2x128xf32>
    %1048 = arith.mulf %1047, %17 : vector<2x128xf32>
    %1049 = vector.broadcast %990 : f32 to vector<2x128xf32>
    %1050 = arith.mulf %1049, %12 : vector<2x128xf32>
    %1051 = arith.addf %1048, %1050 : vector<2x128xf32>
    %1052 = vector.broadcast %993 : f32 to vector<2x128xf32>
    %1053 = arith.addf %1051, %1052 : vector<2x128xf32>
    %1054 = vector.broadcast %996 : f32 to vector<2x128xf32>
    %1055 = arith.mulf %1054, %17 : vector<2x128xf32>
    %1056 = vector.broadcast %999 : f32 to vector<2x128xf32>
    %1057 = arith.mulf %1056, %12 : vector<2x128xf32>
    %1058 = arith.addf %1055, %1057 : vector<2x128xf32>
    %1059 = vector.broadcast %1002 : f32 to vector<2x128xf32>
    %1060 = arith.addf %1058, %1059 : vector<2x128xf32>
    %1061 = arith.select %1039, %1026, %945 : vector<2x128xi1>, vector<2x128xf32>
    %1062 = arith.select %1039, %1046, %946 : vector<2x128xi1>, vector<2x128xf32>
    %1063 = arith.select %1039, %1053, %947 : vector<2x128xi1>, vector<2x128xf32>
    %1064 = arith.select %1039, %1060, %948 : vector<2x128xi1>, vector<2x128xf32>
    %c9_i32 = arith.constant 9 : i32
    %1065 = arith.addi %20, %c9_i32 : i32
    %1066 = arith.index_cast %1065 : i32 to index
    %1067 = memref.load %arg2[%1066] : memref<4608xf32, #tpu.memory_space<smem>>
    %c128_i32_187 = arith.constant 128 : i32
    %1068 = arith.addi %1065, %c128_i32_187 : i32
    %1069 = arith.index_cast %1068 : i32 to index
    %1070 = memref.load %arg2[%1069] : memref<4608xf32, #tpu.memory_space<smem>>
    %c256_i32_188 = arith.constant 256 : i32
    %1071 = arith.addi %1065, %c256_i32_188 : i32
    %1072 = arith.index_cast %1071 : i32 to index
    %1073 = memref.load %arg2[%1072] : memref<4608xf32, #tpu.memory_space<smem>>
    %c384_i32_189 = arith.constant 384 : i32
    %1074 = arith.addi %1065, %c384_i32_189 : i32
    %1075 = arith.index_cast %1074 : i32 to index
    %1076 = memref.load %arg2[%1075] : memref<4608xf32, #tpu.memory_space<smem>>
    %c512_i32_190 = arith.constant 512 : i32
    %1077 = arith.addi %1065, %c512_i32_190 : i32
    %1078 = arith.index_cast %1077 : i32 to index
    %1079 = memref.load %arg2[%1078] : memref<4608xf32, #tpu.memory_space<smem>>
    %c640_i32_191 = arith.constant 640 : i32
    %1080 = arith.addi %1065, %c640_i32_191 : i32
    %1081 = arith.index_cast %1080 : i32 to index
    %1082 = memref.load %arg2[%1081] : memref<4608xf32, #tpu.memory_space<smem>>
    %c768_i32_192 = arith.constant 768 : i32
    %1083 = arith.addi %1065, %c768_i32_192 : i32
    %1084 = arith.index_cast %1083 : i32 to index
    %1085 = memref.load %arg2[%1084] : memref<4608xf32, #tpu.memory_space<smem>>
    %c896_i32_193 = arith.constant 896 : i32
    %1086 = arith.addi %1065, %c896_i32_193 : i32
    %1087 = arith.index_cast %1086 : i32 to index
    %1088 = memref.load %arg2[%1087] : memref<4608xf32, #tpu.memory_space<smem>>
    %c1024_i32_194 = arith.constant 1024 : i32
    %1089 = arith.addi %1065, %c1024_i32_194 : i32
    %1090 = arith.index_cast %1089 : i32 to index
    %1091 = memref.load %arg2[%1090] : memref<4608xf32, #tpu.memory_space<smem>>
    %c1152_i32_195 = arith.constant 1152 : i32
    %1092 = arith.addi %1065, %c1152_i32_195 : i32
    %1093 = arith.index_cast %1092 : i32 to index
    %1094 = memref.load %arg2[%1093] : memref<4608xf32, #tpu.memory_space<smem>>
    %c1280_i32_196 = arith.constant 1280 : i32
    %1095 = arith.addi %1065, %c1280_i32_196 : i32
    %1096 = arith.index_cast %1095 : i32 to index
    %1097 = memref.load %arg2[%1096] : memref<4608xf32, #tpu.memory_space<smem>>
    %c1408_i32_197 = arith.constant 1408 : i32
    %1098 = arith.addi %1065, %c1408_i32_197 : i32
    %1099 = arith.index_cast %1098 : i32 to index
    %1100 = memref.load %arg2[%1099] : memref<4608xf32, #tpu.memory_space<smem>>
    %c1536_i32_198 = arith.constant 1536 : i32
    %1101 = arith.addi %1065, %c1536_i32_198 : i32
    %1102 = arith.index_cast %1101 : i32 to index
    %1103 = memref.load %arg2[%1102] : memref<4608xf32, #tpu.memory_space<smem>>
    %c1664_i32_199 = arith.constant 1664 : i32
    %1104 = arith.addi %1065, %c1664_i32_199 : i32
    %1105 = arith.index_cast %1104 : i32 to index
    %1106 = memref.load %arg2[%1105] : memref<4608xf32, #tpu.memory_space<smem>>
    %c1792_i32_200 = arith.constant 1792 : i32
    %1107 = arith.addi %1065, %c1792_i32_200 : i32
    %1108 = arith.index_cast %1107 : i32 to index
    %1109 = memref.load %arg2[%1108] : memref<4608xf32, #tpu.memory_space<smem>>
    %c1920_i32_201 = arith.constant 1920 : i32
    %1110 = arith.addi %1065, %c1920_i32_201 : i32
    %1111 = arith.index_cast %1110 : i32 to index
    %1112 = memref.load %arg2[%1111] : memref<4608xf32, #tpu.memory_space<smem>>
    %c2048_i32_202 = arith.constant 2048 : i32
    %1113 = arith.addi %1065, %c2048_i32_202 : i32
    %1114 = arith.index_cast %1113 : i32 to index
    %1115 = memref.load %arg2[%1114] : memref<4608xf32, #tpu.memory_space<smem>>
    %c2176_i32_203 = arith.constant 2176 : i32
    %1116 = arith.addi %1065, %c2176_i32_203 : i32
    %1117 = arith.index_cast %1116 : i32 to index
    %1118 = memref.load %arg2[%1117] : memref<4608xf32, #tpu.memory_space<smem>>
    %1119 = vector.broadcast %1067 : f32 to vector<2x128xf32>
    %1120 = arith.mulf %1119, %17 : vector<2x128xf32>
    %1121 = vector.broadcast %1070 : f32 to vector<2x128xf32>
    %1122 = arith.mulf %1121, %12 : vector<2x128xf32>
    %1123 = arith.addf %1120, %1122 : vector<2x128xf32>
    %1124 = vector.broadcast %1073 : f32 to vector<2x128xf32>
    %1125 = arith.addf %1123, %1124 : vector<2x128xf32>
    %1126 = vector.broadcast %1076 : f32 to vector<2x128xf32>
    %1127 = arith.mulf %1126, %17 : vector<2x128xf32>
    %1128 = vector.broadcast %1079 : f32 to vector<2x128xf32>
    %1129 = arith.mulf %1128, %12 : vector<2x128xf32>
    %1130 = arith.addf %1127, %1129 : vector<2x128xf32>
    %1131 = vector.broadcast %1082 : f32 to vector<2x128xf32>
    %1132 = arith.addf %1130, %1131 : vector<2x128xf32>
    %cst_204 = arith.constant 1.000000e+00 : f32
    %1133 = vector.broadcast %cst_204 : f32 to vector<2x128xf32>
    %1134 = arith.subf %1133, %1125 : vector<2x128xf32>
    %1135 = arith.subf %1134, %1132 : vector<2x128xf32>
    %1136 = vector.broadcast %1085 : f32 to vector<2x128xf32>
    %1137 = arith.mulf %1136, %17 : vector<2x128xf32>
    %1138 = vector.broadcast %1088 : f32 to vector<2x128xf32>
    %1139 = arith.mulf %1138, %12 : vector<2x128xf32>
    %1140 = arith.addf %1137, %1139 : vector<2x128xf32>
    %1141 = vector.broadcast %1091 : f32 to vector<2x128xf32>
    %1142 = arith.addf %1140, %1141 : vector<2x128xf32>
    %cst_205 = arith.constant 0.000000e+00 : f32
    %1143 = vector.broadcast %cst_205 : f32 to vector<2x128xf32>
    %1144 = arith.cmpf oge, %1125, %1143 : vector<2x128xf32>
    %cst_206 = arith.constant 0.000000e+00 : f32
    %1145 = vector.broadcast %cst_206 : f32 to vector<2x128xf32>
    %1146 = arith.cmpf oge, %1132, %1145 : vector<2x128xf32>
    %1147 = arith.andi %1144, %1146 : vector<2x128xi1>
    %cst_207 = arith.constant 0.000000e+00 : f32
    %1148 = vector.broadcast %cst_207 : f32 to vector<2x128xf32>
    %1149 = arith.cmpf oge, %1135, %1148 : vector<2x128xf32>
    %1150 = arith.andi %1147, %1149 : vector<2x128xi1>
    %cst_208 = arith.constant 9.99999997E-7 : f32
    %1151 = vector.broadcast %cst_208 : f32 to vector<2x128xf32>
    %1152 = arith.cmpf ogt, %1142, %1151 : vector<2x128xf32>
    %1153 = arith.andi %1150, %1152 : vector<2x128xi1>
    %1154 = arith.cmpf olt, %1142, %1061 : vector<2x128xf32>
    %1155 = arith.andi %1153, %1154 : vector<2x128xi1>
    %1156 = vector.broadcast %1094 : f32 to vector<2x128xf32>
    %1157 = arith.mulf %1156, %17 : vector<2x128xf32>
    %1158 = vector.broadcast %1097 : f32 to vector<2x128xf32>
    %1159 = arith.mulf %1158, %12 : vector<2x128xf32>
    %1160 = arith.addf %1157, %1159 : vector<2x128xf32>
    %1161 = vector.broadcast %1100 : f32 to vector<2x128xf32>
    %1162 = arith.addf %1160, %1161 : vector<2x128xf32>
    %1163 = vector.broadcast %1103 : f32 to vector<2x128xf32>
    %1164 = arith.mulf %1163, %17 : vector<2x128xf32>
    %1165 = vector.broadcast %1106 : f32 to vector<2x128xf32>
    %1166 = arith.mulf %1165, %12 : vector<2x128xf32>
    %1167 = arith.addf %1164, %1166 : vector<2x128xf32>
    %1168 = vector.broadcast %1109 : f32 to vector<2x128xf32>
    %1169 = arith.addf %1167, %1168 : vector<2x128xf32>
    %1170 = vector.broadcast %1112 : f32 to vector<2x128xf32>
    %1171 = arith.mulf %1170, %17 : vector<2x128xf32>
    %1172 = vector.broadcast %1115 : f32 to vector<2x128xf32>
    %1173 = arith.mulf %1172, %12 : vector<2x128xf32>
    %1174 = arith.addf %1171, %1173 : vector<2x128xf32>
    %1175 = vector.broadcast %1118 : f32 to vector<2x128xf32>
    %1176 = arith.addf %1174, %1175 : vector<2x128xf32>
    %1177 = arith.select %1155, %1142, %1061 : vector<2x128xi1>, vector<2x128xf32>
    %1178 = arith.select %1155, %1162, %1062 : vector<2x128xi1>, vector<2x128xf32>
    %1179 = arith.select %1155, %1169, %1063 : vector<2x128xi1>, vector<2x128xf32>
    %1180 = arith.select %1155, %1176, %1064 : vector<2x128xi1>, vector<2x128xf32>
    %c10_i32 = arith.constant 10 : i32
    %1181 = arith.addi %20, %c10_i32 : i32
    %1182 = arith.index_cast %1181 : i32 to index
    %1183 = memref.load %arg2[%1182] : memref<4608xf32, #tpu.memory_space<smem>>
    %c128_i32_209 = arith.constant 128 : i32
    %1184 = arith.addi %1181, %c128_i32_209 : i32
    %1185 = arith.index_cast %1184 : i32 to index
    %1186 = memref.load %arg2[%1185] : memref<4608xf32, #tpu.memory_space<smem>>
    %c256_i32_210 = arith.constant 256 : i32
    %1187 = arith.addi %1181, %c256_i32_210 : i32
    %1188 = arith.index_cast %1187 : i32 to index
    %1189 = memref.load %arg2[%1188] : memref<4608xf32, #tpu.memory_space<smem>>
    %c384_i32_211 = arith.constant 384 : i32
    %1190 = arith.addi %1181, %c384_i32_211 : i32
    %1191 = arith.index_cast %1190 : i32 to index
    %1192 = memref.load %arg2[%1191] : memref<4608xf32, #tpu.memory_space<smem>>
    %c512_i32_212 = arith.constant 512 : i32
    %1193 = arith.addi %1181, %c512_i32_212 : i32
    %1194 = arith.index_cast %1193 : i32 to index
    %1195 = memref.load %arg2[%1194] : memref<4608xf32, #tpu.memory_space<smem>>
    %c640_i32_213 = arith.constant 640 : i32
    %1196 = arith.addi %1181, %c640_i32_213 : i32
    %1197 = arith.index_cast %1196 : i32 to index
    %1198 = memref.load %arg2[%1197] : memref<4608xf32, #tpu.memory_space<smem>>
    %c768_i32_214 = arith.constant 768 : i32
    %1199 = arith.addi %1181, %c768_i32_214 : i32
    %1200 = arith.index_cast %1199 : i32 to index
    %1201 = memref.load %arg2[%1200] : memref<4608xf32, #tpu.memory_space<smem>>
    %c896_i32_215 = arith.constant 896 : i32
    %1202 = arith.addi %1181, %c896_i32_215 : i32
    %1203 = arith.index_cast %1202 : i32 to index
    %1204 = memref.load %arg2[%1203] : memref<4608xf32, #tpu.memory_space<smem>>
    %c1024_i32_216 = arith.constant 1024 : i32
    %1205 = arith.addi %1181, %c1024_i32_216 : i32
    %1206 = arith.index_cast %1205 : i32 to index
    %1207 = memref.load %arg2[%1206] : memref<4608xf32, #tpu.memory_space<smem>>
    %c1152_i32_217 = arith.constant 1152 : i32
    %1208 = arith.addi %1181, %c1152_i32_217 : i32
    %1209 = arith.index_cast %1208 : i32 to index
    %1210 = memref.load %arg2[%1209] : memref<4608xf32, #tpu.memory_space<smem>>
    %c1280_i32_218 = arith.constant 1280 : i32
    %1211 = arith.addi %1181, %c1280_i32_218 : i32
    %1212 = arith.index_cast %1211 : i32 to index
    %1213 = memref.load %arg2[%1212] : memref<4608xf32, #tpu.memory_space<smem>>
    %c1408_i32_219 = arith.constant 1408 : i32
    %1214 = arith.addi %1181, %c1408_i32_219 : i32
    %1215 = arith.index_cast %1214 : i32 to index
    %1216 = memref.load %arg2[%1215] : memref<4608xf32, #tpu.memory_space<smem>>
    %c1536_i32_220 = arith.constant 1536 : i32
    %1217 = arith.addi %1181, %c1536_i32_220 : i32
    %1218 = arith.index_cast %1217 : i32 to index
    %1219 = memref.load %arg2[%1218] : memref<4608xf32, #tpu.memory_space<smem>>
    %c1664_i32_221 = arith.constant 1664 : i32
    %1220 = arith.addi %1181, %c1664_i32_221 : i32
    %1221 = arith.index_cast %1220 : i32 to index
    %1222 = memref.load %arg2[%1221] : memref<4608xf32, #tpu.memory_space<smem>>
    %c1792_i32_222 = arith.constant 1792 : i32
    %1223 = arith.addi %1181, %c1792_i32_222 : i32
    %1224 = arith.index_cast %1223 : i32 to index
    %1225 = memref.load %arg2[%1224] : memref<4608xf32, #tpu.memory_space<smem>>
    %c1920_i32_223 = arith.constant 1920 : i32
    %1226 = arith.addi %1181, %c1920_i32_223 : i32
    %1227 = arith.index_cast %1226 : i32 to index
    %1228 = memref.load %arg2[%1227] : memref<4608xf32, #tpu.memory_space<smem>>
    %c2048_i32_224 = arith.constant 2048 : i32
    %1229 = arith.addi %1181, %c2048_i32_224 : i32
    %1230 = arith.index_cast %1229 : i32 to index
    %1231 = memref.load %arg2[%1230] : memref<4608xf32, #tpu.memory_space<smem>>
    %c2176_i32_225 = arith.constant 2176 : i32
    %1232 = arith.addi %1181, %c2176_i32_225 : i32
    %1233 = arith.index_cast %1232 : i32 to index
    %1234 = memref.load %arg2[%1233] : memref<4608xf32, #tpu.memory_space<smem>>
    %1235 = vector.broadcast %1183 : f32 to vector<2x128xf32>
    %1236 = arith.mulf %1235, %17 : vector<2x128xf32>
    %1237 = vector.broadcast %1186 : f32 to vector<2x128xf32>
    %1238 = arith.mulf %1237, %12 : vector<2x128xf32>
    %1239 = arith.addf %1236, %1238 : vector<2x128xf32>
    %1240 = vector.broadcast %1189 : f32 to vector<2x128xf32>
    %1241 = arith.addf %1239, %1240 : vector<2x128xf32>
    %1242 = vector.broadcast %1192 : f32 to vector<2x128xf32>
    %1243 = arith.mulf %1242, %17 : vector<2x128xf32>
    %1244 = vector.broadcast %1195 : f32 to vector<2x128xf32>
    %1245 = arith.mulf %1244, %12 : vector<2x128xf32>
    %1246 = arith.addf %1243, %1245 : vector<2x128xf32>
    %1247 = vector.broadcast %1198 : f32 to vector<2x128xf32>
    %1248 = arith.addf %1246, %1247 : vector<2x128xf32>
    %cst_226 = arith.constant 1.000000e+00 : f32
    %1249 = vector.broadcast %cst_226 : f32 to vector<2x128xf32>
    %1250 = arith.subf %1249, %1241 : vector<2x128xf32>
    %1251 = arith.subf %1250, %1248 : vector<2x128xf32>
    %1252 = vector.broadcast %1201 : f32 to vector<2x128xf32>
    %1253 = arith.mulf %1252, %17 : vector<2x128xf32>
    %1254 = vector.broadcast %1204 : f32 to vector<2x128xf32>
    %1255 = arith.mulf %1254, %12 : vector<2x128xf32>
    %1256 = arith.addf %1253, %1255 : vector<2x128xf32>
    %1257 = vector.broadcast %1207 : f32 to vector<2x128xf32>
    %1258 = arith.addf %1256, %1257 : vector<2x128xf32>
    %cst_227 = arith.constant 0.000000e+00 : f32
    %1259 = vector.broadcast %cst_227 : f32 to vector<2x128xf32>
    %1260 = arith.cmpf oge, %1241, %1259 : vector<2x128xf32>
    %cst_228 = arith.constant 0.000000e+00 : f32
    %1261 = vector.broadcast %cst_228 : f32 to vector<2x128xf32>
    %1262 = arith.cmpf oge, %1248, %1261 : vector<2x128xf32>
    %1263 = arith.andi %1260, %1262 : vector<2x128xi1>
    %cst_229 = arith.constant 0.000000e+00 : f32
    %1264 = vector.broadcast %cst_229 : f32 to vector<2x128xf32>
    %1265 = arith.cmpf oge, %1251, %1264 : vector<2x128xf32>
    %1266 = arith.andi %1263, %1265 : vector<2x128xi1>
    %cst_230 = arith.constant 9.99999997E-7 : f32
    %1267 = vector.broadcast %cst_230 : f32 to vector<2x128xf32>
    %1268 = arith.cmpf ogt, %1258, %1267 : vector<2x128xf32>
    %1269 = arith.andi %1266, %1268 : vector<2x128xi1>
    %1270 = arith.cmpf olt, %1258, %1177 : vector<2x128xf32>
    %1271 = arith.andi %1269, %1270 : vector<2x128xi1>
    %1272 = vector.broadcast %1210 : f32 to vector<2x128xf32>
    %1273 = arith.mulf %1272, %17 : vector<2x128xf32>
    %1274 = vector.broadcast %1213 : f32 to vector<2x128xf32>
    %1275 = arith.mulf %1274, %12 : vector<2x128xf32>
    %1276 = arith.addf %1273, %1275 : vector<2x128xf32>
    %1277 = vector.broadcast %1216 : f32 to vector<2x128xf32>
    %1278 = arith.addf %1276, %1277 : vector<2x128xf32>
    %1279 = vector.broadcast %1219 : f32 to vector<2x128xf32>
    %1280 = arith.mulf %1279, %17 : vector<2x128xf32>
    %1281 = vector.broadcast %1222 : f32 to vector<2x128xf32>
    %1282 = arith.mulf %1281, %12 : vector<2x128xf32>
    %1283 = arith.addf %1280, %1282 : vector<2x128xf32>
    %1284 = vector.broadcast %1225 : f32 to vector<2x128xf32>
    %1285 = arith.addf %1283, %1284 : vector<2x128xf32>
    %1286 = vector.broadcast %1228 : f32 to vector<2x128xf32>
    %1287 = arith.mulf %1286, %17 : vector<2x128xf32>
    %1288 = vector.broadcast %1231 : f32 to vector<2x128xf32>
    %1289 = arith.mulf %1288, %12 : vector<2x128xf32>
    %1290 = arith.addf %1287, %1289 : vector<2x128xf32>
    %1291 = vector.broadcast %1234 : f32 to vector<2x128xf32>
    %1292 = arith.addf %1290, %1291 : vector<2x128xf32>
    %1293 = arith.select %1271, %1258, %1177 : vector<2x128xi1>, vector<2x128xf32>
    %1294 = arith.select %1271, %1278, %1178 : vector<2x128xi1>, vector<2x128xf32>
    %1295 = arith.select %1271, %1285, %1179 : vector<2x128xi1>, vector<2x128xf32>
    %1296 = arith.select %1271, %1292, %1180 : vector<2x128xi1>, vector<2x128xf32>
    %c11_i32 = arith.constant 11 : i32
    %1297 = arith.addi %20, %c11_i32 : i32
    %1298 = arith.index_cast %1297 : i32 to index
    %1299 = memref.load %arg2[%1298] : memref<4608xf32, #tpu.memory_space<smem>>
    %c128_i32_231 = arith.constant 128 : i32
    %1300 = arith.addi %1297, %c128_i32_231 : i32
    %1301 = arith.index_cast %1300 : i32 to index
    %1302 = memref.load %arg2[%1301] : memref<4608xf32, #tpu.memory_space<smem>>
    %c256_i32_232 = arith.constant 256 : i32
    %1303 = arith.addi %1297, %c256_i32_232 : i32
    %1304 = arith.index_cast %1303 : i32 to index
    %1305 = memref.load %arg2[%1304] : memref<4608xf32, #tpu.memory_space<smem>>
    %c384_i32_233 = arith.constant 384 : i32
    %1306 = arith.addi %1297, %c384_i32_233 : i32
    %1307 = arith.index_cast %1306 : i32 to index
    %1308 = memref.load %arg2[%1307] : memref<4608xf32, #tpu.memory_space<smem>>
    %c512_i32_234 = arith.constant 512 : i32
    %1309 = arith.addi %1297, %c512_i32_234 : i32
    %1310 = arith.index_cast %1309 : i32 to index
    %1311 = memref.load %arg2[%1310] : memref<4608xf32, #tpu.memory_space<smem>>
    %c640_i32_235 = arith.constant 640 : i32
    %1312 = arith.addi %1297, %c640_i32_235 : i32
    %1313 = arith.index_cast %1312 : i32 to index
    %1314 = memref.load %arg2[%1313] : memref<4608xf32, #tpu.memory_space<smem>>
    %c768_i32_236 = arith.constant 768 : i32
    %1315 = arith.addi %1297, %c768_i32_236 : i32
    %1316 = arith.index_cast %1315 : i32 to index
    %1317 = memref.load %arg2[%1316] : memref<4608xf32, #tpu.memory_space<smem>>
    %c896_i32_237 = arith.constant 896 : i32
    %1318 = arith.addi %1297, %c896_i32_237 : i32
    %1319 = arith.index_cast %1318 : i32 to index
    %1320 = memref.load %arg2[%1319] : memref<4608xf32, #tpu.memory_space<smem>>
    %c1024_i32_238 = arith.constant 1024 : i32
    %1321 = arith.addi %1297, %c1024_i32_238 : i32
    %1322 = arith.index_cast %1321 : i32 to index
    %1323 = memref.load %arg2[%1322] : memref<4608xf32, #tpu.memory_space<smem>>
    %c1152_i32_239 = arith.constant 1152 : i32
    %1324 = arith.addi %1297, %c1152_i32_239 : i32
    %1325 = arith.index_cast %1324 : i32 to index
    %1326 = memref.load %arg2[%1325] : memref<4608xf32, #tpu.memory_space<smem>>
    %c1280_i32_240 = arith.constant 1280 : i32
    %1327 = arith.addi %1297, %c1280_i32_240 : i32
    %1328 = arith.index_cast %1327 : i32 to index
    %1329 = memref.load %arg2[%1328] : memref<4608xf32, #tpu.memory_space<smem>>
    %c1408_i32_241 = arith.constant 1408 : i32
    %1330 = arith.addi %1297, %c1408_i32_241 : i32
    %1331 = arith.index_cast %1330 : i32 to index
    %1332 = memref.load %arg2[%1331] : memref<4608xf32, #tpu.memory_space<smem>>
    %c1536_i32_242 = arith.constant 1536 : i32
    %1333 = arith.addi %1297, %c1536_i32_242 : i32
    %1334 = arith.index_cast %1333 : i32 to index
    %1335 = memref.load %arg2[%1334] : memref<4608xf32, #tpu.memory_space<smem>>
    %c1664_i32_243 = arith.constant 1664 : i32
    %1336 = arith.addi %1297, %c1664_i32_243 : i32
    %1337 = arith.index_cast %1336 : i32 to index
    %1338 = memref.load %arg2[%1337] : memref<4608xf32, #tpu.memory_space<smem>>
    %c1792_i32_244 = arith.constant 1792 : i32
    %1339 = arith.addi %1297, %c1792_i32_244 : i32
    %1340 = arith.index_cast %1339 : i32 to index
    %1341 = memref.load %arg2[%1340] : memref<4608xf32, #tpu.memory_space<smem>>
    %c1920_i32_245 = arith.constant 1920 : i32
    %1342 = arith.addi %1297, %c1920_i32_245 : i32
    %1343 = arith.index_cast %1342 : i32 to index
    %1344 = memref.load %arg2[%1343] : memref<4608xf32, #tpu.memory_space<smem>>
    %c2048_i32_246 = arith.constant 2048 : i32
    %1345 = arith.addi %1297, %c2048_i32_246 : i32
    %1346 = arith.index_cast %1345 : i32 to index
    %1347 = memref.load %arg2[%1346] : memref<4608xf32, #tpu.memory_space<smem>>
    %c2176_i32_247 = arith.constant 2176 : i32
    %1348 = arith.addi %1297, %c2176_i32_247 : i32
    %1349 = arith.index_cast %1348 : i32 to index
    %1350 = memref.load %arg2[%1349] : memref<4608xf32, #tpu.memory_space<smem>>
    %1351 = vector.broadcast %1299 : f32 to vector<2x128xf32>
    %1352 = arith.mulf %1351, %17 : vector<2x128xf32>
    %1353 = vector.broadcast %1302 : f32 to vector<2x128xf32>
    %1354 = arith.mulf %1353, %12 : vector<2x128xf32>
    %1355 = arith.addf %1352, %1354 : vector<2x128xf32>
    %1356 = vector.broadcast %1305 : f32 to vector<2x128xf32>
    %1357 = arith.addf %1355, %1356 : vector<2x128xf32>
    %1358 = vector.broadcast %1308 : f32 to vector<2x128xf32>
    %1359 = arith.mulf %1358, %17 : vector<2x128xf32>
    %1360 = vector.broadcast %1311 : f32 to vector<2x128xf32>
    %1361 = arith.mulf %1360, %12 : vector<2x128xf32>
    %1362 = arith.addf %1359, %1361 : vector<2x128xf32>
    %1363 = vector.broadcast %1314 : f32 to vector<2x128xf32>
    %1364 = arith.addf %1362, %1363 : vector<2x128xf32>
    %cst_248 = arith.constant 1.000000e+00 : f32
    %1365 = vector.broadcast %cst_248 : f32 to vector<2x128xf32>
    %1366 = arith.subf %1365, %1357 : vector<2x128xf32>
    %1367 = arith.subf %1366, %1364 : vector<2x128xf32>
    %1368 = vector.broadcast %1317 : f32 to vector<2x128xf32>
    %1369 = arith.mulf %1368, %17 : vector<2x128xf32>
    %1370 = vector.broadcast %1320 : f32 to vector<2x128xf32>
    %1371 = arith.mulf %1370, %12 : vector<2x128xf32>
    %1372 = arith.addf %1369, %1371 : vector<2x128xf32>
    %1373 = vector.broadcast %1323 : f32 to vector<2x128xf32>
    %1374 = arith.addf %1372, %1373 : vector<2x128xf32>
    %cst_249 = arith.constant 0.000000e+00 : f32
    %1375 = vector.broadcast %cst_249 : f32 to vector<2x128xf32>
    %1376 = arith.cmpf oge, %1357, %1375 : vector<2x128xf32>
    %cst_250 = arith.constant 0.000000e+00 : f32
    %1377 = vector.broadcast %cst_250 : f32 to vector<2x128xf32>
    %1378 = arith.cmpf oge, %1364, %1377 : vector<2x128xf32>
    %1379 = arith.andi %1376, %1378 : vector<2x128xi1>
    %cst_251 = arith.constant 0.000000e+00 : f32
    %1380 = vector.broadcast %cst_251 : f32 to vector<2x128xf32>
    %1381 = arith.cmpf oge, %1367, %1380 : vector<2x128xf32>
    %1382 = arith.andi %1379, %1381 : vector<2x128xi1>
    %cst_252 = arith.constant 9.99999997E-7 : f32
    %1383 = vector.broadcast %cst_252 : f32 to vector<2x128xf32>
    %1384 = arith.cmpf ogt, %1374, %1383 : vector<2x128xf32>
    %1385 = arith.andi %1382, %1384 : vector<2x128xi1>
    %1386 = arith.cmpf olt, %1374, %1293 : vector<2x128xf32>
    %1387 = arith.andi %1385, %1386 : vector<2x128xi1>
    %1388 = vector.broadcast %1326 : f32 to vector<2x128xf32>
    %1389 = arith.mulf %1388, %17 : vector<2x128xf32>
    %1390 = vector.broadcast %1329 : f32 to vector<2x128xf32>
    %1391 = arith.mulf %1390, %12 : vector<2x128xf32>
    %1392 = arith.addf %1389, %1391 : vector<2x128xf32>
    %1393 = vector.broadcast %1332 : f32 to vector<2x128xf32>
    %1394 = arith.addf %1392, %1393 : vector<2x128xf32>
    %1395 = vector.broadcast %1335 : f32 to vector<2x128xf32>
    %1396 = arith.mulf %1395, %17 : vector<2x128xf32>
    %1397 = vector.broadcast %1338 : f32 to vector<2x128xf32>
    %1398 = arith.mulf %1397, %12 : vector<2x128xf32>
    %1399 = arith.addf %1396, %1398 : vector<2x128xf32>
    %1400 = vector.broadcast %1341 : f32 to vector<2x128xf32>
    %1401 = arith.addf %1399, %1400 : vector<2x128xf32>
    %1402 = vector.broadcast %1344 : f32 to vector<2x128xf32>
    %1403 = arith.mulf %1402, %17 : vector<2x128xf32>
    %1404 = vector.broadcast %1347 : f32 to vector<2x128xf32>
    %1405 = arith.mulf %1404, %12 : vector<2x128xf32>
    %1406 = arith.addf %1403, %1405 : vector<2x128xf32>
    %1407 = vector.broadcast %1350 : f32 to vector<2x128xf32>
    %1408 = arith.addf %1406, %1407 : vector<2x128xf32>
    %1409 = arith.select %1387, %1374, %1293 : vector<2x128xi1>, vector<2x128xf32>
    %1410 = arith.select %1387, %1394, %1294 : vector<2x128xi1>, vector<2x128xf32>
    %1411 = arith.select %1387, %1401, %1295 : vector<2x128xi1>, vector<2x128xf32>
    %1412 = arith.select %1387, %1408, %1296 : vector<2x128xi1>, vector<2x128xf32>
    %c12_i32 = arith.constant 12 : i32
    %1413 = arith.addi %20, %c12_i32 : i32
    %1414 = arith.index_cast %1413 : i32 to index
    %1415 = memref.load %arg2[%1414] : memref<4608xf32, #tpu.memory_space<smem>>
    %c128_i32_253 = arith.constant 128 : i32
    %1416 = arith.addi %1413, %c128_i32_253 : i32
    %1417 = arith.index_cast %1416 : i32 to index
    %1418 = memref.load %arg2[%1417] : memref<4608xf32, #tpu.memory_space<smem>>
    %c256_i32_254 = arith.constant 256 : i32
    %1419 = arith.addi %1413, %c256_i32_254 : i32
    %1420 = arith.index_cast %1419 : i32 to index
    %1421 = memref.load %arg2[%1420] : memref<4608xf32, #tpu.memory_space<smem>>
    %c384_i32_255 = arith.constant 384 : i32
    %1422 = arith.addi %1413, %c384_i32_255 : i32
    %1423 = arith.index_cast %1422 : i32 to index
    %1424 = memref.load %arg2[%1423] : memref<4608xf32, #tpu.memory_space<smem>>
    %c512_i32_256 = arith.constant 512 : i32
    %1425 = arith.addi %1413, %c512_i32_256 : i32
    %1426 = arith.index_cast %1425 : i32 to index
    %1427 = memref.load %arg2[%1426] : memref<4608xf32, #tpu.memory_space<smem>>
    %c640_i32_257 = arith.constant 640 : i32
    %1428 = arith.addi %1413, %c640_i32_257 : i32
    %1429 = arith.index_cast %1428 : i32 to index
    %1430 = memref.load %arg2[%1429] : memref<4608xf32, #tpu.memory_space<smem>>
    %c768_i32_258 = arith.constant 768 : i32
    %1431 = arith.addi %1413, %c768_i32_258 : i32
    %1432 = arith.index_cast %1431 : i32 to index
    %1433 = memref.load %arg2[%1432] : memref<4608xf32, #tpu.memory_space<smem>>
    %c896_i32_259 = arith.constant 896 : i32
    %1434 = arith.addi %1413, %c896_i32_259 : i32
    %1435 = arith.index_cast %1434 : i32 to index
    %1436 = memref.load %arg2[%1435] : memref<4608xf32, #tpu.memory_space<smem>>
    %c1024_i32_260 = arith.constant 1024 : i32
    %1437 = arith.addi %1413, %c1024_i32_260 : i32
    %1438 = arith.index_cast %1437 : i32 to index
    %1439 = memref.load %arg2[%1438] : memref<4608xf32, #tpu.memory_space<smem>>
    %c1152_i32_261 = arith.constant 1152 : i32
    %1440 = arith.addi %1413, %c1152_i32_261 : i32
    %1441 = arith.index_cast %1440 : i32 to index
    %1442 = memref.load %arg2[%1441] : memref<4608xf32, #tpu.memory_space<smem>>
    %c1280_i32_262 = arith.constant 1280 : i32
    %1443 = arith.addi %1413, %c1280_i32_262 : i32
    %1444 = arith.index_cast %1443 : i32 to index
    %1445 = memref.load %arg2[%1444] : memref<4608xf32, #tpu.memory_space<smem>>
    %c1408_i32_263 = arith.constant 1408 : i32
    %1446 = arith.addi %1413, %c1408_i32_263 : i32
    %1447 = arith.index_cast %1446 : i32 to index
    %1448 = memref.load %arg2[%1447] : memref<4608xf32, #tpu.memory_space<smem>>
    %c1536_i32_264 = arith.constant 1536 : i32
    %1449 = arith.addi %1413, %c1536_i32_264 : i32
    %1450 = arith.index_cast %1449 : i32 to index
    %1451 = memref.load %arg2[%1450] : memref<4608xf32, #tpu.memory_space<smem>>
    %c1664_i32_265 = arith.constant 1664 : i32
    %1452 = arith.addi %1413, %c1664_i32_265 : i32
    %1453 = arith.index_cast %1452 : i32 to index
    %1454 = memref.load %arg2[%1453] : memref<4608xf32, #tpu.memory_space<smem>>
    %c1792_i32_266 = arith.constant 1792 : i32
    %1455 = arith.addi %1413, %c1792_i32_266 : i32
    %1456 = arith.index_cast %1455 : i32 to index
    %1457 = memref.load %arg2[%1456] : memref<4608xf32, #tpu.memory_space<smem>>
    %c1920_i32_267 = arith.constant 1920 : i32
    %1458 = arith.addi %1413, %c1920_i32_267 : i32
    %1459 = arith.index_cast %1458 : i32 to index
    %1460 = memref.load %arg2[%1459] : memref<4608xf32, #tpu.memory_space<smem>>
    %c2048_i32_268 = arith.constant 2048 : i32
    %1461 = arith.addi %1413, %c2048_i32_268 : i32
    %1462 = arith.index_cast %1461 : i32 to index
    %1463 = memref.load %arg2[%1462] : memref<4608xf32, #tpu.memory_space<smem>>
    %c2176_i32_269 = arith.constant 2176 : i32
    %1464 = arith.addi %1413, %c2176_i32_269 : i32
    %1465 = arith.index_cast %1464 : i32 to index
    %1466 = memref.load %arg2[%1465] : memref<4608xf32, #tpu.memory_space<smem>>
    %1467 = vector.broadcast %1415 : f32 to vector<2x128xf32>
    %1468 = arith.mulf %1467, %17 : vector<2x128xf32>
    %1469 = vector.broadcast %1418 : f32 to vector<2x128xf32>
    %1470 = arith.mulf %1469, %12 : vector<2x128xf32>
    %1471 = arith.addf %1468, %1470 : vector<2x128xf32>
    %1472 = vector.broadcast %1421 : f32 to vector<2x128xf32>
    %1473 = arith.addf %1471, %1472 : vector<2x128xf32>
    %1474 = vector.broadcast %1424 : f32 to vector<2x128xf32>
    %1475 = arith.mulf %1474, %17 : vector<2x128xf32>
    %1476 = vector.broadcast %1427 : f32 to vector<2x128xf32>
    %1477 = arith.mulf %1476, %12 : vector<2x128xf32>
    %1478 = arith.addf %1475, %1477 : vector<2x128xf32>
    %1479 = vector.broadcast %1430 : f32 to vector<2x128xf32>
    %1480 = arith.addf %1478, %1479 : vector<2x128xf32>
    %cst_270 = arith.constant 1.000000e+00 : f32
    %1481 = vector.broadcast %cst_270 : f32 to vector<2x128xf32>
    %1482 = arith.subf %1481, %1473 : vector<2x128xf32>
    %1483 = arith.subf %1482, %1480 : vector<2x128xf32>
    %1484 = vector.broadcast %1433 : f32 to vector<2x128xf32>
    %1485 = arith.mulf %1484, %17 : vector<2x128xf32>
    %1486 = vector.broadcast %1436 : f32 to vector<2x128xf32>
    %1487 = arith.mulf %1486, %12 : vector<2x128xf32>
    %1488 = arith.addf %1485, %1487 : vector<2x128xf32>
    %1489 = vector.broadcast %1439 : f32 to vector<2x128xf32>
    %1490 = arith.addf %1488, %1489 : vector<2x128xf32>
    %cst_271 = arith.constant 0.000000e+00 : f32
    %1491 = vector.broadcast %cst_271 : f32 to vector<2x128xf32>
    %1492 = arith.cmpf oge, %1473, %1491 : vector<2x128xf32>
    %cst_272 = arith.constant 0.000000e+00 : f32
    %1493 = vector.broadcast %cst_272 : f32 to vector<2x128xf32>
    %1494 = arith.cmpf oge, %1480, %1493 : vector<2x128xf32>
    %1495 = arith.andi %1492, %1494 : vector<2x128xi1>
    %cst_273 = arith.constant 0.000000e+00 : f32
    %1496 = vector.broadcast %cst_273 : f32 to vector<2x128xf32>
    %1497 = arith.cmpf oge, %1483, %1496 : vector<2x128xf32>
    %1498 = arith.andi %1495, %1497 : vector<2x128xi1>
    %cst_274 = arith.constant 9.99999997E-7 : f32
    %1499 = vector.broadcast %cst_274 : f32 to vector<2x128xf32>
    %1500 = arith.cmpf ogt, %1490, %1499 : vector<2x128xf32>
    %1501 = arith.andi %1498, %1500 : vector<2x128xi1>
    %1502 = arith.cmpf olt, %1490, %1409 : vector<2x128xf32>
    %1503 = arith.andi %1501, %1502 : vector<2x128xi1>
    %1504 = vector.broadcast %1442 : f32 to vector<2x128xf32>
    %1505 = arith.mulf %1504, %17 : vector<2x128xf32>
    %1506 = vector.broadcast %1445 : f32 to vector<2x128xf32>
    %1507 = arith.mulf %1506, %12 : vector<2x128xf32>
    %1508 = arith.addf %1505, %1507 : vector<2x128xf32>
    %1509 = vector.broadcast %1448 : f32 to vector<2x128xf32>
    %1510 = arith.addf %1508, %1509 : vector<2x128xf32>
    %1511 = vector.broadcast %1451 : f32 to vector<2x128xf32>
    %1512 = arith.mulf %1511, %17 : vector<2x128xf32>
    %1513 = vector.broadcast %1454 : f32 to vector<2x128xf32>
    %1514 = arith.mulf %1513, %12 : vector<2x128xf32>
    %1515 = arith.addf %1512, %1514 : vector<2x128xf32>
    %1516 = vector.broadcast %1457 : f32 to vector<2x128xf32>
    %1517 = arith.addf %1515, %1516 : vector<2x128xf32>
    %1518 = vector.broadcast %1460 : f32 to vector<2x128xf32>
    %1519 = arith.mulf %1518, %17 : vector<2x128xf32>
    %1520 = vector.broadcast %1463 : f32 to vector<2x128xf32>
    %1521 = arith.mulf %1520, %12 : vector<2x128xf32>
    %1522 = arith.addf %1519, %1521 : vector<2x128xf32>
    %1523 = vector.broadcast %1466 : f32 to vector<2x128xf32>
    %1524 = arith.addf %1522, %1523 : vector<2x128xf32>
    %1525 = arith.select %1503, %1490, %1409 : vector<2x128xi1>, vector<2x128xf32>
    %1526 = arith.select %1503, %1510, %1410 : vector<2x128xi1>, vector<2x128xf32>
    %1527 = arith.select %1503, %1517, %1411 : vector<2x128xi1>, vector<2x128xf32>
    %1528 = arith.select %1503, %1524, %1412 : vector<2x128xi1>, vector<2x128xf32>
    %c13_i32 = arith.constant 13 : i32
    %1529 = arith.addi %20, %c13_i32 : i32
    %1530 = arith.index_cast %1529 : i32 to index
    %1531 = memref.load %arg2[%1530] : memref<4608xf32, #tpu.memory_space<smem>>
    %c128_i32_275 = arith.constant 128 : i32
    %1532 = arith.addi %1529, %c128_i32_275 : i32
    %1533 = arith.index_cast %1532 : i32 to index
    %1534 = memref.load %arg2[%1533] : memref<4608xf32, #tpu.memory_space<smem>>
    %c256_i32_276 = arith.constant 256 : i32
    %1535 = arith.addi %1529, %c256_i32_276 : i32
    %1536 = arith.index_cast %1535 : i32 to index
    %1537 = memref.load %arg2[%1536] : memref<4608xf32, #tpu.memory_space<smem>>
    %c384_i32_277 = arith.constant 384 : i32
    %1538 = arith.addi %1529, %c384_i32_277 : i32
    %1539 = arith.index_cast %1538 : i32 to index
    %1540 = memref.load %arg2[%1539] : memref<4608xf32, #tpu.memory_space<smem>>
    %c512_i32_278 = arith.constant 512 : i32
    %1541 = arith.addi %1529, %c512_i32_278 : i32
    %1542 = arith.index_cast %1541 : i32 to index
    %1543 = memref.load %arg2[%1542] : memref<4608xf32, #tpu.memory_space<smem>>
    %c640_i32_279 = arith.constant 640 : i32
    %1544 = arith.addi %1529, %c640_i32_279 : i32
    %1545 = arith.index_cast %1544 : i32 to index
    %1546 = memref.load %arg2[%1545] : memref<4608xf32, #tpu.memory_space<smem>>
    %c768_i32_280 = arith.constant 768 : i32
    %1547 = arith.addi %1529, %c768_i32_280 : i32
    %1548 = arith.index_cast %1547 : i32 to index
    %1549 = memref.load %arg2[%1548] : memref<4608xf32, #tpu.memory_space<smem>>
    %c896_i32_281 = arith.constant 896 : i32
    %1550 = arith.addi %1529, %c896_i32_281 : i32
    %1551 = arith.index_cast %1550 : i32 to index
    %1552 = memref.load %arg2[%1551] : memref<4608xf32, #tpu.memory_space<smem>>
    %c1024_i32_282 = arith.constant 1024 : i32
    %1553 = arith.addi %1529, %c1024_i32_282 : i32
    %1554 = arith.index_cast %1553 : i32 to index
    %1555 = memref.load %arg2[%1554] : memref<4608xf32, #tpu.memory_space<smem>>
    %c1152_i32_283 = arith.constant 1152 : i32
    %1556 = arith.addi %1529, %c1152_i32_283 : i32
    %1557 = arith.index_cast %1556 : i32 to index
    %1558 = memref.load %arg2[%1557] : memref<4608xf32, #tpu.memory_space<smem>>
    %c1280_i32_284 = arith.constant 1280 : i32
    %1559 = arith.addi %1529, %c1280_i32_284 : i32
    %1560 = arith.index_cast %1559 : i32 to index
    %1561 = memref.load %arg2[%1560] : memref<4608xf32, #tpu.memory_space<smem>>
    %c1408_i32_285 = arith.constant 1408 : i32
    %1562 = arith.addi %1529, %c1408_i32_285 : i32
    %1563 = arith.index_cast %1562 : i32 to index
    %1564 = memref.load %arg2[%1563] : memref<4608xf32, #tpu.memory_space<smem>>
    %c1536_i32_286 = arith.constant 1536 : i32
    %1565 = arith.addi %1529, %c1536_i32_286 : i32
    %1566 = arith.index_cast %1565 : i32 to index
    %1567 = memref.load %arg2[%1566] : memref<4608xf32, #tpu.memory_space<smem>>
    %c1664_i32_287 = arith.constant 1664 : i32
    %1568 = arith.addi %1529, %c1664_i32_287 : i32
    %1569 = arith.index_cast %1568 : i32 to index
    %1570 = memref.load %arg2[%1569] : memref<4608xf32, #tpu.memory_space<smem>>
    %c1792_i32_288 = arith.constant 1792 : i32
    %1571 = arith.addi %1529, %c1792_i32_288 : i32
    %1572 = arith.index_cast %1571 : i32 to index
    %1573 = memref.load %arg2[%1572] : memref<4608xf32, #tpu.memory_space<smem>>
    %c1920_i32_289 = arith.constant 1920 : i32
    %1574 = arith.addi %1529, %c1920_i32_289 : i32
    %1575 = arith.index_cast %1574 : i32 to index
    %1576 = memref.load %arg2[%1575] : memref<4608xf32, #tpu.memory_space<smem>>
    %c2048_i32_290 = arith.constant 2048 : i32
    %1577 = arith.addi %1529, %c2048_i32_290 : i32
    %1578 = arith.index_cast %1577 : i32 to index
    %1579 = memref.load %arg2[%1578] : memref<4608xf32, #tpu.memory_space<smem>>
    %c2176_i32_291 = arith.constant 2176 : i32
    %1580 = arith.addi %1529, %c2176_i32_291 : i32
    %1581 = arith.index_cast %1580 : i32 to index
    %1582 = memref.load %arg2[%1581] : memref<4608xf32, #tpu.memory_space<smem>>
    %1583 = vector.broadcast %1531 : f32 to vector<2x128xf32>
    %1584 = arith.mulf %1583, %17 : vector<2x128xf32>
    %1585 = vector.broadcast %1534 : f32 to vector<2x128xf32>
    %1586 = arith.mulf %1585, %12 : vector<2x128xf32>
    %1587 = arith.addf %1584, %1586 : vector<2x128xf32>
    %1588 = vector.broadcast %1537 : f32 to vector<2x128xf32>
    %1589 = arith.addf %1587, %1588 : vector<2x128xf32>
    %1590 = vector.broadcast %1540 : f32 to vector<2x128xf32>
    %1591 = arith.mulf %1590, %17 : vector<2x128xf32>
    %1592 = vector.broadcast %1543 : f32 to vector<2x128xf32>
    %1593 = arith.mulf %1592, %12 : vector<2x128xf32>
    %1594 = arith.addf %1591, %1593 : vector<2x128xf32>
    %1595 = vector.broadcast %1546 : f32 to vector<2x128xf32>
    %1596 = arith.addf %1594, %1595 : vector<2x128xf32>
    %cst_292 = arith.constant 1.000000e+00 : f32
    %1597 = vector.broadcast %cst_292 : f32 to vector<2x128xf32>
    %1598 = arith.subf %1597, %1589 : vector<2x128xf32>
    %1599 = arith.subf %1598, %1596 : vector<2x128xf32>
    %1600 = vector.broadcast %1549 : f32 to vector<2x128xf32>
    %1601 = arith.mulf %1600, %17 : vector<2x128xf32>
    %1602 = vector.broadcast %1552 : f32 to vector<2x128xf32>
    %1603 = arith.mulf %1602, %12 : vector<2x128xf32>
    %1604 = arith.addf %1601, %1603 : vector<2x128xf32>
    %1605 = vector.broadcast %1555 : f32 to vector<2x128xf32>
    %1606 = arith.addf %1604, %1605 : vector<2x128xf32>
    %cst_293 = arith.constant 0.000000e+00 : f32
    %1607 = vector.broadcast %cst_293 : f32 to vector<2x128xf32>
    %1608 = arith.cmpf oge, %1589, %1607 : vector<2x128xf32>
    %cst_294 = arith.constant 0.000000e+00 : f32
    %1609 = vector.broadcast %cst_294 : f32 to vector<2x128xf32>
    %1610 = arith.cmpf oge, %1596, %1609 : vector<2x128xf32>
    %1611 = arith.andi %1608, %1610 : vector<2x128xi1>
    %cst_295 = arith.constant 0.000000e+00 : f32
    %1612 = vector.broadcast %cst_295 : f32 to vector<2x128xf32>
    %1613 = arith.cmpf oge, %1599, %1612 : vector<2x128xf32>
    %1614 = arith.andi %1611, %1613 : vector<2x128xi1>
    %cst_296 = arith.constant 9.99999997E-7 : f32
    %1615 = vector.broadcast %cst_296 : f32 to vector<2x128xf32>
    %1616 = arith.cmpf ogt, %1606, %1615 : vector<2x128xf32>
    %1617 = arith.andi %1614, %1616 : vector<2x128xi1>
    %1618 = arith.cmpf olt, %1606, %1525 : vector<2x128xf32>
    %1619 = arith.andi %1617, %1618 : vector<2x128xi1>
    %1620 = vector.broadcast %1558 : f32 to vector<2x128xf32>
    %1621 = arith.mulf %1620, %17 : vector<2x128xf32>
    %1622 = vector.broadcast %1561 : f32 to vector<2x128xf32>
    %1623 = arith.mulf %1622, %12 : vector<2x128xf32>
    %1624 = arith.addf %1621, %1623 : vector<2x128xf32>
    %1625 = vector.broadcast %1564 : f32 to vector<2x128xf32>
    %1626 = arith.addf %1624, %1625 : vector<2x128xf32>
    %1627 = vector.broadcast %1567 : f32 to vector<2x128xf32>
    %1628 = arith.mulf %1627, %17 : vector<2x128xf32>
    %1629 = vector.broadcast %1570 : f32 to vector<2x128xf32>
    %1630 = arith.mulf %1629, %12 : vector<2x128xf32>
    %1631 = arith.addf %1628, %1630 : vector<2x128xf32>
    %1632 = vector.broadcast %1573 : f32 to vector<2x128xf32>
    %1633 = arith.addf %1631, %1632 : vector<2x128xf32>
    %1634 = vector.broadcast %1576 : f32 to vector<2x128xf32>
    %1635 = arith.mulf %1634, %17 : vector<2x128xf32>
    %1636 = vector.broadcast %1579 : f32 to vector<2x128xf32>
    %1637 = arith.mulf %1636, %12 : vector<2x128xf32>
    %1638 = arith.addf %1635, %1637 : vector<2x128xf32>
    %1639 = vector.broadcast %1582 : f32 to vector<2x128xf32>
    %1640 = arith.addf %1638, %1639 : vector<2x128xf32>
    %1641 = arith.select %1619, %1606, %1525 : vector<2x128xi1>, vector<2x128xf32>
    %1642 = arith.select %1619, %1626, %1526 : vector<2x128xi1>, vector<2x128xf32>
    %1643 = arith.select %1619, %1633, %1527 : vector<2x128xi1>, vector<2x128xf32>
    %1644 = arith.select %1619, %1640, %1528 : vector<2x128xi1>, vector<2x128xf32>
    %c14_i32 = arith.constant 14 : i32
    %1645 = arith.addi %20, %c14_i32 : i32
    %1646 = arith.index_cast %1645 : i32 to index
    %1647 = memref.load %arg2[%1646] : memref<4608xf32, #tpu.memory_space<smem>>
    %c128_i32_297 = arith.constant 128 : i32
    %1648 = arith.addi %1645, %c128_i32_297 : i32
    %1649 = arith.index_cast %1648 : i32 to index
    %1650 = memref.load %arg2[%1649] : memref<4608xf32, #tpu.memory_space<smem>>
    %c256_i32_298 = arith.constant 256 : i32
    %1651 = arith.addi %1645, %c256_i32_298 : i32
    %1652 = arith.index_cast %1651 : i32 to index
    %1653 = memref.load %arg2[%1652] : memref<4608xf32, #tpu.memory_space<smem>>
    %c384_i32_299 = arith.constant 384 : i32
    %1654 = arith.addi %1645, %c384_i32_299 : i32
    %1655 = arith.index_cast %1654 : i32 to index
    %1656 = memref.load %arg2[%1655] : memref<4608xf32, #tpu.memory_space<smem>>
    %c512_i32_300 = arith.constant 512 : i32
    %1657 = arith.addi %1645, %c512_i32_300 : i32
    %1658 = arith.index_cast %1657 : i32 to index
    %1659 = memref.load %arg2[%1658] : memref<4608xf32, #tpu.memory_space<smem>>
    %c640_i32_301 = arith.constant 640 : i32
    %1660 = arith.addi %1645, %c640_i32_301 : i32
    %1661 = arith.index_cast %1660 : i32 to index
    %1662 = memref.load %arg2[%1661] : memref<4608xf32, #tpu.memory_space<smem>>
    %c768_i32_302 = arith.constant 768 : i32
    %1663 = arith.addi %1645, %c768_i32_302 : i32
    %1664 = arith.index_cast %1663 : i32 to index
    %1665 = memref.load %arg2[%1664] : memref<4608xf32, #tpu.memory_space<smem>>
    %c896_i32_303 = arith.constant 896 : i32
    %1666 = arith.addi %1645, %c896_i32_303 : i32
    %1667 = arith.index_cast %1666 : i32 to index
    %1668 = memref.load %arg2[%1667] : memref<4608xf32, #tpu.memory_space<smem>>
    %c1024_i32_304 = arith.constant 1024 : i32
    %1669 = arith.addi %1645, %c1024_i32_304 : i32
    %1670 = arith.index_cast %1669 : i32 to index
    %1671 = memref.load %arg2[%1670] : memref<4608xf32, #tpu.memory_space<smem>>
    %c1152_i32_305 = arith.constant 1152 : i32
    %1672 = arith.addi %1645, %c1152_i32_305 : i32
    %1673 = arith.index_cast %1672 : i32 to index
    %1674 = memref.load %arg2[%1673] : memref<4608xf32, #tpu.memory_space<smem>>
    %c1280_i32_306 = arith.constant 1280 : i32
    %1675 = arith.addi %1645, %c1280_i32_306 : i32
    %1676 = arith.index_cast %1675 : i32 to index
    %1677 = memref.load %arg2[%1676] : memref<4608xf32, #tpu.memory_space<smem>>
    %c1408_i32_307 = arith.constant 1408 : i32
    %1678 = arith.addi %1645, %c1408_i32_307 : i32
    %1679 = arith.index_cast %1678 : i32 to index
    %1680 = memref.load %arg2[%1679] : memref<4608xf32, #tpu.memory_space<smem>>
    %c1536_i32_308 = arith.constant 1536 : i32
    %1681 = arith.addi %1645, %c1536_i32_308 : i32
    %1682 = arith.index_cast %1681 : i32 to index
    %1683 = memref.load %arg2[%1682] : memref<4608xf32, #tpu.memory_space<smem>>
    %c1664_i32_309 = arith.constant 1664 : i32
    %1684 = arith.addi %1645, %c1664_i32_309 : i32
    %1685 = arith.index_cast %1684 : i32 to index
    %1686 = memref.load %arg2[%1685] : memref<4608xf32, #tpu.memory_space<smem>>
    %c1792_i32_310 = arith.constant 1792 : i32
    %1687 = arith.addi %1645, %c1792_i32_310 : i32
    %1688 = arith.index_cast %1687 : i32 to index
    %1689 = memref.load %arg2[%1688] : memref<4608xf32, #tpu.memory_space<smem>>
    %c1920_i32_311 = arith.constant 1920 : i32
    %1690 = arith.addi %1645, %c1920_i32_311 : i32
    %1691 = arith.index_cast %1690 : i32 to index
    %1692 = memref.load %arg2[%1691] : memref<4608xf32, #tpu.memory_space<smem>>
    %c2048_i32_312 = arith.constant 2048 : i32
    %1693 = arith.addi %1645, %c2048_i32_312 : i32
    %1694 = arith.index_cast %1693 : i32 to index
    %1695 = memref.load %arg2[%1694] : memref<4608xf32, #tpu.memory_space<smem>>
    %c2176_i32_313 = arith.constant 2176 : i32
    %1696 = arith.addi %1645, %c2176_i32_313 : i32
    %1697 = arith.index_cast %1696 : i32 to index
    %1698 = memref.load %arg2[%1697] : memref<4608xf32, #tpu.memory_space<smem>>
    %1699 = vector.broadcast %1647 : f32 to vector<2x128xf32>
    %1700 = arith.mulf %1699, %17 : vector<2x128xf32>
    %1701 = vector.broadcast %1650 : f32 to vector<2x128xf32>
    %1702 = arith.mulf %1701, %12 : vector<2x128xf32>
    %1703 = arith.addf %1700, %1702 : vector<2x128xf32>
    %1704 = vector.broadcast %1653 : f32 to vector<2x128xf32>
    %1705 = arith.addf %1703, %1704 : vector<2x128xf32>
    %1706 = vector.broadcast %1656 : f32 to vector<2x128xf32>
    %1707 = arith.mulf %1706, %17 : vector<2x128xf32>
    %1708 = vector.broadcast %1659 : f32 to vector<2x128xf32>
    %1709 = arith.mulf %1708, %12 : vector<2x128xf32>
    %1710 = arith.addf %1707, %1709 : vector<2x128xf32>
    %1711 = vector.broadcast %1662 : f32 to vector<2x128xf32>
    %1712 = arith.addf %1710, %1711 : vector<2x128xf32>
    %cst_314 = arith.constant 1.000000e+00 : f32
    %1713 = vector.broadcast %cst_314 : f32 to vector<2x128xf32>
    %1714 = arith.subf %1713, %1705 : vector<2x128xf32>
    %1715 = arith.subf %1714, %1712 : vector<2x128xf32>
    %1716 = vector.broadcast %1665 : f32 to vector<2x128xf32>
    %1717 = arith.mulf %1716, %17 : vector<2x128xf32>
    %1718 = vector.broadcast %1668 : f32 to vector<2x128xf32>
    %1719 = arith.mulf %1718, %12 : vector<2x128xf32>
    %1720 = arith.addf %1717, %1719 : vector<2x128xf32>
    %1721 = vector.broadcast %1671 : f32 to vector<2x128xf32>
    %1722 = arith.addf %1720, %1721 : vector<2x128xf32>
    %cst_315 = arith.constant 0.000000e+00 : f32
    %1723 = vector.broadcast %cst_315 : f32 to vector<2x128xf32>
    %1724 = arith.cmpf oge, %1705, %1723 : vector<2x128xf32>
    %cst_316 = arith.constant 0.000000e+00 : f32
    %1725 = vector.broadcast %cst_316 : f32 to vector<2x128xf32>
    %1726 = arith.cmpf oge, %1712, %1725 : vector<2x128xf32>
    %1727 = arith.andi %1724, %1726 : vector<2x128xi1>
    %cst_317 = arith.constant 0.000000e+00 : f32
    %1728 = vector.broadcast %cst_317 : f32 to vector<2x128xf32>
    %1729 = arith.cmpf oge, %1715, %1728 : vector<2x128xf32>
    %1730 = arith.andi %1727, %1729 : vector<2x128xi1>
    %cst_318 = arith.constant 9.99999997E-7 : f32
    %1731 = vector.broadcast %cst_318 : f32 to vector<2x128xf32>
    %1732 = arith.cmpf ogt, %1722, %1731 : vector<2x128xf32>
    %1733 = arith.andi %1730, %1732 : vector<2x128xi1>
    %1734 = arith.cmpf olt, %1722, %1641 : vector<2x128xf32>
    %1735 = arith.andi %1733, %1734 : vector<2x128xi1>
    %1736 = vector.broadcast %1674 : f32 to vector<2x128xf32>
    %1737 = arith.mulf %1736, %17 : vector<2x128xf32>
    %1738 = vector.broadcast %1677 : f32 to vector<2x128xf32>
    %1739 = arith.mulf %1738, %12 : vector<2x128xf32>
    %1740 = arith.addf %1737, %1739 : vector<2x128xf32>
    %1741 = vector.broadcast %1680 : f32 to vector<2x128xf32>
    %1742 = arith.addf %1740, %1741 : vector<2x128xf32>
    %1743 = vector.broadcast %1683 : f32 to vector<2x128xf32>
    %1744 = arith.mulf %1743, %17 : vector<2x128xf32>
    %1745 = vector.broadcast %1686 : f32 to vector<2x128xf32>
    %1746 = arith.mulf %1745, %12 : vector<2x128xf32>
    %1747 = arith.addf %1744, %1746 : vector<2x128xf32>
    %1748 = vector.broadcast %1689 : f32 to vector<2x128xf32>
    %1749 = arith.addf %1747, %1748 : vector<2x128xf32>
    %1750 = vector.broadcast %1692 : f32 to vector<2x128xf32>
    %1751 = arith.mulf %1750, %17 : vector<2x128xf32>
    %1752 = vector.broadcast %1695 : f32 to vector<2x128xf32>
    %1753 = arith.mulf %1752, %12 : vector<2x128xf32>
    %1754 = arith.addf %1751, %1753 : vector<2x128xf32>
    %1755 = vector.broadcast %1698 : f32 to vector<2x128xf32>
    %1756 = arith.addf %1754, %1755 : vector<2x128xf32>
    %1757 = arith.select %1735, %1722, %1641 : vector<2x128xi1>, vector<2x128xf32>
    %1758 = arith.select %1735, %1742, %1642 : vector<2x128xi1>, vector<2x128xf32>
    %1759 = arith.select %1735, %1749, %1643 : vector<2x128xi1>, vector<2x128xf32>
    %1760 = arith.select %1735, %1756, %1644 : vector<2x128xi1>, vector<2x128xf32>
    %c15_i32_319 = arith.constant 15 : i32
    %1761 = arith.addi %20, %c15_i32_319 : i32
    %1762 = arith.index_cast %1761 : i32 to index
    %1763 = memref.load %arg2[%1762] : memref<4608xf32, #tpu.memory_space<smem>>
    %c128_i32_320 = arith.constant 128 : i32
    %1764 = arith.addi %1761, %c128_i32_320 : i32
    %1765 = arith.index_cast %1764 : i32 to index
    %1766 = memref.load %arg2[%1765] : memref<4608xf32, #tpu.memory_space<smem>>
    %c256_i32_321 = arith.constant 256 : i32
    %1767 = arith.addi %1761, %c256_i32_321 : i32
    %1768 = arith.index_cast %1767 : i32 to index
    %1769 = memref.load %arg2[%1768] : memref<4608xf32, #tpu.memory_space<smem>>
    %c384_i32_322 = arith.constant 384 : i32
    %1770 = arith.addi %1761, %c384_i32_322 : i32
    %1771 = arith.index_cast %1770 : i32 to index
    %1772 = memref.load %arg2[%1771] : memref<4608xf32, #tpu.memory_space<smem>>
    %c512_i32_323 = arith.constant 512 : i32
    %1773 = arith.addi %1761, %c512_i32_323 : i32
    %1774 = arith.index_cast %1773 : i32 to index
    %1775 = memref.load %arg2[%1774] : memref<4608xf32, #tpu.memory_space<smem>>
    %c640_i32_324 = arith.constant 640 : i32
    %1776 = arith.addi %1761, %c640_i32_324 : i32
    %1777 = arith.index_cast %1776 : i32 to index
    %1778 = memref.load %arg2[%1777] : memref<4608xf32, #tpu.memory_space<smem>>
    %c768_i32_325 = arith.constant 768 : i32
    %1779 = arith.addi %1761, %c768_i32_325 : i32
    %1780 = arith.index_cast %1779 : i32 to index
    %1781 = memref.load %arg2[%1780] : memref<4608xf32, #tpu.memory_space<smem>>
    %c896_i32_326 = arith.constant 896 : i32
    %1782 = arith.addi %1761, %c896_i32_326 : i32
    %1783 = arith.index_cast %1782 : i32 to index
    %1784 = memref.load %arg2[%1783] : memref<4608xf32, #tpu.memory_space<smem>>
    %c1024_i32_327 = arith.constant 1024 : i32
    %1785 = arith.addi %1761, %c1024_i32_327 : i32
    %1786 = arith.index_cast %1785 : i32 to index
    %1787 = memref.load %arg2[%1786] : memref<4608xf32, #tpu.memory_space<smem>>
    %c1152_i32_328 = arith.constant 1152 : i32
    %1788 = arith.addi %1761, %c1152_i32_328 : i32
    %1789 = arith.index_cast %1788 : i32 to index
    %1790 = memref.load %arg2[%1789] : memref<4608xf32, #tpu.memory_space<smem>>
    %c1280_i32_329 = arith.constant 1280 : i32
    %1791 = arith.addi %1761, %c1280_i32_329 : i32
    %1792 = arith.index_cast %1791 : i32 to index
    %1793 = memref.load %arg2[%1792] : memref<4608xf32, #tpu.memory_space<smem>>
    %c1408_i32_330 = arith.constant 1408 : i32
    %1794 = arith.addi %1761, %c1408_i32_330 : i32
    %1795 = arith.index_cast %1794 : i32 to index
    %1796 = memref.load %arg2[%1795] : memref<4608xf32, #tpu.memory_space<smem>>
    %c1536_i32_331 = arith.constant 1536 : i32
    %1797 = arith.addi %1761, %c1536_i32_331 : i32
    %1798 = arith.index_cast %1797 : i32 to index
    %1799 = memref.load %arg2[%1798] : memref<4608xf32, #tpu.memory_space<smem>>
    %c1664_i32_332 = arith.constant 1664 : i32
    %1800 = arith.addi %1761, %c1664_i32_332 : i32
    %1801 = arith.index_cast %1800 : i32 to index
    %1802 = memref.load %arg2[%1801] : memref<4608xf32, #tpu.memory_space<smem>>
    %c1792_i32_333 = arith.constant 1792 : i32
    %1803 = arith.addi %1761, %c1792_i32_333 : i32
    %1804 = arith.index_cast %1803 : i32 to index
    %1805 = memref.load %arg2[%1804] : memref<4608xf32, #tpu.memory_space<smem>>
    %c1920_i32_334 = arith.constant 1920 : i32
    %1806 = arith.addi %1761, %c1920_i32_334 : i32
    %1807 = arith.index_cast %1806 : i32 to index
    %1808 = memref.load %arg2[%1807] : memref<4608xf32, #tpu.memory_space<smem>>
    %c2048_i32_335 = arith.constant 2048 : i32
    %1809 = arith.addi %1761, %c2048_i32_335 : i32
    %1810 = arith.index_cast %1809 : i32 to index
    %1811 = memref.load %arg2[%1810] : memref<4608xf32, #tpu.memory_space<smem>>
    %c2176_i32_336 = arith.constant 2176 : i32
    %1812 = arith.addi %1761, %c2176_i32_336 : i32
    %1813 = arith.index_cast %1812 : i32 to index
    %1814 = memref.load %arg2[%1813] : memref<4608xf32, #tpu.memory_space<smem>>
    %1815 = vector.broadcast %1763 : f32 to vector<2x128xf32>
    %1816 = arith.mulf %1815, %17 : vector<2x128xf32>
    %1817 = vector.broadcast %1766 : f32 to vector<2x128xf32>
    %1818 = arith.mulf %1817, %12 : vector<2x128xf32>
    %1819 = arith.addf %1816, %1818 : vector<2x128xf32>
    %1820 = vector.broadcast %1769 : f32 to vector<2x128xf32>
    %1821 = arith.addf %1819, %1820 : vector<2x128xf32>
    %1822 = vector.broadcast %1772 : f32 to vector<2x128xf32>
    %1823 = arith.mulf %1822, %17 : vector<2x128xf32>
    %1824 = vector.broadcast %1775 : f32 to vector<2x128xf32>
    %1825 = arith.mulf %1824, %12 : vector<2x128xf32>
    %1826 = arith.addf %1823, %1825 : vector<2x128xf32>
    %1827 = vector.broadcast %1778 : f32 to vector<2x128xf32>
    %1828 = arith.addf %1826, %1827 : vector<2x128xf32>
    %cst_337 = arith.constant 1.000000e+00 : f32
    %1829 = vector.broadcast %cst_337 : f32 to vector<2x128xf32>
    %1830 = arith.subf %1829, %1821 : vector<2x128xf32>
    %1831 = arith.subf %1830, %1828 : vector<2x128xf32>
    %1832 = vector.broadcast %1781 : f32 to vector<2x128xf32>
    %1833 = arith.mulf %1832, %17 : vector<2x128xf32>
    %1834 = vector.broadcast %1784 : f32 to vector<2x128xf32>
    %1835 = arith.mulf %1834, %12 : vector<2x128xf32>
    %1836 = arith.addf %1833, %1835 : vector<2x128xf32>
    %1837 = vector.broadcast %1787 : f32 to vector<2x128xf32>
    %1838 = arith.addf %1836, %1837 : vector<2x128xf32>
    %cst_338 = arith.constant 0.000000e+00 : f32
    %1839 = vector.broadcast %cst_338 : f32 to vector<2x128xf32>
    %1840 = arith.cmpf oge, %1821, %1839 : vector<2x128xf32>
    %cst_339 = arith.constant 0.000000e+00 : f32
    %1841 = vector.broadcast %cst_339 : f32 to vector<2x128xf32>
    %1842 = arith.cmpf oge, %1828, %1841 : vector<2x128xf32>
    %1843 = arith.andi %1840, %1842 : vector<2x128xi1>
    %cst_340 = arith.constant 0.000000e+00 : f32
    %1844 = vector.broadcast %cst_340 : f32 to vector<2x128xf32>
    %1845 = arith.cmpf oge, %1831, %1844 : vector<2x128xf32>
    %1846 = arith.andi %1843, %1845 : vector<2x128xi1>
    %cst_341 = arith.constant 9.99999997E-7 : f32
    %1847 = vector.broadcast %cst_341 : f32 to vector<2x128xf32>
    %1848 = arith.cmpf ogt, %1838, %1847 : vector<2x128xf32>
    %1849 = arith.andi %1846, %1848 : vector<2x128xi1>
    %1850 = arith.cmpf olt, %1838, %1757 : vector<2x128xf32>
    %1851 = arith.andi %1849, %1850 : vector<2x128xi1>
    %1852 = vector.broadcast %1790 : f32 to vector<2x128xf32>
    %1853 = arith.mulf %1852, %17 : vector<2x128xf32>
    %1854 = vector.broadcast %1793 : f32 to vector<2x128xf32>
    %1855 = arith.mulf %1854, %12 : vector<2x128xf32>
    %1856 = arith.addf %1853, %1855 : vector<2x128xf32>
    %1857 = vector.broadcast %1796 : f32 to vector<2x128xf32>
    %1858 = arith.addf %1856, %1857 : vector<2x128xf32>
    %1859 = vector.broadcast %1799 : f32 to vector<2x128xf32>
    %1860 = arith.mulf %1859, %17 : vector<2x128xf32>
    %1861 = vector.broadcast %1802 : f32 to vector<2x128xf32>
    %1862 = arith.mulf %1861, %12 : vector<2x128xf32>
    %1863 = arith.addf %1860, %1862 : vector<2x128xf32>
    %1864 = vector.broadcast %1805 : f32 to vector<2x128xf32>
    %1865 = arith.addf %1863, %1864 : vector<2x128xf32>
    %1866 = vector.broadcast %1808 : f32 to vector<2x128xf32>
    %1867 = arith.mulf %1866, %17 : vector<2x128xf32>
    %1868 = vector.broadcast %1811 : f32 to vector<2x128xf32>
    %1869 = arith.mulf %1868, %12 : vector<2x128xf32>
    %1870 = arith.addf %1867, %1869 : vector<2x128xf32>
    %1871 = vector.broadcast %1814 : f32 to vector<2x128xf32>
    %1872 = arith.addf %1870, %1871 : vector<2x128xf32>
    %1873 = arith.select %1851, %1838, %1757 : vector<2x128xi1>, vector<2x128xf32>
    %1874 = arith.select %1851, %1858, %1758 : vector<2x128xi1>, vector<2x128xf32>
    %1875 = arith.select %1851, %1865, %1759 : vector<2x128xi1>, vector<2x128xf32>
    %1876 = arith.select %1851, %1872, %1760 : vector<2x128xi1>, vector<2x128xf32>
    %c16_i32 = arith.constant 16 : i32
    %1877 = arith.addi %20, %c16_i32 : i32
    %1878 = arith.index_cast %1877 : i32 to index
    %1879 = memref.load %arg2[%1878] : memref<4608xf32, #tpu.memory_space<smem>>
    %c128_i32_342 = arith.constant 128 : i32
    %1880 = arith.addi %1877, %c128_i32_342 : i32
    %1881 = arith.index_cast %1880 : i32 to index
    %1882 = memref.load %arg2[%1881] : memref<4608xf32, #tpu.memory_space<smem>>
    %c256_i32_343 = arith.constant 256 : i32
    %1883 = arith.addi %1877, %c256_i32_343 : i32
    %1884 = arith.index_cast %1883 : i32 to index
    %1885 = memref.load %arg2[%1884] : memref<4608xf32, #tpu.memory_space<smem>>
    %c384_i32_344 = arith.constant 384 : i32
    %1886 = arith.addi %1877, %c384_i32_344 : i32
    %1887 = arith.index_cast %1886 : i32 to index
    %1888 = memref.load %arg2[%1887] : memref<4608xf32, #tpu.memory_space<smem>>
    %c512_i32_345 = arith.constant 512 : i32
    %1889 = arith.addi %1877, %c512_i32_345 : i32
    %1890 = arith.index_cast %1889 : i32 to index
    %1891 = memref.load %arg2[%1890] : memref<4608xf32, #tpu.memory_space<smem>>
    %c640_i32_346 = arith.constant 640 : i32
    %1892 = arith.addi %1877, %c640_i32_346 : i32
    %1893 = arith.index_cast %1892 : i32 to index
    %1894 = memref.load %arg2[%1893] : memref<4608xf32, #tpu.memory_space<smem>>
    %c768_i32_347 = arith.constant 768 : i32
    %1895 = arith.addi %1877, %c768_i32_347 : i32
    %1896 = arith.index_cast %1895 : i32 to index
    %1897 = memref.load %arg2[%1896] : memref<4608xf32, #tpu.memory_space<smem>>
    %c896_i32_348 = arith.constant 896 : i32
    %1898 = arith.addi %1877, %c896_i32_348 : i32
    %1899 = arith.index_cast %1898 : i32 to index
    %1900 = memref.load %arg2[%1899] : memref<4608xf32, #tpu.memory_space<smem>>
    %c1024_i32_349 = arith.constant 1024 : i32
    %1901 = arith.addi %1877, %c1024_i32_349 : i32
    %1902 = arith.index_cast %1901 : i32 to index
    %1903 = memref.load %arg2[%1902] : memref<4608xf32, #tpu.memory_space<smem>>
    %c1152_i32_350 = arith.constant 1152 : i32
    %1904 = arith.addi %1877, %c1152_i32_350 : i32
    %1905 = arith.index_cast %1904 : i32 to index
    %1906 = memref.load %arg2[%1905] : memref<4608xf32, #tpu.memory_space<smem>>
    %c1280_i32_351 = arith.constant 1280 : i32
    %1907 = arith.addi %1877, %c1280_i32_351 : i32
    %1908 = arith.index_cast %1907 : i32 to index
    %1909 = memref.load %arg2[%1908] : memref<4608xf32, #tpu.memory_space<smem>>
    %c1408_i32_352 = arith.constant 1408 : i32
    %1910 = arith.addi %1877, %c1408_i32_352 : i32
    %1911 = arith.index_cast %1910 : i32 to index
    %1912 = memref.load %arg2[%1911] : memref<4608xf32, #tpu.memory_space<smem>>
    %c1536_i32_353 = arith.constant 1536 : i32
    %1913 = arith.addi %1877, %c1536_i32_353 : i32
    %1914 = arith.index_cast %1913 : i32 to index
    %1915 = memref.load %arg2[%1914] : memref<4608xf32, #tpu.memory_space<smem>>
    %c1664_i32_354 = arith.constant 1664 : i32
    %1916 = arith.addi %1877, %c1664_i32_354 : i32
    %1917 = arith.index_cast %1916 : i32 to index
    %1918 = memref.load %arg2[%1917] : memref<4608xf32, #tpu.memory_space<smem>>
    %c1792_i32_355 = arith.constant 1792 : i32
    %1919 = arith.addi %1877, %c1792_i32_355 : i32
    %1920 = arith.index_cast %1919 : i32 to index
    %1921 = memref.load %arg2[%1920] : memref<4608xf32, #tpu.memory_space<smem>>
    %c1920_i32_356 = arith.constant 1920 : i32
    %1922 = arith.addi %1877, %c1920_i32_356 : i32
    %1923 = arith.index_cast %1922 : i32 to index
    %1924 = memref.load %arg2[%1923] : memref<4608xf32, #tpu.memory_space<smem>>
    %c2048_i32_357 = arith.constant 2048 : i32
    %1925 = arith.addi %1877, %c2048_i32_357 : i32
    %1926 = arith.index_cast %1925 : i32 to index
    %1927 = memref.load %arg2[%1926] : memref<4608xf32, #tpu.memory_space<smem>>
    %c2176_i32_358 = arith.constant 2176 : i32
    %1928 = arith.addi %1877, %c2176_i32_358 : i32
    %1929 = arith.index_cast %1928 : i32 to index
    %1930 = memref.load %arg2[%1929] : memref<4608xf32, #tpu.memory_space<smem>>
    %1931 = vector.broadcast %1879 : f32 to vector<2x128xf32>
    %1932 = arith.mulf %1931, %17 : vector<2x128xf32>
    %1933 = vector.broadcast %1882 : f32 to vector<2x128xf32>
    %1934 = arith.mulf %1933, %12 : vector<2x128xf32>
    %1935 = arith.addf %1932, %1934 : vector<2x128xf32>
    %1936 = vector.broadcast %1885 : f32 to vector<2x128xf32>
    %1937 = arith.addf %1935, %1936 : vector<2x128xf32>
    %1938 = vector.broadcast %1888 : f32 to vector<2x128xf32>
    %1939 = arith.mulf %1938, %17 : vector<2x128xf32>
    %1940 = vector.broadcast %1891 : f32 to vector<2x128xf32>
    %1941 = arith.mulf %1940, %12 : vector<2x128xf32>
    %1942 = arith.addf %1939, %1941 : vector<2x128xf32>
    %1943 = vector.broadcast %1894 : f32 to vector<2x128xf32>
    %1944 = arith.addf %1942, %1943 : vector<2x128xf32>
    %cst_359 = arith.constant 1.000000e+00 : f32
    %1945 = vector.broadcast %cst_359 : f32 to vector<2x128xf32>
    %1946 = arith.subf %1945, %1937 : vector<2x128xf32>
    %1947 = arith.subf %1946, %1944 : vector<2x128xf32>
    %1948 = vector.broadcast %1897 : f32 to vector<2x128xf32>
    %1949 = arith.mulf %1948, %17 : vector<2x128xf32>
    %1950 = vector.broadcast %1900 : f32 to vector<2x128xf32>
    %1951 = arith.mulf %1950, %12 : vector<2x128xf32>
    %1952 = arith.addf %1949, %1951 : vector<2x128xf32>
    %1953 = vector.broadcast %1903 : f32 to vector<2x128xf32>
    %1954 = arith.addf %1952, %1953 : vector<2x128xf32>
    %cst_360 = arith.constant 0.000000e+00 : f32
    %1955 = vector.broadcast %cst_360 : f32 to vector<2x128xf32>
    %1956 = arith.cmpf oge, %1937, %1955 : vector<2x128xf32>
    %cst_361 = arith.constant 0.000000e+00 : f32
    %1957 = vector.broadcast %cst_361 : f32 to vector<2x128xf32>
    %1958 = arith.cmpf oge, %1944, %1957 : vector<2x128xf32>
    %1959 = arith.andi %1956, %1958 : vector<2x128xi1>
    %cst_362 = arith.constant 0.000000e+00 : f32
    %1960 = vector.broadcast %cst_362 : f32 to vector<2x128xf32>
    %1961 = arith.cmpf oge, %1947, %1960 : vector<2x128xf32>
    %1962 = arith.andi %1959, %1961 : vector<2x128xi1>
    %cst_363 = arith.constant 9.99999997E-7 : f32
    %1963 = vector.broadcast %cst_363 : f32 to vector<2x128xf32>
    %1964 = arith.cmpf ogt, %1954, %1963 : vector<2x128xf32>
    %1965 = arith.andi %1962, %1964 : vector<2x128xi1>
    %1966 = arith.cmpf olt, %1954, %1873 : vector<2x128xf32>
    %1967 = arith.andi %1965, %1966 : vector<2x128xi1>
    %1968 = vector.broadcast %1906 : f32 to vector<2x128xf32>
    %1969 = arith.mulf %1968, %17 : vector<2x128xf32>
    %1970 = vector.broadcast %1909 : f32 to vector<2x128xf32>
    %1971 = arith.mulf %1970, %12 : vector<2x128xf32>
    %1972 = arith.addf %1969, %1971 : vector<2x128xf32>
    %1973 = vector.broadcast %1912 : f32 to vector<2x128xf32>
    %1974 = arith.addf %1972, %1973 : vector<2x128xf32>
    %1975 = vector.broadcast %1915 : f32 to vector<2x128xf32>
    %1976 = arith.mulf %1975, %17 : vector<2x128xf32>
    %1977 = vector.broadcast %1918 : f32 to vector<2x128xf32>
    %1978 = arith.mulf %1977, %12 : vector<2x128xf32>
    %1979 = arith.addf %1976, %1978 : vector<2x128xf32>
    %1980 = vector.broadcast %1921 : f32 to vector<2x128xf32>
    %1981 = arith.addf %1979, %1980 : vector<2x128xf32>
    %1982 = vector.broadcast %1924 : f32 to vector<2x128xf32>
    %1983 = arith.mulf %1982, %17 : vector<2x128xf32>
    %1984 = vector.broadcast %1927 : f32 to vector<2x128xf32>
    %1985 = arith.mulf %1984, %12 : vector<2x128xf32>
    %1986 = arith.addf %1983, %1985 : vector<2x128xf32>
    %1987 = vector.broadcast %1930 : f32 to vector<2x128xf32>
    %1988 = arith.addf %1986, %1987 : vector<2x128xf32>
    %1989 = arith.select %1967, %1954, %1873 : vector<2x128xi1>, vector<2x128xf32>
    %1990 = arith.select %1967, %1974, %1874 : vector<2x128xi1>, vector<2x128xf32>
    %1991 = arith.select %1967, %1981, %1875 : vector<2x128xi1>, vector<2x128xf32>
    %1992 = arith.select %1967, %1988, %1876 : vector<2x128xi1>, vector<2x128xf32>
    %c17_i32 = arith.constant 17 : i32
    %1993 = arith.addi %20, %c17_i32 : i32
    %1994 = arith.index_cast %1993 : i32 to index
    %1995 = memref.load %arg2[%1994] : memref<4608xf32, #tpu.memory_space<smem>>
    %c128_i32_364 = arith.constant 128 : i32
    %1996 = arith.addi %1993, %c128_i32_364 : i32
    %1997 = arith.index_cast %1996 : i32 to index
    %1998 = memref.load %arg2[%1997] : memref<4608xf32, #tpu.memory_space<smem>>
    %c256_i32_365 = arith.constant 256 : i32
    %1999 = arith.addi %1993, %c256_i32_365 : i32
    %2000 = arith.index_cast %1999 : i32 to index
    %2001 = memref.load %arg2[%2000] : memref<4608xf32, #tpu.memory_space<smem>>
    %c384_i32_366 = arith.constant 384 : i32
    %2002 = arith.addi %1993, %c384_i32_366 : i32
    %2003 = arith.index_cast %2002 : i32 to index
    %2004 = memref.load %arg2[%2003] : memref<4608xf32, #tpu.memory_space<smem>>
    %c512_i32_367 = arith.constant 512 : i32
    %2005 = arith.addi %1993, %c512_i32_367 : i32
    %2006 = arith.index_cast %2005 : i32 to index
    %2007 = memref.load %arg2[%2006] : memref<4608xf32, #tpu.memory_space<smem>>
    %c640_i32_368 = arith.constant 640 : i32
    %2008 = arith.addi %1993, %c640_i32_368 : i32
    %2009 = arith.index_cast %2008 : i32 to index
    %2010 = memref.load %arg2[%2009] : memref<4608xf32, #tpu.memory_space<smem>>
    %c768_i32_369 = arith.constant 768 : i32
    %2011 = arith.addi %1993, %c768_i32_369 : i32
    %2012 = arith.index_cast %2011 : i32 to index
    %2013 = memref.load %arg2[%2012] : memref<4608xf32, #tpu.memory_space<smem>>
    %c896_i32_370 = arith.constant 896 : i32
    %2014 = arith.addi %1993, %c896_i32_370 : i32
    %2015 = arith.index_cast %2014 : i32 to index
    %2016 = memref.load %arg2[%2015] : memref<4608xf32, #tpu.memory_space<smem>>
    %c1024_i32_371 = arith.constant 1024 : i32
    %2017 = arith.addi %1993, %c1024_i32_371 : i32
    %2018 = arith.index_cast %2017 : i32 to index
    %2019 = memref.load %arg2[%2018] : memref<4608xf32, #tpu.memory_space<smem>>
    %c1152_i32_372 = arith.constant 1152 : i32
    %2020 = arith.addi %1993, %c1152_i32_372 : i32
    %2021 = arith.index_cast %2020 : i32 to index
    %2022 = memref.load %arg2[%2021] : memref<4608xf32, #tpu.memory_space<smem>>
    %c1280_i32_373 = arith.constant 1280 : i32
    %2023 = arith.addi %1993, %c1280_i32_373 : i32
    %2024 = arith.index_cast %2023 : i32 to index
    %2025 = memref.load %arg2[%2024] : memref<4608xf32, #tpu.memory_space<smem>>
    %c1408_i32_374 = arith.constant 1408 : i32
    %2026 = arith.addi %1993, %c1408_i32_374 : i32
    %2027 = arith.index_cast %2026 : i32 to index
    %2028 = memref.load %arg2[%2027] : memref<4608xf32, #tpu.memory_space<smem>>
    %c1536_i32_375 = arith.constant 1536 : i32
    %2029 = arith.addi %1993, %c1536_i32_375 : i32
    %2030 = arith.index_cast %2029 : i32 to index
    %2031 = memref.load %arg2[%2030] : memref<4608xf32, #tpu.memory_space<smem>>
    %c1664_i32_376 = arith.constant 1664 : i32
    %2032 = arith.addi %1993, %c1664_i32_376 : i32
    %2033 = arith.index_cast %2032 : i32 to index
    %2034 = memref.load %arg2[%2033] : memref<4608xf32, #tpu.memory_space<smem>>
    %c1792_i32_377 = arith.constant 1792 : i32
    %2035 = arith.addi %1993, %c1792_i32_377 : i32
    %2036 = arith.index_cast %2035 : i32 to index
    %2037 = memref.load %arg2[%2036] : memref<4608xf32, #tpu.memory_space<smem>>
    %c1920_i32_378 = arith.constant 1920 : i32
    %2038 = arith.addi %1993, %c1920_i32_378 : i32
    %2039 = arith.index_cast %2038 : i32 to index
    %2040 = memref.load %arg2[%2039] : memref<4608xf32, #tpu.memory_space<smem>>
    %c2048_i32_379 = arith.constant 2048 : i32
    %2041 = arith.addi %1993, %c2048_i32_379 : i32
    %2042 = arith.index_cast %2041 : i32 to index
    %2043 = memref.load %arg2[%2042] : memref<4608xf32, #tpu.memory_space<smem>>
    %c2176_i32_380 = arith.constant 2176 : i32
    %2044 = arith.addi %1993, %c2176_i32_380 : i32
    %2045 = arith.index_cast %2044 : i32 to index
    %2046 = memref.load %arg2[%2045] : memref<4608xf32, #tpu.memory_space<smem>>
    %2047 = vector.broadcast %1995 : f32 to vector<2x128xf32>
    %2048 = arith.mulf %2047, %17 : vector<2x128xf32>
    %2049 = vector.broadcast %1998 : f32 to vector<2x128xf32>
    %2050 = arith.mulf %2049, %12 : vector<2x128xf32>
    %2051 = arith.addf %2048, %2050 : vector<2x128xf32>
    %2052 = vector.broadcast %2001 : f32 to vector<2x128xf32>
    %2053 = arith.addf %2051, %2052 : vector<2x128xf32>
    %2054 = vector.broadcast %2004 : f32 to vector<2x128xf32>
    %2055 = arith.mulf %2054, %17 : vector<2x128xf32>
    %2056 = vector.broadcast %2007 : f32 to vector<2x128xf32>
    %2057 = arith.mulf %2056, %12 : vector<2x128xf32>
    %2058 = arith.addf %2055, %2057 : vector<2x128xf32>
    %2059 = vector.broadcast %2010 : f32 to vector<2x128xf32>
    %2060 = arith.addf %2058, %2059 : vector<2x128xf32>
    %cst_381 = arith.constant 1.000000e+00 : f32
    %2061 = vector.broadcast %cst_381 : f32 to vector<2x128xf32>
    %2062 = arith.subf %2061, %2053 : vector<2x128xf32>
    %2063 = arith.subf %2062, %2060 : vector<2x128xf32>
    %2064 = vector.broadcast %2013 : f32 to vector<2x128xf32>
    %2065 = arith.mulf %2064, %17 : vector<2x128xf32>
    %2066 = vector.broadcast %2016 : f32 to vector<2x128xf32>
    %2067 = arith.mulf %2066, %12 : vector<2x128xf32>
    %2068 = arith.addf %2065, %2067 : vector<2x128xf32>
    %2069 = vector.broadcast %2019 : f32 to vector<2x128xf32>
    %2070 = arith.addf %2068, %2069 : vector<2x128xf32>
    %cst_382 = arith.constant 0.000000e+00 : f32
    %2071 = vector.broadcast %cst_382 : f32 to vector<2x128xf32>
    %2072 = arith.cmpf oge, %2053, %2071 : vector<2x128xf32>
    %cst_383 = arith.constant 0.000000e+00 : f32
    %2073 = vector.broadcast %cst_383 : f32 to vector<2x128xf32>
    %2074 = arith.cmpf oge, %2060, %2073 : vector<2x128xf32>
    %2075 = arith.andi %2072, %2074 : vector<2x128xi1>
    %cst_384 = arith.constant 0.000000e+00 : f32
    %2076 = vector.broadcast %cst_384 : f32 to vector<2x128xf32>
    %2077 = arith.cmpf oge, %2063, %2076 : vector<2x128xf32>
    %2078 = arith.andi %2075, %2077 : vector<2x128xi1>
    %cst_385 = arith.constant 9.99999997E-7 : f32
    %2079 = vector.broadcast %cst_385 : f32 to vector<2x128xf32>
    %2080 = arith.cmpf ogt, %2070, %2079 : vector<2x128xf32>
    %2081 = arith.andi %2078, %2080 : vector<2x128xi1>
    %2082 = arith.cmpf olt, %2070, %1989 : vector<2x128xf32>
    %2083 = arith.andi %2081, %2082 : vector<2x128xi1>
    %2084 = vector.broadcast %2022 : f32 to vector<2x128xf32>
    %2085 = arith.mulf %2084, %17 : vector<2x128xf32>
    %2086 = vector.broadcast %2025 : f32 to vector<2x128xf32>
    %2087 = arith.mulf %2086, %12 : vector<2x128xf32>
    %2088 = arith.addf %2085, %2087 : vector<2x128xf32>
    %2089 = vector.broadcast %2028 : f32 to vector<2x128xf32>
    %2090 = arith.addf %2088, %2089 : vector<2x128xf32>
    %2091 = vector.broadcast %2031 : f32 to vector<2x128xf32>
    %2092 = arith.mulf %2091, %17 : vector<2x128xf32>
    %2093 = vector.broadcast %2034 : f32 to vector<2x128xf32>
    %2094 = arith.mulf %2093, %12 : vector<2x128xf32>
    %2095 = arith.addf %2092, %2094 : vector<2x128xf32>
    %2096 = vector.broadcast %2037 : f32 to vector<2x128xf32>
    %2097 = arith.addf %2095, %2096 : vector<2x128xf32>
    %2098 = vector.broadcast %2040 : f32 to vector<2x128xf32>
    %2099 = arith.mulf %2098, %17 : vector<2x128xf32>
    %2100 = vector.broadcast %2043 : f32 to vector<2x128xf32>
    %2101 = arith.mulf %2100, %12 : vector<2x128xf32>
    %2102 = arith.addf %2099, %2101 : vector<2x128xf32>
    %2103 = vector.broadcast %2046 : f32 to vector<2x128xf32>
    %2104 = arith.addf %2102, %2103 : vector<2x128xf32>
    %2105 = arith.select %2083, %2070, %1989 : vector<2x128xi1>, vector<2x128xf32>
    %2106 = arith.select %2083, %2090, %1990 : vector<2x128xi1>, vector<2x128xf32>
    %2107 = arith.select %2083, %2097, %1991 : vector<2x128xi1>, vector<2x128xf32>
    %2108 = arith.select %2083, %2104, %1992 : vector<2x128xi1>, vector<2x128xf32>
    %c18_i32 = arith.constant 18 : i32
    %cst_386 = arith.constant 1.000000e+09 : f32
    %2109 = vector.broadcast %cst_386 : f32 to vector<2x128xf32>
    %2110 = arith.cmpf olt, %2105, %2109 : vector<2x128xf32>
    %2111 = arith.extui %2110 : vector<2x128xi1> to vector<2x128xi32>
    %2112 = arith.sitofp %2111 : vector<2x128xi32> to vector<2x128xf32>
    %c0 = arith.constant 0 : index
    %c0_387 = arith.constant 0 : index
    %c0_388 = arith.constant 0 : index
    %c0_389 = arith.constant 0 : index
    %2113 = vector.load %arg3[%c0, %c0_387, %c0_388, %c0_389] : memref<1x4x2x128xf32, #tpu.memory_space<vmem>>, vector<1x1x2x128xf32>
    %2114 = vector.shape_cast %2113 : vector<1x1x2x128xf32> to vector<2x128xf32>
    %2115 = vector.shape_cast %2106 : vector<2x128xf32> to vector<1x1x2x128xf32>
    tpu.vector_store %arg3[%c0, %c0_387, %c0_388, %c0_389], %2115 {strides = array<i32>} : memref<1x4x2x128xf32, #tpu.memory_space<vmem>>, vector<1x1x2x128xf32>,
    %c0_390 = arith.constant 0 : index
    %c1 = arith.constant 1 : index
    %c0_391 = arith.constant 0 : index
    %c0_392 = arith.constant 0 : index
    %2116 = vector.load %arg3[%c0_390, %c1, %c0_391, %c0_392] : memref<1x4x2x128xf32, #tpu.memory_space<vmem>>, vector<1x1x2x128xf32>
    %2117 = vector.shape_cast %2116 : vector<1x1x2x128xf32> to vector<2x128xf32>
    %2118 = vector.shape_cast %2107 : vector<2x128xf32> to vector<1x1x2x128xf32>
    tpu.vector_store %arg3[%c0_390, %c1, %c0_391, %c0_392], %2118 {strides = array<i32>} : memref<1x4x2x128xf32, #tpu.memory_space<vmem>>, vector<1x1x2x128xf32>,
    %c0_393 = arith.constant 0 : index
    %c2 = arith.constant 2 : index
    %c0_394 = arith.constant 0 : index
    %c0_395 = arith.constant 0 : index
    %2119 = vector.load %arg3[%c0_393, %c2, %c0_394, %c0_395] : memref<1x4x2x128xf32, #tpu.memory_space<vmem>>, vector<1x1x2x128xf32>
    %2120 = vector.shape_cast %2119 : vector<1x1x2x128xf32> to vector<2x128xf32>
    %2121 = vector.shape_cast %2108 : vector<2x128xf32> to vector<1x1x2x128xf32>
    tpu.vector_store %arg3[%c0_393, %c2, %c0_394, %c0_395], %2121 {strides = array<i32>} : memref<1x4x2x128xf32, #tpu.memory_space<vmem>>, vector<1x1x2x128xf32>,
    %c0_396 = arith.constant 0 : index
    %c3 = arith.constant 3 : index
    %c0_397 = arith.constant 0 : index
    %c0_398 = arith.constant 0 : index
    %2122 = vector.load %arg3[%c0_396, %c3, %c0_397, %c0_398] : memref<1x4x2x128xf32, #tpu.memory_space<vmem>>, vector<1x1x2x128xf32>
    %2123 = vector.shape_cast %2122 : vector<1x1x2x128xf32> to vector<2x128xf32>
    %2124 = vector.shape_cast %2112 : vector<2x128xf32> to vector<1x1x2x128xf32>
    tpu.vector_store %arg3[%c0_396, %c3, %c0_397, %c0_398], %2124 {strides = array<i32>} : memref<1x4x2x128xf32, #tpu.memory_space<vmem>>, vector<1x1x2x128xf32>,
    return
  }
  func.func @transform_0(%arg0: i32, %arg1: i32) -> i32 {
    %c0_i32 = arith.constant 0 : i32
    %c0_i32_0 = arith.constant 0 : i32
    return %c0_i32 : i32
  }
  func.func @transform_1(%arg0: i32, %arg1: i32) -> (i32, i32, i32, i32) {
    %c0_i32 = arith.constant 0 : i32
    %c0_i32_0 = arith.constant 0 : i32
    %c0_i32_1 = arith.constant 0 : i32
    return %arg0, %c0_i32, %arg1, %c0_i32_0 : i32, i32, i32, i32
  }
}

</mosaic_0001>

<llo_original>
// kernel: soft_renderer_forward.2
$region0: #{soft_renderer_forward.2}
  #allocation0 [shape = 'u32[]', space=smem, size = 0x4, offset = 0x4, fixed_abs, tag = 'smem constant byte address 0x4 - core index']
  #allocation1 [shape = 'u32[144,128]{1,0:T(1,128)}', space=vmem, size = 0x12000, scoped, tag = 'internal scratch']
  %s0 = inlined_call_operand.vmem [shape: f32[6], index: 0, kind: input, shape index: {}]
  %s1 = inlined_call_operand.vmem [shape: f32[2,9,128], index: 1, kind: input, shape index: {}]
  %s2 = inlined_call_operand.vmem [shape: f32[2,12,128], index: 2, kind: output, shape index: {}]
  %s3 = sld [smem:[#allocation0]]
  $region45: #{soft_renderer_forward.2} parent=0
    _
  %s5 = ssub.s32 1, %s3
  %s6 = scalar_select 0, %s5, %s3
  $region1: #{soft_renderer_forward.2} parent=0
    #allocation2 [shape = 'u8[512]{0}', space=smem, size = 0x200, scoped, tag = 'input window, operand 0, single buffered']
    #allocation3 [shape = 's32[2]{0}', space=sflag, size = 0x8, scoped, tag = 'scoped memory for soft_renderer_forward.2']
    %7 = vsyncpa [#allocation3], 0
    loop: start=0, step=1, limit=4
    $region2: #{soft_renderer_forward.2} parent=1 // loop_pre_header
      _
    $region3: #{soft_renderer_forward.2} parent=1 // loop_header
      %s9 = sphi 0, %s13
      %p10 = scmp.ge.s32.totalorder %s9, 4
      %s17 = sphi 0, %s17
      %s19 = sphi 0, %s17
      %s20 = sphi 0, %s19
      %s34 = sphi 0, %s20
      %s40 = sphi 0, %s42
      %s43 = sphi 0, %s40
      %s44 = sphi 0, %s43
      %s60 = sphi 0, %s44
      %s66 = sphi 0, %s68
      %s69 = sphi 0, %s66
      %s70 = sphi 0, %s69
      %s86 = sphi 0, %s70
    $region4: #{soft_renderer_forward.2} parent=1 // loop_header_branch
      %12 = sbr.rel (%p10) target = $region8
    $region5: #{soft_renderer_forward.2} parent=1 // loop_body
      %s14 = ssub.s32 %s9, 1
      %s15 = ssub.s32 %s9, 2
      %s16 = sadd.s32 %s9, 1
      %s18 = sadd.s32 %s17, 1
      %p21 = scmp.eq.s32.totalorder %s9, 1
      %p22 = scmp.ne.s32.totalorder %s17, %s19
      %p23 = scmp.eq.s32.totalorder %s9, 0
      %p24 = por %p22, %p23
      %p25 = scmp.ne.s32.totalorder %s17, %s19
      %p26 = scmp.eq.s32.totalorder %s14, 1
      %p27 = por %p25, %p26
      %p28 = scmp.ne.s32.totalorder %s19, %s20
      %p29 = scmp.eq.s32.totalorder %s14, 0
      %p30 = por %p28, %p29
      %p31 = scmp.ne.s32.totalorder %s19, %s20
      %p32 = scmp.eq.s32.totalorder %s15, 1
      %p33 = por %p31, %p32
      %p35 = scmp.ne.s32.totalorder %s20, %s34
      %p36 = scmp.eq.s32.totalorder %s15, 0
      %p37 = por %p35, %p36
      %s38 = ssub.s32 %s9, %s16
      %p39 = scmp.eq.s32.totalorder %s38, 0
      %s41 = sadd.s32 %s40, 1
      %s42 = scalar_select %p39, %s40, %s41
      %p45 = pneg %p39
      %p46 = scmp.eq.s32.totalorder %s9, 1
      %p47 = por %p45, %p46
      %p48 = scmp.ne.s32.totalorder %s40, %s43
      %p49 = scmp.eq.s32.totalorder %s9, 0
      %p50 = por %p48, %p49
      %p51 = scmp.ne.s32.totalorder %s40, %s43
      %p52 = scmp.eq.s32.totalorder %s14, 1
      %p53 = por %p51, %p52
      %p54 = scmp.ne.s32.totalorder %s43, %s44
      %p55 = scmp.eq.s32.totalorder %s14, 0
      %p56 = por %p54, %p55
      %p57 = scmp.ne.s32.totalorder %s43, %s44
      %p58 = scmp.eq.s32.totalorder %s15, 1
      %p59 = por %p57, %p58
      %p61 = scmp.ne.s32.totalorder %s44, %s60
      %p62 = scmp.eq.s32.totalorder %s15, 0
      %p63 = por %p61, %p62
      %s64 = ssub.s32 %s9, %s16
      %p65 = scmp.eq.s32.totalorder %s64, 0
      %s67 = sadd.s32 %s66, 1
      %s68 = scalar_select %p65, %s66, %s67
      %p71 = pneg %p65
      %p72 = scmp.eq.s32.totalorder %s9, 1
      %p73 = por %p71, %p72
      %p74 = scmp.ne.s32.totalorder %s66, %s69
      %p75 = scmp.eq.s32.totalorder %s9, 0
      %p76 = por %p74, %p75
      %p77 = scmp.ne.s32.totalorder %s66, %s69
      %p78 = scmp.eq.s32.totalorder %s14, 1
      %p79 = por %p77, %p78
      %p80 = scmp.ne.s32.totalorder %s69, %s70
      %p81 = scmp.eq.s32.totalorder %s14, 0
      %p82 = por %p80, %p81
      %p83 = scmp.ne.s32.totalorder %s69, %s70
      %p84 = scmp.eq.s32.totalorder %s15, 1
      %p85 = por %p83, %p84
      %p87 = scmp.ne.s32.totalorder %s70, %s86
      %p88 = scmp.eq.s32.totalorder %s15, 0
      %p89 = por %p87, %p88
      %p90 = scmp.le.s32.totalorder 1, %s9
      %p91 = scmp.lt.s32.totalorder %s9, 3
      %p92 = pnand %p90, %p91
      %p93 = pneg %p92
      // Predicated region
      $region9: #{soft_renderer_forward.2} parent=5 // pred_check
        _
      $region10: #{soft_renderer_forward.2} parent=5 // pred_check_branch
        %95 = sbr.rel (%p92) target = $region12
      $region11: #{soft_renderer_forward.2} parent=5 // pred_region
        %s96 = ssub.s32 %s9, 1
        // Predicated region
        $region13: #{soft_renderer_forward.2} parent=11 // pred_check
          %p97 = pneg %p30
        $region14: #{soft_renderer_forward.2} parent=11 // pred_check_branch
          %99 = sbr.rel (%p97) target = $region16
        $region15: #{soft_renderer_forward.2} parent=11 // pred_region
          %s101 = ssub.s32 16, 16
          %102 = vsyncadd [#allocation3], %s101
          %s104 = sshll.u32 %s0, 4
          %s105 = int_to_ptr.vmem [resolvable:$true] %s104
          %107 = dma.vmem_to_smem %s105, 16, [#allocation2], [#allocation3]
        $region16: #{soft_renderer_forward.2} parent=11 // pred_fallthru
          _
      $region12: #{soft_renderer_forward.2} parent=5 // pred_fallthru
        _
      %p108 = scmp.lt.s32.totalorder %s9, 2
      // Predicated region
      $region17: #{soft_renderer_forward.2} parent=5 // pred_check
        %p109 = pneg %p108
      $region18: #{soft_renderer_forward.2} parent=5 // pred_check_branch
        %111 = sbr.rel (%p109) target = $region20
      $region19: #{soft_renderer_forward.2} parent=5 // pred_region
        // Predicated region
        $region21: #{soft_renderer_forward.2} parent=19 // pred_check
          %p112 = pneg %p50
        $region22: #{soft_renderer_forward.2} parent=19 // pred_check_branch
          %114 = sbr.rel (%p112) target = $region24
        $region23: #{soft_renderer_forward.2} parent=19 // pred_region
          %p115 = scmp.lt.s32.totalorder %s9, 1
          %s116 = scalar_select %p115, %s9, 1
          %s117 = smul.addr %s116, 2
          %s118 = smul.addr %s117, 8
          %s119 = scalar_lea.vmem %s1, %s118
        $region24: #{soft_renderer_forward.2} parent=19 // pred_fallthru
          _
      $region20: #{soft_renderer_forward.2} parent=5 // pred_fallthru
        _
      %p120 = scmp.le.s32.totalorder 1, %s9
      %p121 = scmp.lt.s32.totalorder %s9, 3
      %p122 = pnand %p120, %p121
      %p123 = pneg %p122
      // Predicated region
      $region25: #{soft_renderer_forward.2} parent=5 // pred_check
        _
      $region26: #{soft_renderer_forward.2} parent=5 // pred_check_branch
        %125 = sbr.rel (%p122) target = $region28
      $region27: #{soft_renderer_forward.2} parent=5 // pred_region
        %s126 = ssub.s32 %s9, 1
        // Predicated region
        $region29: #{soft_renderer_forward.2} parent=27 // pred_check
          %p127 = pneg %p30
        $region30: #{soft_renderer_forward.2} parent=27 // pred_check_branch
          %129 = sbr.rel (%p127) target = $region32
        $region31: #{soft_renderer_forward.2} parent=27 // pred_region
          %130 = dma.done [#allocation3], 16
        $region32: #{soft_renderer_forward.2} parent=27 // pred_fallthru
          _
        %131 = sfence
        %p132 = pneg %p30
        %p133 = pneg %p27
        %p134 = scmp.lt.s32.totalorder %s14, 1
        %s135 = scalar_select %p134, %s14, 1
        %s136 = smul.addr %s135, 2
        %s137 = smul.addr %s136, 8
        %s138 = scalar_lea.vmem %s1, %s137
        %p139 = pneg %p56
        %p140 = pneg %p53
        %p141 = pneg %p82
        %p142 = pneg %p79
        %p143 = scmp.lt.s32.totalorder %s14, 1
        %s144 = scalar_select %p143, %s14, 1
        %s145 = smul.addr %s144, 2
        %s146 = smul.addr %s145, 8
        %s147 = scalar_lea.vmem %s2, %s146
        %p148 = scmp.lt.s32.totalorder %s14, 1
        %s149 = scalar_select %p148, %s14, 1
        %s150 = smul.addr %s149, 2
        %s151 = smul.addr %s150, 8
        %s152 = scalar_lea.vmem %s1, %s151
        %p153 = scmp.lt.s32.totalorder %s14, 1
        %s154 = scalar_select %p153, %s14, 1
        %s155 = smul.addr %s154, 2
        %s156 = smul.addr %s155, 8
        %s157 = scalar_lea.vmem %s2, %s156
        %s158 = smul.u32 %s14, 3
        %s159 = sld [smem:[#allocation2 + %s158]]
        %s160 = ssub.f32 0.0, %s159
        %s161 = sadd.s32 %s158, 1
        %s162 = sld [smem:[#allocation2 + %s161]]
        %s163 = ssub.f32 0.0, %s162
        %s164 = sadd.s32 %s158, 2
        %s165 = sld [smem:[#allocation2 + %s164]]
        %v166 = vld [vmem:[%s152] sm:$0x1]
        %v167 = vld [vmem:[%s152 + $0x1] sm:$0x1]
        %v168 = vld [vmem:[%s152 + $0x2] sm:$0x1]
        %v169 = vsub.f32 0.0, %v166
        %v170 = vsub.f32 0.0, %v167
        %v171 = vstv %s160
        %v172 = vadd.f32 %v169, %v171
        %v173 = vstv %s163
        %v174 = vadd.f32 %v170, %v173
        %v175 = vstv %s165
        %v176 = vadd.f32 %v168, %v175
        %v177 = vand.u32 2147483647, %v176
        %vm178 = vcmp.lt.f32.partialorder %v177, 1e-08
        %vm179 = vcmp.lt.f32.partialorder %v176, 0.0
        %v180 = vsel %vm179, -1e-08, 1e-08
        %v181 = vsel %vm178, %v180, %v176
        %v182 = vrcp.pop %v181
        %v183 = vmul.f32 1.0, %v182
        %v184 = vmul.f32 %v172, 16.0
        %v185 = vmul.f32 %v184, %v183
        %v186 = vadd.f32 %v185, 8.0
        %v187 = vmul.f32 %v174, 16.0
        %v188 = vmul.f32 %v187, %v183
        %v189 = vadd.f32 %v188, 8.0
        %v190 = vld [vmem:[%s152 + $0x3] sm:$0x1]
        %v191 = vld [vmem:[%s152 + $0x4] sm:$0x1]
        %v192 = vld [vmem:[%s152 + $0x5] sm:$0x1]
        %v193 = vsub.f32 0.0, %v190
        %v194 = vsub.f32 0.0, %v191
        %v195 = vadd.f32 %v193, %v171
        %v196 = vadd.f32 %v194, %v173
        %v197 = vadd.f32 %v192, %v175
        %v198 = vand.u32 2147483647, %v197
        %vm199 = vcmp.lt.f32.partialorder %v198, 1e-08
        %vm200 = vcmp.lt.f32.partialorder %v197, 0.0
        %v201 = vsel %vm200, -1e-08, 1e-08
        %v202 = vsel %vm199, %v201, %v197
        %v203 = vrcp.pop %v202
        %v204 = vmul.f32 1.0, %v203
        %v205 = vmul.f32 %v195, 16.0
        %v206 = vmul.f32 %v205, %v204
        %v207 = vadd.f32 %v206, 8.0
        %v208 = vmul.f32 %v196, 16.0
        %v209 = vmul.f32 %v208, %v204
        %v210 = vadd.f32 %v209, 8.0
        %v211 = vld [vmem:[%s152 + $0x6] sm:$0x1]
        %v212 = vld [vmem:[%s152 + $0x7] sm:$0x1]
        %v213 = vld [vmem:[%s152 + $0x8] sm:$0x1]
        %v214 = vsub.f32 0.0, %v211
        %v215 = vsub.f32 0.0, %v212
        %v216 = vadd.f32 %v214, %v171
        %v217 = vadd.f32 %v215, %v173
        %v218 = vadd.f32 %v213, %v175
        %v219 = vand.u32 2147483647, %v218
        %vm220 = vcmp.lt.f32.partialorder %v219, 1e-08
        %vm221 = vcmp.lt.f32.partialorder %v218, 0.0
        %v222 = vsel %vm221, -1e-08, 1e-08
        %v223 = vsel %vm220, %v222, %v218
        %v224 = vrcp.pop %v223
        %v225 = vmul.f32 1.0, %v224
        %v226 = vmul.f32 %v216, 16.0
        %v227 = vmul.f32 %v226, %v225
        %v228 = vadd.f32 %v227, 8.0
        %v229 = vmul.f32 %v217, 16.0
        %v230 = vmul.f32 %v229, %v225
        %v231 = vadd.f32 %v230, 8.0
        %v232 = vsub.f32 %v193, %v169
        %v233 = vsub.f32 %v194, %v170
        %v234 = vsub.f32 %v192, %v168
        %v235 = vsub.f32 %v214, %v169
        %v236 = vsub.f32 %v215, %v170
        %v237 = vsub.f32 %v213, %v168
        %v238 = vmul.f32 %v233, %v237
        %v239 = vmul.f32 %v234, %v236
        %v240 = vsub.f32 %v238, %v239
        %v241 = vmul.f32 %v234, %v235
        %v242 = vmul.f32 %v232, %v237
        %v243 = vsub.f32 %v241, %v242
        %v244 = vmul.f32 %v232, %v236
        %v245 = vmul.f32 %v233, %v235
        %v246 = vsub.f32 %v244, %v245
        %v247 = vsub.f32 %v210, %v231
        %v248 = vsub.f32 %v228, %v207
        %v249 = vsub.f32 %v231, %v189
        %v250 = vsub.f32 %v186, %v228
        %v251 = vmul.f32 %v247, %v250
        %v252 = vsub.f32 %v189, %v231
        %v253 = vmul.f32 %v248, %v252
        %v254 = vadd.f32 %v251, %v253
        %v255 = vand.u32 2147483647, %v254
        %vm256 = vcmp.gt.f32.partialorder %v255, 1e-09
        %v257 = vsel %vm256, %v254, 1.0
        %v258 = vrcp.pop %v257
        %v259 = vmul.f32 1.0, %v258
        %v260 = vmul.f32 %v247, %v259
        %v261 = vmul.f32 %v248, %v259
        %v262 = vmul.f32 %v260, %v228
        %v263 = vmul.f32 %v261, %v231
        %v264 = vadd.f32 %v262, %v263
        %v265 = vsub.f32 0.0, %v264
        %v266 = vmul.f32 %v249, %v259
        %v267 = vmul.f32 %v250, %v259
        %v268 = vmul.f32 %v266, %v228
        %v269 = vmul.f32 %v267, %v231
        %v270 = vadd.f32 %v268, %v269
        %v271 = vsub.f32 0.0, %v270
        %v272 = vsub.f32 %v176, %v218
        %v273 = vsub.f32 %v197, %v218
        %v274 = vmul.f32 %v260, %v272
        %v275 = vmul.f32 %v266, %v273
        %v276 = vadd.f32 %v274, %v275
        %v277 = vmul.f32 %v261, %v272
        %v278 = vmul.f32 %v267, %v273
        %v279 = vadd.f32 %v277, %v278
        %v280 = vmul.f32 %v265, %v272
        %v281 = vmul.f32 %v271, %v273
        %v282 = vadd.f32 %v280, %v281
        %v283 = vadd.f32 %v282, %v218
        %v284 = vsel %vm256, %v260, 0.0
        %285 = vst [vmem:[%s157] sm:$0x1] %v284
        %v286 = vsel %vm256, %v261, 0.0
        %287 = vst [vmem:[%s157 + $0x1] sm:$0x1] %v286
        %v288 = vsel %vm256, %v265, -1.0
        %289 = vst [vmem:[%s157 + $0x2] sm:$0x1] %v288
        %v290 = vsel %vm256, %v266, 0.0
        %291 = vst [vmem:[%s157 + $0x3] sm:$0x1] %v290
        %v292 = vsel %vm256, %v267, 0.0
        %293 = vst [vmem:[%s157 + $0x4] sm:$0x1] %v292
        %v294 = vsel %vm256, %v271, 0.0
        %295 = vst [vmem:[%s157 + $0x5] sm:$0x1] %v294
        %v296 = vsel %vm256, %v276, 0.0
        %297 = vst [vmem:[%s157 + $0x6] sm:$0x1] %v296
        %v298 = vsel %vm256, %v279, 0.0
        %299 = vst [vmem:[%s157 + $0x7] sm:$0x1] %v298
        %v300 = vsel %vm256, %v283, 0.0
        %301 = vst [vmem:[%s157 + $0x8] sm:$0x1] %v300
        %302 = vst [vmem:[%s157 + $0x9] sm:$0x1] %v240
        %303 = vst [vmem:[%s157 + $0xa] sm:$0x1] %v243
        %304 = vst [vmem:[%s157 + $0xb] sm:$0x1] %v246
        %p305 = scmp.lt.s32.totalorder %s14, 1
        %s306 = scalar_select %p305, %s14, 1
        %s307 = smul.addr %s306, 2
        %s308 = smul.addr %s307, 8
        %s309 = scalar_lea.vmem %s2, %s308
        // Predicated region
        $region33: #{soft_renderer_forward.2} parent=27 // pred_check
          %p310 = pneg %p79
        $region34: #{soft_renderer_forward.2} parent=27 // pred_check_branch
          %312 = sbr.rel (%p310) target = $region36
        $region35: #{soft_renderer_forward.2} parent=27 // pred_region
          _
        $region36: #{soft_renderer_forward.2} parent=27 // pred_fallthru
          _
      $region28: #{soft_renderer_forward.2} parent=5 // pred_fallthru
        _
      %p313 = scmp.le.s32.totalorder 2, %s9
      // Predicated region
      $region37: #{soft_renderer_forward.2} parent=5 // pred_check
        %p314 = pneg %p313
      $region38: #{soft_renderer_forward.2} parent=5 // pred_check_branch
        %316 = sbr.rel (%p314) target = $region40
      $region39: #{soft_renderer_forward.2} parent=5 // pred_region
        %s317 = ssub.s32 %s9, 2
        // Predicated region
        $region41: #{soft_renderer_forward.2} parent=39 // pred_check
          %p318 = pneg %p85
        $region42: #{soft_renderer_forward.2} parent=39 // pred_check_branch
          %320 = sbr.rel (%p318) target = $region44
        $region43: #{soft_renderer_forward.2} parent=39 // pred_region
          %p321 = scmp.lt.s32.totalorder %s15, 1
          %s322 = scalar_select %p321, %s15, 1
          %s323 = smul.addr %s322, 2
          %s324 = smul.addr %s323, 8
          %s325 = scalar_lea.vmem %s2, %s324
        $region44: #{soft_renderer_forward.2} parent=39 // pred_fallthru
          _
      $region40: #{soft_renderer_forward.2} parent=5 // pred_fallthru
        _
    $region6: #{soft_renderer_forward.2} parent=1 // loop_footer
      %s13 = sadd.s32 1, %s9
    $region7: #{soft_renderer_forward.2} parent=1 // loop_footer_branch
      %8 = sbr.rel target = $region3
    $region8: #{soft_renderer_forward.2} parent=1 // loop_exit
      _
    %326 = vsyncpa [#allocation3], 1
    %s327 = scalar_lea.sflag [#allocation3], 1
    %328 = vsyncpa %s327, 1

// kernel: soft_renderer_forward.3
$region0: #{soft_renderer_forward.3}
  #allocation0 [shape = 'u32[]', space=smem, size = 0x4, offset = 0x4, fixed_abs, tag = 'smem constant byte address 0x4 - core index']
  #allocation1 [shape = 'u32[144,128]{1,0:T(1,128)}', space=vmem, size = 0x12000, scoped, tag = 'internal scratch']
  %s0 = inlined_call_operand.vmem [shape: f32[4608], index: 0, kind: input, shape index: {}]
  %s1 = inlined_call_operand.vmem [shape: f32[2,4,2,128], index: 1, kind: output, shape index: {}]
  %s2 = sld [smem:[#allocation0]]
  $region41: #{soft_renderer_forward.3} parent=0
    _
  %s4 = ssub.s32 1, %s2
  %s5 = scalar_select 0, %s4, %s2
  $region1: #{soft_renderer_forward.3} parent=0
    #allocation2 [shape = 'u8[18432]{0}', space=smem, size = 0x4800, scoped, tag = 'input window, operand 0, single buffered']
    #allocation3 [shape = 's32[2]{0}', space=sflag, size = 0x8, scoped, tag = 'scoped memory for soft_renderer_forward.3']
    %6 = vsyncpa [#allocation3], 0
    loop: start=0, step=1, limit=4
    $region2: #{soft_renderer_forward.3} parent=1 // loop_pre_header
      _
    $region3: #{soft_renderer_forward.3} parent=1 // loop_header
      %s8 = sphi 0, %s12
      %p9 = scmp.ge.s32.totalorder %s8, 4
      %s15 = sphi 0, %s27
      %s16 = sphi 0, %s23
      %s17 = sphi 0, %s15
      %s18 = sphi 0, %s16
      %s19 = sphi 0, %s17
      %s20 = sphi 0, %s18
      %s28 = sphi 0, %s28
      %s30 = sphi 0, %s28
      %s31 = sphi 0, %s30
      %s45 = sphi 0, %s31
      %s53 = sphi 0, %s55
      %s56 = sphi 0, %s53
      %s57 = sphi 0, %s56
      %s73 = sphi 0, %s57
    $region4: #{soft_renderer_forward.3} parent=1 // loop_header_branch
      %11 = sbr.rel (%p9) target = $region8
    $region5: #{soft_renderer_forward.3} parent=1 // loop_body
      %s13 = ssub.s32 %s8, 1
      %s14 = ssub.s32 %s8, 2
      %s21 = sadd.s32 1, %s16
      %p22 = scmp.ge.s32.totalorder %s21, 1
      %s23 = scalar_select %p22, 0, %s21
      %s24 = sadd.s32 1, %s15
      %s25 = scalar_select %p22, %s24, %s15
      %p26 = scmp.ge.s32.totalorder %s25, 2
      %s27 = scalar_select %p26, 0, %s25
      %s29 = sadd.s32 %s28, 1
      %p32 = scmp.eq.s32.totalorder %s8, 1
      %p33 = scmp.ne.s32.totalorder %s28, %s30
      %p34 = scmp.eq.s32.totalorder %s8, 0
      %p35 = por %p33, %p34
      %p36 = scmp.ne.s32.totalorder %s28, %s30
      %p37 = scmp.eq.s32.totalorder %s13, 1
      %p38 = por %p36, %p37
      %p39 = scmp.ne.s32.totalorder %s30, %s31
      %p40 = scmp.eq.s32.totalorder %s13, 0
      %p41 = por %p39, %p40
      %p42 = scmp.ne.s32.totalorder %s30, %s31
      %p43 = scmp.eq.s32.totalorder %s14, 1
      %p44 = por %p42, %p43
      %p46 = scmp.ne.s32.totalorder %s31, %s45
      %p47 = scmp.eq.s32.totalorder %s14, 0
      %p48 = por %p46, %p47
      %s49 = ssub.s32 %s15, %s27
      %s50 = ssub.s32 %s16, %s23
      %s51 = sor.u32 %s49, %s50
      %p52 = scmp.eq.s32.totalorder %s51, 0
      %s54 = sadd.s32 %s53, 1
      %s55 = scalar_select %p52, %s53, %s54
      %p58 = pneg %p52
      %p59 = scmp.eq.s32.totalorder %s8, 1
      %p60 = por %p58, %p59
      %p61 = scmp.ne.s32.totalorder %s53, %s56
      %p62 = scmp.eq.s32.totalorder %s8, 0
      %p63 = por %p61, %p62
      %p64 = scmp.ne.s32.totalorder %s53, %s56
      %p65 = scmp.eq.s32.totalorder %s13, 1
      %p66 = por %p64, %p65
      %p67 = scmp.ne.s32.totalorder %s56, %s57
      %p68 = scmp.eq.s32.totalorder %s13, 0
      %p69 = por %p67, %p68
      %p70 = scmp.ne.s32.totalorder %s56, %s57
      %p71 = scmp.eq.s32.totalorder %s14, 1
      %p72 = por %p70, %p71
      %p74 = scmp.ne.s32.totalorder %s57, %s73
      %p75 = scmp.eq.s32.totalorder %s14, 0
      %p76 = por %p74, %p75
      %p77 = scmp.le.s32.totalorder 1, %s8
      %p78 = scmp.lt.s32.totalorder %s8, 3
      %p79 = pnand %p77, %p78
      %p80 = pneg %p79
      // Predicated region
      $region9: #{soft_renderer_forward.3} parent=5 // pred_check
        _
      $region10: #{soft_renderer_forward.3} parent=5 // pred_check_branch
        %82 = sbr.rel (%p79) target = $region12
      $region11: #{soft_renderer_forward.3} parent=5 // pred_region
        %s83 = ssub.s32 %s8, 1
        // Predicated region
        $region13: #{soft_renderer_forward.3} parent=11 // pred_check
          %p84 = pneg %p41
        $region14: #{soft_renderer_forward.3} parent=11 // pred_check_branch
          %86 = sbr.rel (%p84) target = $region16
        $region15: #{soft_renderer_forward.3} parent=11 // pred_region
          %s88 = ssub.s32 576, 576
          %89 = vsyncadd [#allocation3], %s88
          %s91 = sshll.u32 %s0, 4
          %s92 = int_to_ptr.vmem [resolvable:$true] %s91
          %94 = dma.vmem_to_smem %s92, 576, [#allocation2], [#allocation3]
        $region16: #{soft_renderer_forward.3} parent=11 // pred_fallthru
          _
      $region12: #{soft_renderer_forward.3} parent=5 // pred_fallthru
        _
      %p95 = scmp.lt.s32.totalorder %s8, 2
      // Predicated region
      $region17: #{soft_renderer_forward.3} parent=5 // pred_check
        %p96 = pneg %p95
      $region18: #{soft_renderer_forward.3} parent=5 // pred_check_branch
        %98 = sbr.rel (%p96) target = $region20
      $region19: #{soft_renderer_forward.3} parent=5 // pred_region
        _
      $region20: #{soft_renderer_forward.3} parent=5 // pred_fallthru
        _
      %p99 = scmp.le.s32.totalorder 1, %s8
      %p100 = scmp.lt.s32.totalorder %s8, 3
      %p101 = pnand %p99, %p100
      %p102 = pneg %p101
      // Predicated region
      $region21: #{soft_renderer_forward.3} parent=5 // pred_check
        _
      $region22: #{soft_renderer_forward.3} parent=5 // pred_check_branch
        %104 = sbr.rel (%p101) target = $region24
      $region23: #{soft_renderer_forward.3} parent=5 // pred_region
        %s105 = ssub.s32 %s8, 1
        // Predicated region
        $region25: #{soft_renderer_forward.3} parent=23 // pred_check
          %p106 = pneg %p41
        $region26: #{soft_renderer_forward.3} parent=23 // pred_check_branch
          %108 = sbr.rel (%p106) target = $region28
        $region27: #{soft_renderer_forward.3} parent=23 // pred_region
          %109 = dma.done [#allocation3], 576
        $region28: #{soft_renderer_forward.3} parent=23 // pred_fallthru
          _
        %110 = sfence
        %p111 = pneg %p41
        %p112 = pneg %p38
        %p113 = pneg %p69
        %p114 = pneg %p66
        %p115 = scmp.lt.s32.totalorder %s17, 1
        %s116 = scalar_select %p115, %s17, 1
        %p117 = scmp.lt.s32.totalorder %s18, 0
        %s118 = scalar_select %p117, %s18, 0
        %s119 = smul.addr %s116, 4
        %s120 = sadd.s32 %s118, %s119
        %s121 = smul.addr %s120, 2
        %s122 = scalar_lea.vmem %s1, %s121
        %p123 = scmp.lt.s32.totalorder %s17, 1
        %s124 = scalar_select %p123, %s17, 1
        %p125 = scmp.lt.s32.totalorder %s18, 0
        %s126 = scalar_select %p125, %s18, 0
        %s127 = smul.addr %s124, 4
        %s128 = sadd.s32 %s126, %s127
        %s129 = smul.addr %s128, 2
        %s130 = scalar_lea.vmem %s1, %s129
        %v131 = vlaneseq
        %v132 = vshrl.u32 %v131, 7
        %v133 = vlaneseq
        %v134 = vand.u32 %v133, 127
        %s135 = smul.u32 %s18, 2
        %v136 = vstv %s135
        %v137 = vadd.s32 %v136, %v132
        %v138 = vmul.u32 %v137, 128
        %v139 = vadd.s32 %v138, %v134
        %v140 = vshra.s32 %v139, 4
        %v141 = vcvt.s32.f32 %v140
        %v142 = vadd.f32 %v141, 0.5
        %v143 = vand.u32 %v139, 15
        %v144 = vcvt.s32.f32 %v143
        %v145 = vadd.f32 %v144, 0.5
        %s146 = smul.u32 %s17, 2304
        %s147 = sld [smem:[#allocation2 + %s146]]
        %s148 = sadd.s32 %s146, 128
        %s149 = sld [smem:[#allocation2 + %s148]]
        %s150 = sadd.s32 %s146, 256
        %s151 = sld [smem:[#allocation2 + %s150]]
        %s152 = sadd.s32 %s146, 384
        %s153 = sld [smem:[#allocation2 + %s152]]
        %s154 = sadd.s32 %s146, 512
        %s155 = sld [smem:[#allocation2 + %s154]]
        %s156 = sadd.s32 %s146, 640
        %s157 = sld [smem:[#allocation2 + %s156]]
        %s158 = sadd.s32 %s146, 768
        %s159 = sld [smem:[#allocation2 + %s158]]
        %s160 = sadd.s32 %s146, 896
        %s161 = sld [smem:[#allocation2 + %s160]]
        %s162 = sadd.s32 %s146, 1024
        %s163 = sld [smem:[#allocation2 + %s162]]
        %s164 = sadd.s32 %s146, 1152
        %s165 = sld [smem:[#allocation2 + %s164]]
        %s166 = sadd.s32 %s146, 1280
        %s167 = sld [smem:[#allocation2 + %s166]]
        %s168 = sadd.s32 %s146, 1408
        %s169 = sld [smem:[#allocation2 + %s168]]
        %s170 = sadd.s32 %s146, 1536
        %s171 = sld [smem:[#allocation2 + %s170]]
        %s172 = sadd.s32 %s146, 1664
        %s173 = sld [smem:[#allocation2 + %s172]]
        %s174 = sadd.s32 %s146, 1792
        %s175 = sld [smem:[#allocation2 + %s174]]
        %s176 = sadd.s32 %s146, 1920
        %s177 = sld [smem:[#allocation2 + %s176]]
        %s178 = sadd.s32 %s146, 2048
        %s179 = sld [smem:[#allocation2 + %s178]]
        %s180 = sadd.s32 %s146, 2176
        %s181 = sld [smem:[#allocation2 + %s180]]
        %v182 = vstv %s147
        %v183 = vmul.f32 %v182, %v145
        %v184 = vstv %s149
        %v185 = vmul.f32 %v184, %v142
        %v186 = vadd.f32 %v183, %v185
        %v187 = vstv %s151
        %v188 = vadd.f32 %v186, %v187
        %v189 = vstv %s153
        %v190 = vmul.f32 %v189, %v145
        %v191 = vstv %s155
        %v192 = vmul.f32 %v191, %v142
        %v193 = vadd.f32 %v190, %v192
        %v194 = vstv %s157
        %v195 = vadd.f32 %v193, %v194
        %v196 = vsub.f32 1.0, %v188
        %v197 = vsub.f32 %v196, %v195
        %v198 = vstv %s159
        %v199 = vmul.f32 %v198, %v145
        %v200 = vstv %s161
        %v201 = vmul.f32 %v200, %v142
        %v202 = vadd.f32 %v199, %v201
        %v203 = vstv %s163
        %v204 = vadd.f32 %v202, %v203
        %vm205 = vcmp.ge.f32.partialorder %v188, 0.0
        %vm206 = vcmp.ge.f32.partialorder %v195, 0.0
        %vm207 = vmand %vm205, %vm206
        %vm208 = vcmp.ge.f32.partialorder %v197, 0.0
        %vm209 = vmand %vm207, %vm208
        %vm210 = vcmp.gt.f32.partialorder %v204, 1e-06
        %vm211 = vmand %vm209, %vm210
        %vm212 = vcmp.lt.f32.partialorder %v204, 1e+10
        %vm213 = vmand %vm211, %vm212
        %v214 = vstv %s165
        %v215 = vmul.f32 %v214, %v145
        %v216 = vstv %s167
        %v217 = vmul.f32 %v216, %v142
        %v218 = vadd.f32 %v215, %v217
        %v219 = vstv %s169
        %v220 = vadd.f32 %v218, %v219
        %v221 = vstv %s171
        %v222 = vmul.f32 %v221, %v145
        %v223 = vstv %s173
        %v224 = vmul.f32 %v223, %v142
        %v225 = vadd.f32 %v222, %v224
        %v226 = vstv %s175
        %v227 = vadd.f32 %v225, %v226
        %v228 = vstv %s177
        %v229 = vmul.f32 %v228, %v145
        %v230 = vstv %s179
        %v231 = vmul.f32 %v230, %v142
        %v232 = vadd.f32 %v229, %v231
        %v233 = vstv %s181
        %v234 = vadd.f32 %v232, %v233
        %v235 = vsel %vm213, %v204, 1e+10
        %v236 = vsel %vm213, %v220, 0.0
        %v237 = vsel %vm213, %v227, 0.0
        %v238 = vsel %vm213, %v234, 0.0
        %s239 = sadd.s32 %s146, 1
        %s240 = sld [smem:[#allocation2 + %s239]]
        %s241 = sadd.s32 %s146, 129
        %s242 = sld [smem:[#allocation2 + %s241]]
        %s243 = sadd.s32 %s146, 257
        %s244 = sld [smem:[#allocation2 + %s243]]
        %s245 = sadd.s32 %s146, 385
        %s246 = sld [smem:[#allocation2 + %s245]]
        %s247 = sadd.s32 %s146, 513
        %s248 = sld [smem:[#allocation2 + %s247]]
        %s249 = sadd.s32 %s146, 641
        %s250 = sld [smem:[#allocation2 + %s249]]
        %s251 = sadd.s32 %s146, 769
        %s252 = sld [smem:[#allocation2 + %s251]]
        %s253 = sadd.s32 %s146, 897
        %s254 = sld [smem:[#allocation2 + %s253]]
        %s255 = sadd.s32 %s146, 1025
        %s256 = sld [smem:[#allocation2 + %s255]]
        %s257 = sadd.s32 %s146, 1153
        %s258 = sld [smem:[#allocation2 + %s257]]
        %s259 = sadd.s32 %s146, 1281
        %s260 = sld [smem:[#allocation2 + %s259]]
        %s261 = sadd.s32 %s146, 1409
        %s262 = sld [smem:[#allocation2 + %s261]]
        %s263 = sadd.s32 %s146, 1537
        %s264 = sld [smem:[#allocation2 + %s263]]
        %s265 = sadd.s32 %s146, 1665
        %s266 = sld [smem:[#allocation2 + %s265]]
        %s267 = sadd.s32 %s146, 1793
        %s268 = sld [smem:[#allocation2 + %s267]]
        %s269 = sadd.s32 %s146, 1921
        %s270 = sld [smem:[#allocation2 + %s269]]
        %s271 = sadd.s32 %s146, 2049
        %s272 = sld [smem:[#allocation2 + %s271]]
        %s273 = sadd.s32 %s146, 2177
        %s274 = sld [smem:[#allocation2 + %s273]]
        %v275 = vstv %s240
        %v276 = vmul.f32 %v275, %v145
        %v277 = vstv %s242
        %v278 = vmul.f32 %v277, %v142
        %v279 = vadd.f32 %v276, %v278
        %v280 = vstv %s244
        %v281 = vadd.f32 %v279, %v280
        %v282 = vstv %s246
        %v283 = vmul.f32 %v282, %v145
        %v284 = vstv %s248
        %v285 = vmul.f32 %v284, %v142
        %v286 = vadd.f32 %v283, %v285
        %v287 = vstv %s250
        %v288 = vadd.f32 %v286, %v287
        %v289 = vsub.f32 1.0, %v281
        %v290 = vsub.f32 %v289, %v288
        %v291 = vstv %s252
        %v292 = vmul.f32 %v291, %v145
        %v293 = vstv %s254
        %v294 = vmul.f32 %v293, %v142
        %v295 = vadd.f32 %v292, %v294
        %v296 = vstv %s256
        %v297 = vadd.f32 %v295, %v296
        %vm298 = vcmp.ge.f32.partialorder %v281, 0.0
        %vm299 = vcmp.ge.f32.partialorder %v288, 0.0
        %vm300 = vmand %vm298, %vm299
        %vm301 = vcmp.ge.f32.partialorder %v290, 0.0
        %vm302 = vmand %vm300, %vm301
        %vm303 = vcmp.gt.f32.partialorder %v297, 1e-06
        %vm304 = vmand %vm302, %vm303
        %vm305 = vcmp.lt.f32.partialorder %v297, %v235
        %vm306 = vmand %vm304, %vm305
        %v307 = vstv %s258
        %v308 = vmul.f32 %v307, %v145
        %v309 = vstv %s260
        %v310 = vmul.f32 %v309, %v142
        %v311 = vadd.f32 %v308, %v310
        %v312 = vstv %s262
        %v313 = vadd.f32 %v311, %v312
        %v314 = vstv %s264
        %v315 = vmul.f32 %v314, %v145
        %v316 = vstv %s266
        %v317 = vmul.f32 %v316, %v142
        %v318 = vadd.f32 %v315, %v317
        %v319 = vstv %s268
        %v320 = vadd.f32 %v318, %v319
        %v321 = vstv %s270
        %v322 = vmul.f32 %v321, %v145
        %v323 = vstv %s272
        %v324 = vmul.f32 %v323, %v142
        %v325 = vadd.f32 %v322, %v324
        %v326 = vstv %s274
        %v327 = vadd.f32 %v325, %v326
        %v328 = vsel %vm306, %v297, %v235
        %v329 = vsel %vm306, %v313, %v236
        %v330 = vsel %vm306, %v320, %v237
        %v331 = vsel %vm306, %v327, %v238
        %s332 = sadd.s32 %s146, 2
        %s333 = sld [smem:[#allocation2 + %s332]]
        %s334 = sadd.s32 %s146, 130
        %s335 = sld [smem:[#allocation2 + %s334]]
        %s336 = sadd.s32 %s146, 258
        %s337 = sld [smem:[#allocation2 + %s336]]
        %s338 = sadd.s32 %s146, 386
        %s339 = sld [smem:[#allocation2 + %s338]]
        %s340 = sadd.s32 %s146, 514
        %s341 = sld [smem:[#allocation2 + %s340]]
        %s342 = sadd.s32 %s146, 642
        %s343 = sld [smem:[#allocation2 + %s342]]
        %s344 = sadd.s32 %s146, 770
        %s345 = sld [smem:[#allocation2 + %s344]]
        %s346 = sadd.s32 %s146, 898
        %s347 = sld [smem:[#allocation2 + %s346]]
        %s348 = sadd.s32 %s146, 1026
        %s349 = sld [smem:[#allocation2 + %s348]]
        %s350 = sadd.s32 %s146, 1154
        %s351 = sld [smem:[#allocation2 + %s350]]
        %s352 = sadd.s32 %s146, 1282
        %s353 = sld [smem:[#allocation2 + %s352]]
        %s354 = sadd.s32 %s146, 1410
        %s355 = sld [smem:[#allocation2 + %s354]]
        %s356 = sadd.s32 %s146, 1538
        %s357 = sld [smem:[#allocation2 + %s356]]
        %s358 = sadd.s32 %s146, 1666
        %s359 = sld [smem:[#allocation2 + %s358]]
        %s360 = sadd.s32 %s146, 1794
        %s361 = sld [smem:[#allocation2 + %s360]]
        %s362 = sadd.s32 %s146, 1922
        %s363 = sld [smem:[#allocation2 + %s362]]
        %s364 = sadd.s32 %s146, 2050
        %s365 = sld [smem:[#allocation2 + %s364]]
        %s366 = sadd.s32 %s146, 2178
        %s367 = sld [smem:[#allocation2 + %s366]]
        %v368 = vstv %s333
        %v369 = vmul.f32 %v368, %v145
        %v370 = vstv %s335
        %v371 = vmul.f32 %v370, %v142
        %v372 = vadd.f32 %v369, %v371
        %v373 = vstv %s337
        %v374 = vadd.f32 %v372, %v373
        %v375 = vstv %s339
        %v376 = vmul.f32 %v375, %v145
        %v377 = vstv %s341
        %v378 = vmul.f32 %v377, %v142
        %v379 = vadd.f32 %v376, %v378
        %v380 = vstv %s343
        %v381 = vadd.f32 %v379, %v380
        %v382 = vsub.f32 1.0, %v374
        %v383 = vsub.f32 %v382, %v381
        %v384 = vstv %s345
        %v385 = vmul.f32 %v384, %v145
        %v386 = vstv %s347
        %v387 = vmul.f32 %v386, %v142
        %v388 = vadd.f32 %v385, %v387
        %v389 = vstv %s349
        %v390 = vadd.f32 %v388, %v389
        %vm391 = vcmp.ge.f32.partialorder %v374, 0.0
        %vm392 = vcmp.ge.f32.partialorder %v381, 0.0
        %vm393 = vmand %vm391, %vm392
        %vm394 = vcmp.ge.f32.partialorder %v383, 0.0
        %vm395 = vmand %vm393, %vm394
        %vm396 = vcmp.gt.f32.partialorder %v390, 1e-06
        %vm397 = vmand %vm395, %vm396
        %vm398 = vcmp.lt.f32.partialorder %v390, %v328
        %vm399 = vmand %vm397, %vm398
        %v400 = vstv %s351
        %v401 = vmul.f32 %v400, %v145
        %v402 = vstv %s353
        %v403 = vmul.f32 %v402, %v142
        %v404 = vadd.f32 %v401, %v403
        %v405 = vstv %s355
        %v406 = vadd.f32 %v404, %v405
        %v407 = vstv %s357
        %v408 = vmul.f32 %v407, %v145
        %v409 = vstv %s359
        %v410 = vmul.f32 %v409, %v142
        %v411 = vadd.f32 %v408, %v410
        %v412 = vstv %s361
        %v413 = vadd.f32 %v411, %v412
        %v414 = vstv %s363
        %v415 = vmul.f32 %v414, %v145
        %v416 = vstv %s365
        %v417 = vmul.f32 %v416, %v142
        %v418 = vadd.f32 %v415, %v417
        %v419 = vstv %s367
        %v420 = vadd.f32 %v418, %v419
        %v421 = vsel %vm399, %v390, %v328
        %v422 = vsel %vm399, %v406, %v329
        %v423 = vsel %vm399, %v413, %v330
        %v424 = vsel %vm399, %v420, %v331
        %s425 = sadd.s32 %s146, 3
        %s426 = sld [smem:[#allocation2 + %s425]]
        %s427 = sadd.s32 %s146, 131
        %s428 = sld [smem:[#allocation2 + %s427]]
        %s429 = sadd.s32 %s146, 259
        %s430 = sld [smem:[#allocation2 + %s429]]
        %s431 = sadd.s32 %s146, 387
        %s432 = sld [smem:[#allocation2 + %s431]]
        %s433 = sadd.s32 %s146, 515
        %s434 = sld [smem:[#allocation2 + %s433]]
        %s435 = sadd.s32 %s146, 643
        %s436 = sld [smem:[#allocation2 + %s435]]
        %s437 = sadd.s32 %s146, 771
        %s438 = sld [smem:[#allocation2 + %s437]]
        %s439 = sadd.s32 %s146, 899
        %s440 = sld [smem:[#allocation2 + %s439]]
        %s441 = sadd.s32 %s146, 1027
        %s442 = sld [smem:[#allocation2 + %s441]]
        %s443 = sadd.s32 %s146, 1155
        %s444 = sld [smem:[#allocation2 + %s443]]
        %s445 = sadd.s32 %s146, 1283
        %s446 = sld [smem:[#allocation2 + %s445]]
        %s447 = sadd.s32 %s146, 1411
        %s448 = sld [smem:[#allocation2 + %s447]]
        %s449 = sadd.s32 %s146, 1539
        %s450 = sld [smem:[#allocation2 + %s449]]
        %s451 = sadd.s32 %s146, 1667
        %s452 = sld [smem:[#allocation2 + %s451]]
        %s453 = sadd.s32 %s146, 1795
        %s454 = sld [smem:[#allocation2 + %s453]]
        %s455 = sadd.s32 %s146, 1923
        %s456 = sld [smem:[#allocation2 + %s455]]
        %s457 = sadd.s32 %s146, 2051
        %s458 = sld [smem:[#allocation2 + %s457]]
        %s459 = sadd.s32 %s146, 2179
        %s460 = sld [smem:[#allocation2 + %s459]]
        %v461 = vstv %s426
        %v462 = vmul.f32 %v461, %v145
        %v463 = vstv %s428
        %v464 = vmul.f32 %v463, %v142
        %v465 = vadd.f32 %v462, %v464
        %v466 = vstv %s430
        %v467 = vadd.f32 %v465, %v466
        %v468 = vstv %s432
        %v469 = vmul.f32 %v468, %v145
        %v470 = vstv %s434
        %v471 = vmul.f32 %v470, %v142
        %v472 = vadd.f32 %v469, %v471
        %v473 = vstv %s436
        %v474 = vadd.f32 %v472, %v473
        %v475 = vsub.f32 1.0, %v467
        %v476 = vsub.f32 %v475, %v474
        %v477 = vstv %s438
        %v478 = vmul.f32 %v477, %v145
        %v479 = vstv %s440
        %v480 = vmul.f32 %v479, %v142
        %v481 = vadd.f32 %v478, %v480
        %v482 = vstv %s442
        %v483 = vadd.f32 %v481, %v482
        %vm484 = vcmp.ge.f32.partialorder %v467, 0.0
        %vm485 = vcmp.ge.f32.partialorder %v474, 0.0
        %vm486 = vmand %vm484, %vm485
        %vm487 = vcmp.ge.f32.partialorder %v476, 0.0
        %vm488 = vmand %vm486, %vm487
        %vm489 = vcmp.gt.f32.partialorder %v483, 1e-06
        %vm490 = vmand %vm488, %vm489
        %vm491 = vcmp.lt.f32.partialorder %v483, %v421
        %vm492 = vmand %vm490, %vm491
        %v493 = vstv %s444
        %v494 = vmul.f32 %v493, %v145
        %v495 = vstv %s446
        %v496 = vmul.f32 %v495, %v142
        %v497 = vadd.f32 %v494, %v496
        %v498 = vstv %s448
        %v499 = vadd.f32 %v497, %v498
        %v500 = vstv %s450
        %v501 = vmul.f32 %v500, %v145
        %v502 = vstv %s452
        %v503 = vmul.f32 %v502, %v142
        %v504 = vadd.f32 %v501, %v503
        %v505 = vstv %s454
        %v506 = vadd.f32 %v504, %v505
        %v507 = vstv %s456
        %v508 = vmul.f32 %v507, %v145
        %v509 = vstv %s458
        %v510 = vmul.f32 %v509, %v142
        %v511 = vadd.f32 %v508, %v510
        %v512 = vstv %s460
        %v513 = vadd.f32 %v511, %v512
        %v514 = vsel %vm492, %v483, %v421
        %v515 = vsel %vm492, %v499, %v422
        %v516 = vsel %vm492, %v506, %v423
        %v517 = vsel %vm492, %v513, %v424
        %s518 = sadd.s32 %s146, 4
        %s519 = sld [smem:[#allocation2 + %s518]]
        %s520 = sadd.s32 %s146, 132
        %s521 = sld [smem:[#allocation2 + %s520]]
        %s522 = sadd.s32 %s146, 260
        %s523 = sld [smem:[#allocation2 + %s522]]
        %s524 = sadd.s32 %s146, 388
        %s525 = sld [smem:[#allocation2 + %s524]]
        %s526 = sadd.s32 %s146, 516
        %s527 = sld [smem:[#allocation2 + %s526]]
        %s528 = sadd.s32 %s146, 644
        %s529 = sld [smem:[#allocation2 + %s528]]
        %s530 = sadd.s32 %s146, 772
        %s531 = sld [smem:[#allocation2 + %s530]]
        %s532 = sadd.s32 %s146, 900
        %s533 = sld [smem:[#allocation2 + %s532]]
        %s534 = sadd.s32 %s146, 1028
        %s535 = sld [smem:[#allocation2 + %s534]]
        %s536 = sadd.s32 %s146, 1156
        %s537 = sld [smem:[#allocation2 + %s536]]
        %s538 = sadd.s32 %s146, 1284
        %s539 = sld [smem:[#allocation2 + %s538]]
        %s540 = sadd.s32 %s146, 1412
        %s541 = sld [smem:[#allocation2 + %s540]]
        %s542 = sadd.s32 %s146, 1540
        %s543 = sld [smem:[#allocation2 + %s542]]
        %s544 = sadd.s32 %s146, 1668
        %s545 = sld [smem:[#allocation2 + %s544]]
        %s546 = sadd.s32 %s146, 1796
        %s547 = sld [smem:[#allocation2 + %s546]]
        %s548 = sadd.s32 %s146, 1924
        %s549 = sld [smem:[#allocation2 + %s548]]
        %s550 = sadd.s32 %s146, 2052
        %s551 = sld [smem:[#allocation2 + %s550]]
        %s552 = sadd.s32 %s146, 2180
        %s553 = sld [smem:[#allocation2 + %s552]]
        %v554 = vstv %s519
        %v555 = vmul.f32 %v554, %v145
        %v556 = vstv %s521
        %v557 = vmul.f32 %v556, %v142
        %v558 = vadd.f32 %v555, %v557
        %v559 = vstv %s523
        %v560 = vadd.f32 %v558, %v559
        %v561 = vstv %s525
        %v562 = vmul.f32 %v561, %v145
        %v563 = vstv %s527
        %v564 = vmul.f32 %v563, %v142
        %v565 = vadd.f32 %v562, %v564
        %v566 = vstv %s529
        %v567 = vadd.f32 %v565, %v566
        %v568 = vsub.f32 1.0, %v560
        %v569 = vsub.f32 %v568, %v567
        %v570 = vstv %s531
        %v571 = vmul.f32 %v570, %v145
        %v572 = vstv %s533
        %v573 = vmul.f32 %v572, %v142
        %v574 = vadd.f32 %v571, %v573
        %v575 = vstv %s535
        %v576 = vadd.f32 %v574, %v575
        %vm577 = vcmp.ge.f32.partialorder %v560, 0.0
        %vm578 = vcmp.ge.f32.partialorder %v567, 0.0
        %vm579 = vmand %vm577, %vm578
        %vm580 = vcmp.ge.f32.partialorder %v569, 0.0
        %vm581 = vmand %vm579, %vm580
        %vm582 = vcmp.gt.f32.partialorder %v576, 1e-06
        %vm583 = vmand %vm581, %vm582
        %vm584 = vcmp.lt.f32.partialorder %v576, %v514
        %vm585 = vmand %vm583, %vm584
        %v586 = vstv %s537
        %v587 = vmul.f32 %v586, %v145
        %v588 = vstv %s539
        %v589 = vmul.f32 %v588, %v142
        %v590 = vadd.f32 %v587, %v589
        %v591 = vstv %s541
        %v592 = vadd.f32 %v590, %v591
        %v593 = vstv %s543
        %v594 = vmul.f32 %v593, %v145
        %v595 = vstv %s545
        %v596 = vmul.f32 %v595, %v142
        %v597 = vadd.f32 %v594, %v596
        %v598 = vstv %s547
        %v599 = vadd.f32 %v597, %v598
        %v600 = vstv %s549
        %v601 = vmul.f32 %v600, %v145
        %v602 = vstv %s551
        %v603 = vmul.f32 %v602, %v142
        %v604 = vadd.f32 %v601, %v603
        %v605 = vstv %s553
        %v606 = vadd.f32 %v604, %v605
        %v607 = vsel %vm585, %v576, %v514
        %v608 = vsel %vm585, %v592, %v515
        %v609 = vsel %vm585, %v599, %v516
        %v610 = vsel %vm585, %v606, %v517
        %s611 = sadd.s32 %s146, 5
        %s612 = sld [smem:[#allocation2 + %s611]]
        %s613 = sadd.s32 %s146, 133
        %s614 = sld [smem:[#allocation2 + %s613]]
        %s615 = sadd.s32 %s146, 261
        %s616 = sld [smem:[#allocation2 + %s615]]
        %s617 = sadd.s32 %s146, 389
        %s618 = sld [smem:[#allocation2 + %s617]]
        %s619 = sadd.s32 %s146, 517
        %s620 = sld [smem:[#allocation2 + %s619]]
        %s621 = sadd.s32 %s146, 645
        %s622 = sld [smem:[#allocation2 + %s621]]
        %s623 = sadd.s32 %s146, 773
        %s624 = sld [smem:[#allocation2 + %s623]]
        %s625 = sadd.s32 %s146, 901
        %s626 = sld [smem:[#allocation2 + %s625]]
        %s627 = sadd.s32 %s146, 1029
        %s628 = sld [smem:[#allocation2 + %s627]]
        %s629 = sadd.s32 %s146, 1157
        %s630 = sld [smem:[#allocation2 + %s629]]
        %s631 = sadd.s32 %s146, 1285
        %s632 = sld [smem:[#allocation2 + %s631]]
        %s633 = sadd.s32 %s146, 1413
        %s634 = sld [smem:[#allocation2 + %s633]]
        %s635 = sadd.s32 %s146, 1541
        %s636 = sld [smem:[#allocation2 + %s635]]
        %s637 = sadd.s32 %s146, 1669
        %s638 = sld [smem:[#allocation2 + %s637]]
        %s639 = sadd.s32 %s146, 1797
        %s640 = sld [smem:[#allocation2 + %s639]]
        %s641 = sadd.s32 %s146, 1925
        %s642 = sld [smem:[#allocation2 + %s641]]
        %s643 = sadd.s32 %s146, 2053
        %s644 = sld [smem:[#allocation2 + %s643]]
        %s645 = sadd.s32 %s146, 2181
        %s646 = sld [smem:[#allocation2 + %s645]]
        %v647 = vstv %s612
        %v648 = vmul.f32 %v647, %v145
        %v649 = vstv %s614
        %v650 = vmul.f32 %v649, %v142
        %v651 = vadd.f32 %v648, %v650
        %v652 = vstv %s616
        %v653 = vadd.f32 %v651, %v652
        %v654 = vstv %s618
        %v655 = vmul.f32 %v654, %v145
        %v656 = vstv %s620
        %v657 = vmul.f32 %v656, %v142
        %v658 = vadd.f32 %v655, %v657
        %v659 = vstv %s622
        %v660 = vadd.f32 %v658, %v659
        %v661 = vsub.f32 1.0, %v653
        %v662 = vsub.f32 %v661, %v660
        %v663 = vstv %s624
        %v664 = vmul.f32 %v663, %v145
        %v665 = vstv %s626
        %v666 = vmul.f32 %v665, %v142
        %v667 = vadd.f32 %v664, %v666
        %v668 = vstv %s628
        %v669 = vadd.f32 %v667, %v668
        %vm670 = vcmp.ge.f32.partialorder %v653, 0.0
        %vm671 = vcmp.ge.f32.partialorder %v660, 0.0
        %vm672 = vmand %vm670, %vm671
        %vm673 = vcmp.ge.f32.partialorder %v662, 0.0
        %vm674 = vmand %vm672, %vm673
        %vm675 = vcmp.gt.f32.partialorder %v669, 1e-06
        %vm676 = vmand %vm674, %vm675
        %vm677 = vcmp.lt.f32.partialorder %v669, %v607
        %vm678 = vmand %vm676, %vm677
        %v679 = vstv %s630
        %v680 = vmul.f32 %v679, %v145
        %v681 = vstv %s632
        %v682 = vmul.f32 %v681, %v142
        %v683 = vadd.f32 %v680, %v682
        %v684 = vstv %s634
        %v685 = vadd.f32 %v683, %v684
        %v686 = vstv %s636
        %v687 = vmul.f32 %v686, %v145
        %v688 = vstv %s638
        %v689 = vmul.f32 %v688, %v142
        %v690 = vadd.f32 %v687, %v689
        %v691 = vstv %s640
        %v692 = vadd.f32 %v690, %v691
        %v693 = vstv %s642
        %v694 = vmul.f32 %v693, %v145
        %v695 = vstv %s644
        %v696 = vmul.f32 %v695, %v142
        %v697 = vadd.f32 %v694, %v696
        %v698 = vstv %s646
        %v699 = vadd.f32 %v697, %v698
        %v700 = vsel %vm678, %v669, %v607
        %v701 = vsel %vm678, %v685, %v608
        %v702 = vsel %vm678, %v692, %v609
        %v703 = vsel %vm678, %v699, %v610
        %s704 = sadd.s32 %s146, 6
        %s705 = sld [smem:[#allocation2 + %s704]]
        %s706 = sadd.s32 %s146, 134
        %s707 = sld [smem:[#allocation2 + %s706]]
        %s708 = sadd.s32 %s146, 262
        %s709 = sld [smem:[#allocation2 + %s708]]
        %s710 = sadd.s32 %s146, 390
        %s711 = sld [smem:[#allocation2 + %s710]]
        %s712 = sadd.s32 %s146, 518
        %s713 = sld [smem:[#allocation2 + %s712]]
        %s714 = sadd.s32 %s146, 646
        %s715 = sld [smem:[#allocation2 + %s714]]
        %s716 = sadd.s32 %s146, 774
        %s717 = sld [smem:[#allocation2 + %s716]]
        %s718 = sadd.s32 %s146, 902
        %s719 = sld [smem:[#allocation2 + %s718]]
        %s720 = sadd.s32 %s146, 1030
        %s721 = sld [smem:[#allocation2 + %s720]]
        %s722 = sadd.s32 %s146, 1158
        %s723 = sld [smem:[#allocation2 + %s722]]
        %s724 = sadd.s32 %s146, 1286
        %s725 = sld [smem:[#allocation2 + %s724]]
        %s726 = sadd.s32 %s146, 1414
        %s727 = sld [smem:[#allocation2 + %s726]]
        %s728 = sadd.s32 %s146, 1542
        %s729 = sld [smem:[#allocation2 + %s728]]
        %s730 = sadd.s32 %s146, 1670
        %s731 = sld [smem:[#allocation2 + %s730]]
        %s732 = sadd.s32 %s146, 1798
        %s733 = sld [smem:[#allocation2 + %s732]]
        %s734 = sadd.s32 %s146, 1926
        %s735 = sld [smem:[#allocation2 + %s734]]
        %s736 = sadd.s32 %s146, 2054
        %s737 = sld [smem:[#allocation2 + %s736]]
        %s738 = sadd.s32 %s146, 2182
        %s739 = sld [smem:[#allocation2 + %s738]]
        %v740 = vstv %s705
        %v741 = vmul.f32 %v740, %v145
        %v742 = vstv %s707
        %v743 = vmul.f32 %v742, %v142
        %v744 = vadd.f32 %v741, %v743
        %v745 = vstv %s709
        %v746 = vadd.f32 %v744, %v745
        %v747 = vstv %s711
        %v748 = vmul.f32 %v747, %v145
        %v749 = vstv %s713
        %v750 = vmul.f32 %v749, %v142
        %v751 = vadd.f32 %v748, %v750
        %v752 = vstv %s715
        %v753 = vadd.f32 %v751, %v752
        %v754 = vsub.f32 1.0, %v746
        %v755 = vsub.f32 %v754, %v753
        %v756 = vstv %s717
        %v757 = vmul.f32 %v756, %v145
        %v758 = vstv %s719
        %v759 = vmul.f32 %v758, %v142
        %v760 = vadd.f32 %v757, %v759
        %v761 = vstv %s721
        %v762 = vadd.f32 %v760, %v761
        %vm763 = vcmp.ge.f32.partialorder %v746, 0.0
        %vm764 = vcmp.ge.f32.partialorder %v753, 0.0
        %vm765 = vmand %vm763, %vm764
        %vm766 = vcmp.ge.f32.partialorder %v755, 0.0
        %vm767 = vmand %vm765, %vm766
        %vm768 = vcmp.gt.f32.partialorder %v762, 1e-06
        %vm769 = vmand %vm767, %vm768
        %vm770 = vcmp.lt.f32.partialorder %v762, %v700
        %vm771 = vmand %vm769, %vm770
        %v772 = vstv %s723
        %v773 = vmul.f32 %v772, %v145
        %v774 = vstv %s725
        %v775 = vmul.f32 %v774, %v142
        %v776 = vadd.f32 %v773, %v775
        %v777 = vstv %s727
        %v778 = vadd.f32 %v776, %v777
        %v779 = vstv %s729
        %v780 = vmul.f32 %v779, %v145
        %v781 = vstv %s731
        %v782 = vmul.f32 %v781, %v142
        %v783 = vadd.f32 %v780, %v782
        %v784 = vstv %s733
        %v785 = vadd.f32 %v783, %v784
        %v786 = vstv %s735
        %v787 = vmul.f32 %v786, %v145
        %v788 = vstv %s737
        %v789 = vmul.f32 %v788, %v142
        %v790 = vadd.f32 %v787, %v789
        %v791 = vstv %s739
        %v792 = vadd.f32 %v790, %v791
        %v793 = vsel %vm771, %v762, %v700
        %v794 = vsel %vm771, %v778, %v701
        %v795 = vsel %vm771, %v785, %v702
        %v796 = vsel %vm771, %v792, %v703
        %s797 = sadd.s32 %s146, 7
        %s798 = sld [smem:[#allocation2 + %s797]]
        %s799 = sadd.s32 %s146, 135
        %s800 = sld [smem:[#allocation2 + %s799]]
        %s801 = sadd.s32 %s146, 263
        %s802 = sld [smem:[#allocation2 + %s801]]
        %s803 = sadd.s32 %s146, 391
        %s804 = sld [smem:[#allocation2 + %s803]]
        %s805 = sadd.s32 %s146, 519
        %s806 = sld [smem:[#allocation2 + %s805]]
        %s807 = sadd.s32 %s146, 647
        %s808 = sld [smem:[#allocation2 + %s807]]
        %s809 = sadd.s32 %s146, 775
        %s810 = sld [smem:[#allocation2 + %s809]]
        %s811 = sadd.s32 %s146, 903
        %s812 = sld [smem:[#allocation2 + %s811]]
        %s813 = sadd.s32 %s146, 1031
        %s814 = sld [smem:[#allocation2 + %s813]]
        %s815 = sadd.s32 %s146, 1159
        %s816 = sld [smem:[#allocation2 + %s815]]
        %s817 = sadd.s32 %s146, 1287
        %s818 = sld [smem:[#allocation2 + %s817]]
        %s819 = sadd.s32 %s146, 1415
        %s820 = sld [smem:[#allocation2 + %s819]]
        %s821 = sadd.s32 %s146, 1543
        %s822 = sld [smem:[#allocation2 + %s821]]
        %s823 = sadd.s32 %s146, 1671
        %s824 = sld [smem:[#allocation2 + %s823]]
        %s825 = sadd.s32 %s146, 1799
        %s826 = sld [smem:[#allocation2 + %s825]]
        %s827 = sadd.s32 %s146, 1927
        %s828 = sld [smem:[#allocation2 + %s827]]
        %s829 = sadd.s32 %s146, 2055
        %s830 = sld [smem:[#allocation2 + %s829]]
        %s831 = sadd.s32 %s146, 2183
        %s832 = sld [smem:[#allocation2 + %s831]]
        %v833 = vstv %s798
        %v834 = vmul.f32 %v833, %v145
        %v835 = vstv %s800
        %v836 = vmul.f32 %v835, %v142
        %v837 = vadd.f32 %v834, %v836
        %v838 = vstv %s802
        %v839 = vadd.f32 %v837, %v838
        %v840 = vstv %s804
        %v841 = vmul.f32 %v840, %v145
        %v842 = vstv %s806
        %v843 = vmul.f32 %v842, %v142
        %v844 = vadd.f32 %v841, %v843
        %v845 = vstv %s808
        %v846 = vadd.f32 %v844, %v845
        %v847 = vsub.f32 1.0, %v839
        %v848 = vsub.f32 %v847, %v846
        %v849 = vstv %s810
        %v850 = vmul.f32 %v849, %v145
        %v851 = vstv %s812
        %v852 = vmul.f32 %v851, %v142
        %v853 = vadd.f32 %v850, %v852
        %v854 = vstv %s814
        %v855 = vadd.f32 %v853, %v854
        %vm856 = vcmp.ge.f32.partialorder %v839, 0.0
        %vm857 = vcmp.ge.f32.partialorder %v846, 0.0
        %vm858 = vmand %vm856, %vm857
        %vm859 = vcmp.ge.f32.partialorder %v848, 0.0
        %vm860 = vmand %vm858, %vm859
        %vm861 = vcmp.gt.f32.partialorder %v855, 1e-06
        %vm862 = vmand %vm860, %vm861
        %vm863 = vcmp.lt.f32.partialorder %v855, %v793
        %vm864 = vmand %vm862, %vm863
        %v865 = vstv %s816
        %v866 = vmul.f32 %v865, %v145
        %v867 = vstv %s818
        %v868 = vmul.f32 %v867, %v142
        %v869 = vadd.f32 %v866, %v868
        %v870 = vstv %s820
        %v871 = vadd.f32 %v869, %v870
        %v872 = vstv %s822
        %v873 = vmul.f32 %v872, %v145
        %v874 = vstv %s824
        %v875 = vmul.f32 %v874, %v142
        %v876 = vadd.f32 %v873, %v875
        %v877 = vstv %s826
        %v878 = vadd.f32 %v876, %v877
        %v879 = vstv %s828
        %v880 = vmul.f32 %v879, %v145
        %v881 = vstv %s830
        %v882 = vmul.f32 %v881, %v142
        %v883 = vadd.f32 %v880, %v882
        %v884 = vstv %s832
        %v885 = vadd.f32 %v883, %v884
        %v886 = vsel %vm864, %v855, %v793
        %v887 = vsel %vm864, %v871, %v794
        %v888 = vsel %vm864, %v878, %v795
        %v889 = vsel %vm864, %v885, %v796
        %s890 = sadd.s32 %s146, 8
        %s891 = sld [smem:[#allocation2 + %s890]]
        %s892 = sadd.s32 %s146, 136
        %s893 = sld [smem:[#allocation2 + %s892]]
        %s894 = sadd.s32 %s146, 264
        %s895 = sld [smem:[#allocation2 + %s894]]
        %s896 = sadd.s32 %s146, 392
        %s897 = sld [smem:[#allocation2 + %s896]]
        %s898 = sadd.s32 %s146, 520
        %s899 = sld [smem:[#allocation2 + %s898]]
        %s900 = sadd.s32 %s146, 648
        %s901 = sld [smem:[#allocation2 + %s900]]
        %s902 = sadd.s32 %s146, 776
        %s903 = sld [smem:[#allocation2 + %s902]]
        %s904 = sadd.s32 %s146, 904
        %s905 = sld [smem:[#allocation2 + %s904]]
        %s906 = sadd.s32 %s146, 1032
        %s907 = sld [smem:[#allocation2 + %s906]]
        %s908 = sadd.s32 %s146, 1160
        %s909 = sld [smem:[#allocation2 + %s908]]
        %s910 = sadd.s32 %s146, 1288
        %s911 = sld [smem:[#allocation2 + %s910]]
        %s912 = sadd.s32 %s146, 1416
        %s913 = sld [smem:[#allocation2 + %s912]]
        %s914 = sadd.s32 %s146, 1544
        %s915 = sld [smem:[#allocation2 + %s914]]
        %s916 = sadd.s32 %s146, 1672
        %s917 = sld [smem:[#allocation2 + %s916]]
        %s918 = sadd.s32 %s146, 1800
        %s919 = sld [smem:[#allocation2 + %s918]]
        %s920 = sadd.s32 %s146, 1928
        %s921 = sld [smem:[#allocation2 + %s920]]
        %s922 = sadd.s32 %s146, 2056
        %s923 = sld [smem:[#allocation2 + %s922]]
        %s924 = sadd.s32 %s146, 2184
        %s925 = sld [smem:[#allocation2 + %s924]]
        %v926 = vstv %s891
        %v927 = vmul.f32 %v926, %v145
        %v928 = vstv %s893
        %v929 = vmul.f32 %v928, %v142
        %v930 = vadd.f32 %v927, %v929
        %v931 = vstv %s895
        %v932 = vadd.f32 %v930, %v931
        %v933 = vstv %s897
        %v934 = vmul.f32 %v933, %v145
        %v935 = vstv %s899
        %v936 = vmul.f32 %v935, %v142
        %v937 = vadd.f32 %v934, %v936
        %v938 = vstv %s901
        %v939 = vadd.f32 %v937, %v938
        %v940 = vsub.f32 1.0, %v932
        %v941 = vsub.f32 %v940, %v939
        %v942 = vstv %s903
        %v943 = vmul.f32 %v942, %v145
        %v944 = vstv %s905
        %v945 = vmul.f32 %v944, %v142
        %v946 = vadd.f32 %v943, %v945
        %v947 = vstv %s907
        %v948 = vadd.f32 %v946, %v947
        %vm949 = vcmp.ge.f32.partialorder %v932, 0.0
        %vm950 = vcmp.ge.f32.partialorder %v939, 0.0
        %vm951 = vmand %vm949, %vm950
        %vm952 = vcmp.ge.f32.partialorder %v941, 0.0
        %vm953 = vmand %vm951, %vm952
        %vm954 = vcmp.gt.f32.partialorder %v948, 1e-06
        %vm955 = vmand %vm953, %vm954
        %vm956 = vcmp.lt.f32.partialorder %v948, %v886
        %vm957 = vmand %vm955, %vm956
        %v958 = vstv %s909
        %v959 = vmul.f32 %v958, %v145
        %v960 = vstv %s911
        %v961 = vmul.f32 %v960, %v142
        %v962 = vadd.f32 %v959, %v961
        %v963 = vstv %s913
        %v964 = vadd.f32 %v962, %v963
        %v965 = vstv %s915
        %v966 = vmul.f32 %v965, %v145
        %v967 = vstv %s917
        %v968 = vmul.f32 %v967, %v142
        %v969 = vadd.f32 %v966, %v968
        %v970 = vstv %s919
        %v971 = vadd.f32 %v969, %v970
        %v972 = vstv %s921
        %v973 = vmul.f32 %v972, %v145
        %v974 = vstv %s923
        %v975 = vmul.f32 %v974, %v142
        %v976 = vadd.f32 %v973, %v975
        %v977 = vstv %s925
        %v978 = vadd.f32 %v976, %v977
        %v979 = vsel %vm957, %v948, %v886
        %v980 = vsel %vm957, %v964, %v887
        %v981 = vsel %vm957, %v971, %v888
        %v982 = vsel %vm957, %v978, %v889
        %s983 = sadd.s32 %s146, 9
        %s984 = sld [smem:[#allocation2 + %s983]]
        %s985 = sadd.s32 %s146, 137
        %s986 = sld [smem:[#allocation2 + %s985]]
        %s987 = sadd.s32 %s146, 265
        %s988 = sld [smem:[#allocation2 + %s987]]
        %s989 = sadd.s32 %s146, 393
        %s990 = sld [smem:[#allocation2 + %s989]]
        %s991 = sadd.s32 %s146, 521
        %s992 = sld [smem:[#allocation2 + %s991]]
        %s993 = sadd.s32 %s146, 649
        %s994 = sld [smem:[#allocation2 + %s993]]
        %s995 = sadd.s32 %s146, 777
        %s996 = sld [smem:[#allocation2 + %s995]]
        %s997 = sadd.s32 %s146, 905
        %s998 = sld [smem:[#allocation2 + %s997]]
        %s999 = sadd.s32 %s146, 1033
        %s1000 = sld [smem:[#allocation2 + %s999]]
        %s1001 = sadd.s32 %s146, 1161
        %s1002 = sld [smem:[#allocation2 + %s1001]]
        %s1003 = sadd.s32 %s146, 1289
        %s1004 = sld [smem:[#allocation2 + %s1003]]
        %s1005 = sadd.s32 %s146, 1417
        %s1006 = sld [smem:[#allocation2 + %s1005]]
        %s1007 = sadd.s32 %s146, 1545
        %s1008 = sld [smem:[#allocation2 + %s1007]]
        %s1009 = sadd.s32 %s146, 1673
        %s1010 = sld [smem:[#allocation2 + %s1009]]
        %s1011 = sadd.s32 %s146, 1801
        %s1012 = sld [smem:[#allocation2 + %s1011]]
        %s1013 = sadd.s32 %s146, 1929
        %s1014 = sld [smem:[#allocation2 + %s1013]]
        %s1015 = sadd.s32 %s146, 2057
        %s1016 = sld [smem:[#allocation2 + %s1015]]
        %s1017 = sadd.s32 %s146, 2185
        %s1018 = sld [smem:[#allocation2 + %s1017]]
        %v1019 = vstv %s984
        %v1020 = vmul.f32 %v1019, %v145
        %v1021 = vstv %s986
        %v1022 = vmul.f32 %v1021, %v142
        %v1023 = vadd.f32 %v1020, %v1022
        %v1024 = vstv %s988
        %v1025 = vadd.f32 %v1023, %v1024
        %v1026 = vstv %s990
        %v1027 = vmul.f32 %v1026, %v145
        %v1028 = vstv %s992
        %v1029 = vmul.f32 %v1028, %v142
        %v1030 = vadd.f32 %v1027, %v1029
        %v1031 = vstv %s994
        %v1032 = vadd.f32 %v1030, %v1031
        %v1033 = vsub.f32 1.0, %v1025
        %v1034 = vsub.f32 %v1033, %v1032
        %v1035 = vstv %s996
        %v1036 = vmul.f32 %v1035, %v145
        %v1037 = vstv %s998
        %v1038 = vmul.f32 %v1037, %v142
        %v1039 = vadd.f32 %v1036, %v1038
        %v1040 = vstv %s1000
        %v1041 = vadd.f32 %v1039, %v1040
        %vm1042 = vcmp.ge.f32.partialorder %v1025, 0.0
        %vm1043 = vcmp.ge.f32.partialorder %v1032, 0.0
        %vm1044 = vmand %vm1042, %vm1043
        %vm1045 = vcmp.ge.f32.partialorder %v1034, 0.0
        %vm1046 = vmand %vm1044, %vm1045
        %vm1047 = vcmp.gt.f32.partialorder %v1041, 1e-06
        %vm1048 = vmand %vm1046, %vm1047
        %vm1049 = vcmp.lt.f32.partialorder %v1041, %v979
        %vm1050 = vmand %vm1048, %vm1049
        %v1051 = vstv %s1002
        %v1052 = vmul.f32 %v1051, %v145
        %v1053 = vstv %s1004
        %v1054 = vmul.f32 %v1053, %v142
        %v1055 = vadd.f32 %v1052, %v1054
        %v1056 = vstv %s1006
        %v1057 = vadd.f32 %v1055, %v1056
        %v1058 = vstv %s1008
        %v1059 = vmul.f32 %v1058, %v145
        %v1060 = vstv %s1010
        %v1061 = vmul.f32 %v1060, %v142
        %v1062 = vadd.f32 %v1059, %v1061
        %v1063 = vstv %s1012
        %v1064 = vadd.f32 %v1062, %v1063
        %v1065 = vstv %s1014
        %v1066 = vmul.f32 %v1065, %v145
        %v1067 = vstv %s1016
        %v1068 = vmul.f32 %v1067, %v142
        %v1069 = vadd.f32 %v1066, %v1068
        %v1070 = vstv %s1018
        %v1071 = vadd.f32 %v1069, %v1070
        %v1072 = vsel %vm1050, %v1041, %v979
        %v1073 = vsel %vm1050, %v1057, %v980
        %v1074 = vsel %vm1050, %v1064, %v981
        %v1075 = vsel %vm1050, %v1071, %v982
        %s1076 = sadd.s32 %s146, 10
        %s1077 = sld [smem:[#allocation2 + %s1076]]
        %s1078 = sadd.s32 %s146, 138
        %s1079 = sld [smem:[#allocation2 + %s1078]]
        %s1080 = sadd.s32 %s146, 266
        %s1081 = sld [smem:[#allocation2 + %s1080]]
        %s1082 = sadd.s32 %s146, 394
        %s1083 = sld [smem:[#allocation2 + %s1082]]
        %s1084 = sadd.s32 %s146, 522
        %s1085 = sld [smem:[#allocation2 + %s1084]]
        %s1086 = sadd.s32 %s146, 650
        %s1087 = sld [smem:[#allocation2 + %s1086]]
        %s1088 = sadd.s32 %s146, 778
        %s1089 = sld [smem:[#allocation2 + %s1088]]
        %s1090 = sadd.s32 %s146, 906
        %s1091 = sld [smem:[#allocation2 + %s1090]]
        %s1092 = sadd.s32 %s146, 1034
        %s1093 = sld [smem:[#allocation2 + %s1092]]
        %s1094 = sadd.s32 %s146, 1162
        %s1095 = sld [smem:[#allocation2 + %s1094]]
        %s1096 = sadd.s32 %s146, 1290
        %s1097 = sld [smem:[#allocation2 + %s1096]]
        %s1098 = sadd.s32 %s146, 1418
        %s1099 = sld [smem:[#allocation2 + %s1098]]
        %s1100 = sadd.s32 %s146, 1546
        %s1101 = sld [smem:[#allocation2 + %s1100]]
        %s1102 = sadd.s32 %s146, 1674
        %s1103 = sld [smem:[#allocation2 + %s1102]]
        %s1104 = sadd.s32 %s146, 1802
        %s1105 = sld [smem:[#allocation2 + %s1104]]
        %s1106 = sadd.s32 %s146, 1930
        %s1107 = sld [smem:[#allocation2 + %s1106]]
        %s1108 = sadd.s32 %s146, 2058
        %s1109 = sld [smem:[#allocation2 + %s1108]]
        %s1110 = sadd.s32 %s146, 2186
        %s1111 = sld [smem:[#allocation2 + %s1110]]
        %v1112 = vstv %s1077
        %v1113 = vmul.f32 %v1112, %v145
        %v1114 = vstv %s1079
        %v1115 = vmul.f32 %v1114, %v142
        %v1116 = vadd.f32 %v1113, %v1115
        %v1117 = vstv %s1081
        %v1118 = vadd.f32 %v1116, %v1117
        %v1119 = vstv %s1083
        %v1120 = vmul.f32 %v1119, %v145
        %v1121 = vstv %s1085
        %v1122 = vmul.f32 %v1121, %v142
        %v1123 = vadd.f32 %v1120, %v1122
        %v1124 = vstv %s1087
        %v1125 = vadd.f32 %v1123, %v1124
        %v1126 = vsub.f32 1.0, %v1118
        %v1127 = vsub.f32 %v1126, %v1125
        %v1128 = vstv %s1089
        %v1129 = vmul.f32 %v1128, %v145
        %v1130 = vstv %s1091
        %v1131 = vmul.f32 %v1130, %v142
        %v1132 = vadd.f32 %v1129, %v1131
        %v1133 = vstv %s1093
        %v1134 = vadd.f32 %v1132, %v1133
        %vm1135 = vcmp.ge.f32.partialorder %v1118, 0.0
        %vm1136 = vcmp.ge.f32.partialorder %v1125, 0.0
        %vm1137 = vmand %vm1135, %vm1136
        %vm1138 = vcmp.ge.f32.partialorder %v1127, 0.0
        %vm1139 = vmand %vm1137, %vm1138
        %vm1140 = vcmp.gt.f32.partialorder %v1134, 1e-06
        %vm1141 = vmand %vm1139, %vm1140
        %vm1142 = vcmp.lt.f32.partialorder %v1134, %v1072
        %vm1143 = vmand %vm1141, %vm1142
        %v1144 = vstv %s1095
        %v1145 = vmul.f32 %v1144, %v145
        %v1146 = vstv %s1097
        %v1147 = vmul.f32 %v1146, %v142
        %v1148 = vadd.f32 %v1145, %v1147
        %v1149 = vstv %s1099
        %v1150 = vadd.f32 %v1148, %v1149
        %v1151 = vstv %s1101
        %v1152 = vmul.f32 %v1151, %v145
        %v1153 = vstv %s1103
        %v1154 = vmul.f32 %v1153, %v142
        %v1155 = vadd.f32 %v1152, %v1154
        %v1156 = vstv %s1105
        %v1157 = vadd.f32 %v1155, %v1156
        %v1158 = vstv %s1107
        %v1159 = vmul.f32 %v1158, %v145
        %v1160 = vstv %s1109
        %v1161 = vmul.f32 %v1160, %v142
        %v1162 = vadd.f32 %v1159, %v1161
        %v1163 = vstv %s1111
        %v1164 = vadd.f32 %v1162, %v1163
        %v1165 = vsel %vm1143, %v1134, %v1072
        %v1166 = vsel %vm1143, %v1150, %v1073
        %v1167 = vsel %vm1143, %v1157, %v1074
        %v1168 = vsel %vm1143, %v1164, %v1075
        %s1169 = sadd.s32 %s146, 11
        %s1170 = sld [smem:[#allocation2 + %s1169]]
        %s1171 = sadd.s32 %s146, 139
        %s1172 = sld [smem:[#allocation2 + %s1171]]
        %s1173 = sadd.s32 %s146, 267
        %s1174 = sld [smem:[#allocation2 + %s1173]]
        %s1175 = sadd.s32 %s146, 395
        %s1176 = sld [smem:[#allocation2 + %s1175]]
        %s1177 = sadd.s32 %s146, 523
        %s1178 = sld [smem:[#allocation2 + %s1177]]
        %s1179 = sadd.s32 %s146, 651
        %s1180 = sld [smem:[#allocation2 + %s1179]]
        %s1181 = sadd.s32 %s146, 779
        %s1182 = sld [smem:[#allocation2 + %s1181]]
        %s1183 = sadd.s32 %s146, 907
        %s1184 = sld [smem:[#allocation2 + %s1183]]
        %s1185 = sadd.s32 %s146, 1035
        %s1186 = sld [smem:[#allocation2 + %s1185]]
        %s1187 = sadd.s32 %s146, 1163
        %s1188 = sld [smem:[#allocation2 + %s1187]]
        %s1189 = sadd.s32 %s146, 1291
        %s1190 = sld [smem:[#allocation2 + %s1189]]
        %s1191 = sadd.s32 %s146, 1419
        %s1192 = sld [smem:[#allocation2 + %s1191]]
        %s1193 = sadd.s32 %s146, 1547
        %s1194 = sld [smem:[#allocation2 + %s1193]]
        %s1195 = sadd.s32 %s146, 1675
        %s1196 = sld [smem:[#allocation2 + %s1195]]
        %s1197 = sadd.s32 %s146, 1803
        %s1198 = sld [smem:[#allocation2 + %s1197]]
        %s1199 = sadd.s32 %s146, 1931
        %s1200 = sld [smem:[#allocation2 + %s1199]]
        %s1201 = sadd.s32 %s146, 2059
        %s1202 = sld [smem:[#allocation2 + %s1201]]
        %s1203 = sadd.s32 %s146, 2187
        %s1204 = sld [smem:[#allocation2 + %s1203]]
        %v1205 = vstv %s1170
        %v1206 = vmul.f32 %v1205, %v145
        %v1207 = vstv %s1172
        %v1208 = vmul.f32 %v1207, %v142
        %v1209 = vadd.f32 %v1206, %v1208
        %v1210 = vstv %s1174
        %v1211 = vadd.f32 %v1209, %v1210
        %v1212 = vstv %s1176
        %v1213 = vmul.f32 %v1212, %v145
        %v1214 = vstv %s1178
        %v1215 = vmul.f32 %v1214, %v142
        %v1216 = vadd.f32 %v1213, %v1215
        %v1217 = vstv %s1180
        %v1218 = vadd.f32 %v1216, %v1217
        %v1219 = vsub.f32 1.0, %v1211
        %v1220 = vsub.f32 %v1219, %v1218
        %v1221 = vstv %s1182
        %v1222 = vmul.f32 %v1221, %v145
        %v1223 = vstv %s1184
        %v1224 = vmul.f32 %v1223, %v142
        %v1225 = vadd.f32 %v1222, %v1224
        %v1226 = vstv %s1186
        %v1227 = vadd.f32 %v1225, %v1226
        %vm1228 = vcmp.ge.f32.partialorder %v1211, 0.0
        %vm1229 = vcmp.ge.f32.partialorder %v1218, 0.0
        %vm1230 = vmand %vm1228, %vm1229
        %vm1231 = vcmp.ge.f32.partialorder %v1220, 0.0
        %vm1232 = vmand %vm1230, %vm1231
        %vm1233 = vcmp.gt.f32.partialorder %v1227, 1e-06
        %vm1234 = vmand %vm1232, %vm1233
        %vm1235 = vcmp.lt.f32.partialorder %v1227, %v1165
        %vm1236 = vmand %vm1234, %vm1235
        %v1237 = vstv %s1188
        %v1238 = vmul.f32 %v1237, %v145
        %v1239 = vstv %s1190
        %v1240 = vmul.f32 %v1239, %v142
        %v1241 = vadd.f32 %v1238, %v1240
        %v1242 = vstv %s1192
        %v1243 = vadd.f32 %v1241, %v1242
        %v1244 = vstv %s1194
        %v1245 = vmul.f32 %v1244, %v145
        %v1246 = vstv %s1196
        %v1247 = vmul.f32 %v1246, %v142
        %v1248 = vadd.f32 %v1245, %v1247
        %v1249 = vstv %s1198
        %v1250 = vadd.f32 %v1248, %v1249
        %v1251 = vstv %s1200
        %v1252 = vmul.f32 %v1251, %v145
        %v1253 = vstv %s1202
        %v1254 = vmul.f32 %v1253, %v142
        %v1255 = vadd.f32 %v1252, %v1254
        %v1256 = vstv %s1204
        %v1257 = vadd.f32 %v1255, %v1256
        %v1258 = vsel %vm1236, %v1227, %v1165
        %v1259 = vsel %vm1236, %v1243, %v1166
        %v1260 = vsel %vm1236, %v1250, %v1167
        %v1261 = vsel %vm1236, %v1257, %v1168
        %s1262 = sadd.s32 %s146, 12
        %s1263 = sld [smem:[#allocation2 + %s1262]]
        %s1264 = sadd.s32 %s146, 140
        %s1265 = sld [smem:[#allocation2 + %s1264]]
        %s1266 = sadd.s32 %s146, 268
        %s1267 = sld [smem:[#allocation2 + %s1266]]
        %s1268 = sadd.s32 %s146, 396
        %s1269 = sld [smem:[#allocation2 + %s1268]]
        %s1270 = sadd.s32 %s146, 524
        %s1271 = sld [smem:[#allocation2 + %s1270]]
        %s1272 = sadd.s32 %s146, 652
        %s1273 = sld [smem:[#allocation2 + %s1272]]
        %s1274 = sadd.s32 %s146, 780
        %s1275 = sld [smem:[#allocation2 + %s1274]]
        %s1276 = sadd.s32 %s146, 908
        %s1277 = sld [smem:[#allocation2 + %s1276]]
        %s1278 = sadd.s32 %s146, 1036
        %s1279 = sld [smem:[#allocation2 + %s1278]]
        %s1280 = sadd.s32 %s146, 1164
        %s1281 = sld [smem:[#allocation2 + %s1280]]
        %s1282 = sadd.s32 %s146, 1292
        %s1283 = sld [smem:[#allocation2 + %s1282]]
        %s1284 = sadd.s32 %s146, 1420
        %s1285 = sld [smem:[#allocation2 + %s1284]]
        %s1286 = sadd.s32 %s146, 1548
        %s1287 = sld [smem:[#allocation2 + %s1286]]
        %s1288 = sadd.s32 %s146, 1676
        %s1289 = sld [smem:[#allocation2 + %s1288]]
        %s1290 = sadd.s32 %s146, 1804
        %s1291 = sld [smem:[#allocation2 + %s1290]]
        %s1292 = sadd.s32 %s146, 1932
        %s1293 = sld [smem:[#allocation2 + %s1292]]
        %s1294 = sadd.s32 %s146, 2060
        %s1295 = sld [smem:[#allocation2 + %s1294]]
        %s1296 = sadd.s32 %s146, 2188
        %s1297 = sld [smem:[#allocation2 + %s1296]]
        %v1298 = vstv %s1263
        %v1299 = vmul.f32 %v1298, %v145
        %v1300 = vstv %s1265
        %v1301 = vmul.f32 %v1300, %v142
        %v1302 = vadd.f32 %v1299, %v1301
        %v1303 = vstv %s1267
        %v1304 = vadd.f32 %v1302, %v1303
        %v1305 = vstv %s1269
        %v1306 = vmul.f32 %v1305, %v145
        %v1307 = vstv %s1271
        %v1308 = vmul.f32 %v1307, %v142
        %v1309 = vadd.f32 %v1306, %v1308
        %v1310 = vstv %s1273
        %v1311 = vadd.f32 %v1309, %v1310
        %v1312 = vsub.f32 1.0, %v1304
        %v1313 = vsub.f32 %v1312, %v1311
        %v1314 = vstv %s1275
        %v1315 = vmul.f32 %v1314, %v145
        %v1316 = vstv %s1277
        %v1317 = vmul.f32 %v1316, %v142
        %v1318 = vadd.f32 %v1315, %v1317
        %v1319 = vstv %s1279
        %v1320 = vadd.f32 %v1318, %v1319
        %vm1321 = vcmp.ge.f32.partialorder %v1304, 0.0
        %vm1322 = vcmp.ge.f32.partialorder %v1311, 0.0
        %vm1323 = vmand %vm1321, %vm1322
        %vm1324 = vcmp.ge.f32.partialorder %v1313, 0.0
        %vm1325 = vmand %vm1323, %vm1324
        %vm1326 = vcmp.gt.f32.partialorder %v1320, 1e-06
        %vm1327 = vmand %vm1325, %vm1326
        %vm1328 = vcmp.lt.f32.partialorder %v1320, %v1258
        %vm1329 = vmand %vm1327, %vm1328
        %v1330 = vstv %s1281
        %v1331 = vmul.f32 %v1330, %v145
        %v1332 = vstv %s1283
        %v1333 = vmul.f32 %v1332, %v142
        %v1334 = vadd.f32 %v1331, %v1333
        %v1335 = vstv %s1285
        %v1336 = vadd.f32 %v1334, %v1335
        %v1337 = vstv %s1287
        %v1338 = vmul.f32 %v1337, %v145
        %v1339 = vstv %s1289
        %v1340 = vmul.f32 %v1339, %v142
        %v1341 = vadd.f32 %v1338, %v1340
        %v1342 = vstv %s1291
        %v1343 = vadd.f32 %v1341, %v1342
        %v1344 = vstv %s1293
        %v1345 = vmul.f32 %v1344, %v145
        %v1346 = vstv %s1295
        %v1347 = vmul.f32 %v1346, %v142
        %v1348 = vadd.f32 %v1345, %v1347
        %v1349 = vstv %s1297
        %v1350 = vadd.f32 %v1348, %v1349
        %v1351 = vsel %vm1329, %v1320, %v1258
        %v1352 = vsel %vm1329, %v1336, %v1259
        %v1353 = vsel %vm1329, %v1343, %v1260
        %v1354 = vsel %vm1329, %v1350, %v1261
        %s1355 = sadd.s32 %s146, 13
        %s1356 = sld [smem:[#allocation2 + %s1355]]
        %s1357 = sadd.s32 %s146, 141
        %s1358 = sld [smem:[#allocation2 + %s1357]]
        %s1359 = sadd.s32 %s146, 269
        %s1360 = sld [smem:[#allocation2 + %s1359]]
        %s1361 = sadd.s32 %s146, 397
        %s1362 = sld [smem:[#allocation2 + %s1361]]
        %s1363 = sadd.s32 %s146, 525
        %s1364 = sld [smem:[#allocation2 + %s1363]]
        %s1365 = sadd.s32 %s146, 653
        %s1366 = sld [smem:[#allocation2 + %s1365]]
        %s1367 = sadd.s32 %s146, 781
        %s1368 = sld [smem:[#allocation2 + %s1367]]
        %s1369 = sadd.s32 %s146, 909
        %s1370 = sld [smem:[#allocation2 + %s1369]]
        %s1371 = sadd.s32 %s146, 1037
        %s1372 = sld [smem:[#allocation2 + %s1371]]
        %s1373 = sadd.s32 %s146, 1165
        %s1374 = sld [smem:[#allocation2 + %s1373]]
        %s1375 = sadd.s32 %s146, 1293
        %s1376 = sld [smem:[#allocation2 + %s1375]]
        %s1377 = sadd.s32 %s146, 1421
        %s1378 = sld [smem:[#allocation2 + %s1377]]
        %s1379 = sadd.s32 %s146, 1549
        %s1380 = sld [smem:[#allocation2 + %s1379]]
        %s1381 = sadd.s32 %s146, 1677
        %s1382 = sld [smem:[#allocation2 + %s1381]]
        %s1383 = sadd.s32 %s146, 1805
        %s1384 = sld [smem:[#allocation2 + %s1383]]
        %s1385 = sadd.s32 %s146, 1933
        %s1386 = sld [smem:[#allocation2 + %s1385]]
        %s1387 = sadd.s32 %s146, 2061
        %s1388 = sld [smem:[#allocation2 + %s1387]]
        %s1389 = sadd.s32 %s146, 2189
        %s1390 = sld [smem:[#allocation2 + %s1389]]
        %v1391 = vstv %s1356
        %v1392 = vmul.f32 %v1391, %v145
        %v1393 = vstv %s1358
        %v1394 = vmul.f32 %v1393, %v142
        %v1395 = vadd.f32 %v1392, %v1394
        %v1396 = vstv %s1360
        %v1397 = vadd.f32 %v1395, %v1396
        %v1398 = vstv %s1362
        %v1399 = vmul.f32 %v1398, %v145
        %v1400 = vstv %s1364
        %v1401 = vmul.f32 %v1400, %v142
        %v1402 = vadd.f32 %v1399, %v1401
        %v1403 = vstv %s1366
        %v1404 = vadd.f32 %v1402, %v1403
        %v1405 = vsub.f32 1.0, %v1397
        %v1406 = vsub.f32 %v1405, %v1404
        %v1407 = vstv %s1368
        %v1408 = vmul.f32 %v1407, %v145
        %v1409 = vstv %s1370
        %v1410 = vmul.f32 %v1409, %v142
        %v1411 = vadd.f32 %v1408, %v1410
        %v1412 = vstv %s1372
        %v1413 = vadd.f32 %v1411, %v1412
        %vm1414 = vcmp.ge.f32.partialorder %v1397, 0.0
        %vm1415 = vcmp.ge.f32.partialorder %v1404, 0.0
        %vm1416 = vmand %vm1414, %vm1415
        %vm1417 = vcmp.ge.f32.partialorder %v1406, 0.0
        %vm1418 = vmand %vm1416, %vm1417
        %vm1419 = vcmp.gt.f32.partialorder %v1413, 1e-06
        %vm1420 = vmand %vm1418, %vm1419
        %vm1421 = vcmp.lt.f32.partialorder %v1413, %v1351
        %vm1422 = vmand %vm1420, %vm1421
        %v1423 = vstv %s1374
        %v1424 = vmul.f32 %v1423, %v145
        %v1425 = vstv %s1376
        %v1426 = vmul.f32 %v1425, %v142
        %v1427 = vadd.f32 %v1424, %v1426
        %v1428 = vstv %s1378
        %v1429 = vadd.f32 %v1427, %v1428
        %v1430 = vstv %s1380
        %v1431 = vmul.f32 %v1430, %v145
        %v1432 = vstv %s1382
        %v1433 = vmul.f32 %v1432, %v142
        %v1434 = vadd.f32 %v1431, %v1433
        %v1435 = vstv %s1384
        %v1436 = vadd.f32 %v1434, %v1435
        %v1437 = vstv %s1386
        %v1438 = vmul.f32 %v1437, %v145
        %v1439 = vstv %s1388
        %v1440 = vmul.f32 %v1439, %v142
        %v1441 = vadd.f32 %v1438, %v1440
        %v1442 = vstv %s1390
        %v1443 = vadd.f32 %v1441, %v1442
        %v1444 = vsel %vm1422, %v1413, %v1351
        %v1445 = vsel %vm1422, %v1429, %v1352
        %v1446 = vsel %vm1422, %v1436, %v1353
        %v1447 = vsel %vm1422, %v1443, %v1354
        %s1448 = sadd.s32 %s146, 14
        %s1449 = sld [smem:[#allocation2 + %s1448]]
        %s1450 = sadd.s32 %s146, 142
        %s1451 = sld [smem:[#allocation2 + %s1450]]
        %s1452 = sadd.s32 %s146, 270
        %s1453 = sld [smem:[#allocation2 + %s1452]]
        %s1454 = sadd.s32 %s146, 398
        %s1455 = sld [smem:[#allocation2 + %s1454]]
        %s1456 = sadd.s32 %s146, 526
        %s1457 = sld [smem:[#allocation2 + %s1456]]
        %s1458 = sadd.s32 %s146, 654
        %s1459 = sld [smem:[#allocation2 + %s1458]]
        %s1460 = sadd.s32 %s146, 782
        %s1461 = sld [smem:[#allocation2 + %s1460]]
        %s1462 = sadd.s32 %s146, 910
        %s1463 = sld [smem:[#allocation2 + %s1462]]
        %s1464 = sadd.s32 %s146, 1038
        %s1465 = sld [smem:[#allocation2 + %s1464]]
        %s1466 = sadd.s32 %s146, 1166
        %s1467 = sld [smem:[#allocation2 + %s1466]]
        %s1468 = sadd.s32 %s146, 1294
        %s1469 = sld [smem:[#allocation2 + %s1468]]
        %s1470 = sadd.s32 %s146, 1422
        %s1471 = sld [smem:[#allocation2 + %s1470]]
        %s1472 = sadd.s32 %s146, 1550
        %s1473 = sld [smem:[#allocation2 + %s1472]]
        %s1474 = sadd.s32 %s146, 1678
        %s1475 = sld [smem:[#allocation2 + %s1474]]
        %s1476 = sadd.s32 %s146, 1806
        %s1477 = sld [smem:[#allocation2 + %s1476]]
        %s1478 = sadd.s32 %s146, 1934
        %s1479 = sld [smem:[#allocation2 + %s1478]]
        %s1480 = sadd.s32 %s146, 2062
        %s1481 = sld [smem:[#allocation2 + %s1480]]
        %s1482 = sadd.s32 %s146, 2190
        %s1483 = sld [smem:[#allocation2 + %s1482]]
        %v1484 = vstv %s1449
        %v1485 = vmul.f32 %v1484, %v145
        %v1486 = vstv %s1451
        %v1487 = vmul.f32 %v1486, %v142
        %v1488 = vadd.f32 %v1485, %v1487
        %v1489 = vstv %s1453
        %v1490 = vadd.f32 %v1488, %v1489
        %v1491 = vstv %s1455
        %v1492 = vmul.f32 %v1491, %v145
        %v1493 = vstv %s1457
        %v1494 = vmul.f32 %v1493, %v142
        %v1495 = vadd.f32 %v1492, %v1494
        %v1496 = vstv %s1459
        %v1497 = vadd.f32 %v1495, %v1496
        %v1498 = vsub.f32 1.0, %v1490
        %v1499 = vsub.f32 %v1498, %v1497
        %v1500 = vstv %s1461
        %v1501 = vmul.f32 %v1500, %v145
        %v1502 = vstv %s1463
        %v1503 = vmul.f32 %v1502, %v142
        %v1504 = vadd.f32 %v1501, %v1503
        %v1505 = vstv %s1465
        %v1506 = vadd.f32 %v1504, %v1505
        %vm1507 = vcmp.ge.f32.partialorder %v1490, 0.0
        %vm1508 = vcmp.ge.f32.partialorder %v1497, 0.0
        %vm1509 = vmand %vm1507, %vm1508
        %vm1510 = vcmp.ge.f32.partialorder %v1499, 0.0
        %vm1511 = vmand %vm1509, %vm1510
        %vm1512 = vcmp.gt.f32.partialorder %v1506, 1e-06
        %vm1513 = vmand %vm1511, %vm1512
        %vm1514 = vcmp.lt.f32.partialorder %v1506, %v1444
        %vm1515 = vmand %vm1513, %vm1514
        %v1516 = vstv %s1467
        %v1517 = vmul.f32 %v1516, %v145
        %v1518 = vstv %s1469
        %v1519 = vmul.f32 %v1518, %v142
        %v1520 = vadd.f32 %v1517, %v1519
        %v1521 = vstv %s1471
        %v1522 = vadd.f32 %v1520, %v1521
        %v1523 = vstv %s1473
        %v1524 = vmul.f32 %v1523, %v145
        %v1525 = vstv %s1475
        %v1526 = vmul.f32 %v1525, %v142
        %v1527 = vadd.f32 %v1524, %v1526
        %v1528 = vstv %s1477
        %v1529 = vadd.f32 %v1527, %v1528
        %v1530 = vstv %s1479
        %v1531 = vmul.f32 %v1530, %v145
        %v1532 = vstv %s1481
        %v1533 = vmul.f32 %v1532, %v142
        %v1534 = vadd.f32 %v1531, %v1533
        %v1535 = vstv %s1483
        %v1536 = vadd.f32 %v1534, %v1535
        %v1537 = vsel %vm1515, %v1506, %v1444
        %v1538 = vsel %vm1515, %v1522, %v1445
        %v1539 = vsel %vm1515, %v1529, %v1446
        %v1540 = vsel %vm1515, %v1536, %v1447
        %s1541 = sadd.s32 %s146, 15
        %s1542 = sld [smem:[#allocation2 + %s1541]]
        %s1543 = sadd.s32 %s146, 143
        %s1544 = sld [smem:[#allocation2 + %s1543]]
        %s1545 = sadd.s32 %s146, 271
        %s1546 = sld [smem:[#allocation2 + %s1545]]
        %s1547 = sadd.s32 %s146, 399
        %s1548 = sld [smem:[#allocation2 + %s1547]]
        %s1549 = sadd.s32 %s146, 527
        %s1550 = sld [smem:[#allocation2 + %s1549]]
        %s1551 = sadd.s32 %s146, 655
        %s1552 = sld [smem:[#allocation2 + %s1551]]
        %s1553 = sadd.s32 %s146, 783
        %s1554 = sld [smem:[#allocation2 + %s1553]]
        %s1555 = sadd.s32 %s146, 911
        %s1556 = sld [smem:[#allocation2 + %s1555]]
        %s1557 = sadd.s32 %s146, 1039
        %s1558 = sld [smem:[#allocation2 + %s1557]]
        %s1559 = sadd.s32 %s146, 1167
        %s1560 = sld [smem:[#allocation2 + %s1559]]
        %s1561 = sadd.s32 %s146, 1295
        %s1562 = sld [smem:[#allocation2 + %s1561]]
        %s1563 = sadd.s32 %s146, 1423
        %s1564 = sld [smem:[#allocation2 + %s1563]]
        %s1565 = sadd.s32 %s146, 1551
        %s1566 = sld [smem:[#allocation2 + %s1565]]
        %s1567 = sadd.s32 %s146, 1679
        %s1568 = sld [smem:[#allocation2 + %s1567]]
        %s1569 = sadd.s32 %s146, 1807
        %s1570 = sld [smem:[#allocation2 + %s1569]]
        %s1571 = sadd.s32 %s146, 1935
        %s1572 = sld [smem:[#allocation2 + %s1571]]
        %s1573 = sadd.s32 %s146, 2063
        %s1574 = sld [smem:[#allocation2 + %s1573]]
        %s1575 = sadd.s32 %s146, 2191
        %s1576 = sld [smem:[#allocation2 + %s1575]]
        %v1577 = vstv %s1542
        %v1578 = vmul.f32 %v1577, %v145
        %v1579 = vstv %s1544
        %v1580 = vmul.f32 %v1579, %v142
        %v1581 = vadd.f32 %v1578, %v1580
        %v1582 = vstv %s1546
        %v1583 = vadd.f32 %v1581, %v1582
        %v1584 = vstv %s1548
        %v1585 = vmul.f32 %v1584, %v145
        %v1586 = vstv %s1550
        %v1587 = vmul.f32 %v1586, %v142
        %v1588 = vadd.f32 %v1585, %v1587
        %v1589 = vstv %s1552
        %v1590 = vadd.f32 %v1588, %v1589
        %v1591 = vsub.f32 1.0, %v1583
        %v1592 = vsub.f32 %v1591, %v1590
        %v1593 = vstv %s1554
        %v1594 = vmul.f32 %v1593, %v145
        %v1595 = vstv %s1556
        %v1596 = vmul.f32 %v1595, %v142
        %v1597 = vadd.f32 %v1594, %v1596
        %v1598 = vstv %s1558
        %v1599 = vadd.f32 %v1597, %v1598
        %vm1600 = vcmp.ge.f32.partialorder %v1583, 0.0
        %vm1601 = vcmp.ge.f32.partialorder %v1590, 0.0
        %vm1602 = vmand %vm1600, %vm1601
        %vm1603 = vcmp.ge.f32.partialorder %v1592, 0.0
        %vm1604 = vmand %vm1602, %vm1603
        %vm1605 = vcmp.gt.f32.partialorder %v1599, 1e-06
        %vm1606 = vmand %vm1604, %vm1605
        %vm1607 = vcmp.lt.f32.partialorder %v1599, %v1537
        %vm1608 = vmand %vm1606, %vm1607
        %v1609 = vstv %s1560
        %v1610 = vmul.f32 %v1609, %v145
        %v1611 = vstv %s1562
        %v1612 = vmul.f32 %v1611, %v142
        %v1613 = vadd.f32 %v1610, %v1612
        %v1614 = vstv %s1564
        %v1615 = vadd.f32 %v1613, %v1614
        %v1616 = vstv %s1566
        %v1617 = vmul.f32 %v1616, %v145
        %v1618 = vstv %s1568
        %v1619 = vmul.f32 %v1618, %v142
        %v1620 = vadd.f32 %v1617, %v1619
        %v1621 = vstv %s1570
        %v1622 = vadd.f32 %v1620, %v1621
        %v1623 = vstv %s1572
        %v1624 = vmul.f32 %v1623, %v145
        %v1625 = vstv %s1574
        %v1626 = vmul.f32 %v1625, %v142
        %v1627 = vadd.f32 %v1624, %v1626
        %v1628 = vstv %s1576
        %v1629 = vadd.f32 %v1627, %v1628
        %v1630 = vsel %vm1608, %v1599, %v1537
        %v1631 = vsel %vm1608, %v1615, %v1538
        %v1632 = vsel %vm1608, %v1622, %v1539
        %v1633 = vsel %vm1608, %v1629, %v1540
        %s1634 = sadd.s32 %s146, 16
        %s1635 = sld [smem:[#allocation2 + %s1634]]
        %s1636 = sadd.s32 %s146, 144
        %s1637 = sld [smem:[#allocation2 + %s1636]]
        %s1638 = sadd.s32 %s146, 272
        %s1639 = sld [smem:[#allocation2 + %s1638]]
        %s1640 = sadd.s32 %s146, 400
        %s1641 = sld [smem:[#allocation2 + %s1640]]
        %s1642 = sadd.s32 %s146, 528
        %s1643 = sld [smem:[#allocation2 + %s1642]]
        %s1644 = sadd.s32 %s146, 656
        %s1645 = sld [smem:[#allocation2 + %s1644]]
        %s1646 = sadd.s32 %s146, 784
        %s1647 = sld [smem:[#allocation2 + %s1646]]
        %s1648 = sadd.s32 %s146, 912
        %s1649 = sld [smem:[#allocation2 + %s1648]]
        %s1650 = sadd.s32 %s146, 1040
        %s1651 = sld [smem:[#allocation2 + %s1650]]
        %s1652 = sadd.s32 %s146, 1168
        %s1653 = sld [smem:[#allocation2 + %s1652]]
        %s1654 = sadd.s32 %s146, 1296
        %s1655 = sld [smem:[#allocation2 + %s1654]]
        %s1656 = sadd.s32 %s146, 1424
        %s1657 = sld [smem:[#allocation2 + %s1656]]
        %s1658 = sadd.s32 %s146, 1552
        %s1659 = sld [smem:[#allocation2 + %s1658]]
        %s1660 = sadd.s32 %s146, 1680
        %s1661 = sld [smem:[#allocation2 + %s1660]]
        %s1662 = sadd.s32 %s146, 1808
        %s1663 = sld [smem:[#allocation2 + %s1662]]
        %s1664 = sadd.s32 %s146, 1936
        %s1665 = sld [smem:[#allocation2 + %s1664]]
        %s1666 = sadd.s32 %s146, 2064
        %s1667 = sld [smem:[#allocation2 + %s1666]]
        %s1668 = sadd.s32 %s146, 2192
        %s1669 = sld [smem:[#allocation2 + %s1668]]
        %v1670 = vstv %s1635
        %v1671 = vmul.f32 %v1670, %v145
        %v1672 = vstv %s1637
        %v1673 = vmul.f32 %v1672, %v142
        %v1674 = vadd.f32 %v1671, %v1673
        %v1675 = vstv %s1639
        %v1676 = vadd.f32 %v1674, %v1675
        %v1677 = vstv %s1641
        %v1678 = vmul.f32 %v1677, %v145
        %v1679 = vstv %s1643
        %v1680 = vmul.f32 %v1679, %v142
        %v1681 = vadd.f32 %v1678, %v1680
        %v1682 = vstv %s1645
        %v1683 = vadd.f32 %v1681, %v1682
        %v1684 = vsub.f32 1.0, %v1676
        %v1685 = vsub.f32 %v1684, %v1683
        %v1686 = vstv %s1647
        %v1687 = vmul.f32 %v1686, %v145
        %v1688 = vstv %s1649
        %v1689 = vmul.f32 %v1688, %v142
        %v1690 = vadd.f32 %v1687, %v1689
        %v1691 = vstv %s1651
        %v1692 = vadd.f32 %v1690, %v1691
        %vm1693 = vcmp.ge.f32.partialorder %v1676, 0.0
        %vm1694 = vcmp.ge.f32.partialorder %v1683, 0.0
        %vm1695 = vmand %vm1693, %vm1694
        %vm1696 = vcmp.ge.f32.partialorder %v1685, 0.0
        %vm1697 = vmand %vm1695, %vm1696
        %vm1698 = vcmp.gt.f32.partialorder %v1692, 1e-06
        %vm1699 = vmand %vm1697, %vm1698
        %vm1700 = vcmp.lt.f32.partialorder %v1692, %v1630
        %vm1701 = vmand %vm1699, %vm1700
        %v1702 = vstv %s1653
        %v1703 = vmul.f32 %v1702, %v145
        %v1704 = vstv %s1655
        %v1705 = vmul.f32 %v1704, %v142
        %v1706 = vadd.f32 %v1703, %v1705
        %v1707 = vstv %s1657
        %v1708 = vadd.f32 %v1706, %v1707
        %v1709 = vstv %s1659
        %v1710 = vmul.f32 %v1709, %v145
        %v1711 = vstv %s1661
        %v1712 = vmul.f32 %v1711, %v142
        %v1713 = vadd.f32 %v1710, %v1712
        %v1714 = vstv %s1663
        %v1715 = vadd.f32 %v1713, %v1714
        %v1716 = vstv %s1665
        %v1717 = vmul.f32 %v1716, %v145
        %v1718 = vstv %s1667
        %v1719 = vmul.f32 %v1718, %v142
        %v1720 = vadd.f32 %v1717, %v1719
        %v1721 = vstv %s1669
        %v1722 = vadd.f32 %v1720, %v1721
        %v1723 = vsel %vm1701, %v1692, %v1630
        %v1724 = vsel %vm1701, %v1708, %v1631
        %v1725 = vsel %vm1701, %v1715, %v1632
        %v1726 = vsel %vm1701, %v1722, %v1633
        %s1727 = sadd.s32 %s146, 17
        %s1728 = sld [smem:[#allocation2 + %s1727]]
        %s1729 = sadd.s32 %s146, 145
        %s1730 = sld [smem:[#allocation2 + %s1729]]
        %s1731 = sadd.s32 %s146, 273
        %s1732 = sld [smem:[#allocation2 + %s1731]]
        %s1733 = sadd.s32 %s146, 401
        %s1734 = sld [smem:[#allocation2 + %s1733]]
        %s1735 = sadd.s32 %s146, 529
        %s1736 = sld [smem:[#allocation2 + %s1735]]
        %s1737 = sadd.s32 %s146, 657
        %s1738 = sld [smem:[#allocation2 + %s1737]]
        %s1739 = sadd.s32 %s146, 785
        %s1740 = sld [smem:[#allocation2 + %s1739]]
        %s1741 = sadd.s32 %s146, 913
        %s1742 = sld [smem:[#allocation2 + %s1741]]
        %s1743 = sadd.s32 %s146, 1041
        %s1744 = sld [smem:[#allocation2 + %s1743]]
        %s1745 = sadd.s32 %s146, 1169
        %s1746 = sld [smem:[#allocation2 + %s1745]]
        %s1747 = sadd.s32 %s146, 1297
        %s1748 = sld [smem:[#allocation2 + %s1747]]
        %s1749 = sadd.s32 %s146, 1425
        %s1750 = sld [smem:[#allocation2 + %s1749]]
        %s1751 = sadd.s32 %s146, 1553
        %s1752 = sld [smem:[#allocation2 + %s1751]]
        %s1753 = sadd.s32 %s146, 1681
        %s1754 = sld [smem:[#allocation2 + %s1753]]
        %s1755 = sadd.s32 %s146, 1809
        %s1756 = sld [smem:[#allocation2 + %s1755]]
        %s1757 = sadd.s32 %s146, 1937
        %s1758 = sld [smem:[#allocation2 + %s1757]]
        %s1759 = sadd.s32 %s146, 2065
        %s1760 = sld [smem:[#allocation2 + %s1759]]
        %s1761 = sadd.s32 %s146, 2193
        %s1762 = sld [smem:[#allocation2 + %s1761]]
        %v1763 = vstv %s1728
        %v1764 = vmul.f32 %v1763, %v145
        %v1765 = vstv %s1730
        %v1766 = vmul.f32 %v1765, %v142
        %v1767 = vadd.f32 %v1764, %v1766
        %v1768 = vstv %s1732
        %v1769 = vadd.f32 %v1767, %v1768
        %v1770 = vstv %s1734
        %v1771 = vmul.f32 %v1770, %v145
        %v1772 = vstv %s1736
        %v1773 = vmul.f32 %v1772, %v142
        %v1774 = vadd.f32 %v1771, %v1773
        %v1775 = vstv %s1738
        %v1776 = vadd.f32 %v1774, %v1775
        %v1777 = vsub.f32 1.0, %v1769
        %v1778 = vsub.f32 %v1777, %v1776
        %v1779 = vstv %s1740
        %v1780 = vmul.f32 %v1779, %v145
        %v1781 = vstv %s1742
        %v1782 = vmul.f32 %v1781, %v142
        %v1783 = vadd.f32 %v1780, %v1782
        %v1784 = vstv %s1744
        %v1785 = vadd.f32 %v1783, %v1784
        %vm1786 = vcmp.ge.f32.partialorder %v1769, 0.0
        %vm1787 = vcmp.ge.f32.partialorder %v1776, 0.0
        %vm1788 = vmand %vm1786, %vm1787
        %vm1789 = vcmp.ge.f32.partialorder %v1778, 0.0
        %vm1790 = vmand %vm1788, %vm1789
        %vm1791 = vcmp.gt.f32.partialorder %v1785, 1e-06
        %vm1792 = vmand %vm1790, %vm1791
        %vm1793 = vcmp.lt.f32.partialorder %v1785, %v1723
        %vm1794 = vmand %vm1792, %vm1793
        %v1795 = vstv %s1746
        %v1796 = vmul.f32 %v1795, %v145
        %v1797 = vstv %s1748
        %v1798 = vmul.f32 %v1797, %v142
        %v1799 = vadd.f32 %v1796, %v1798
        %v1800 = vstv %s1750
        %v1801 = vadd.f32 %v1799, %v1800
        %v1802 = vstv %s1752
        %v1803 = vmul.f32 %v1802, %v145
        %v1804 = vstv %s1754
        %v1805 = vmul.f32 %v1804, %v142
        %v1806 = vadd.f32 %v1803, %v1805
        %v1807 = vstv %s1756
        %v1808 = vadd.f32 %v1806, %v1807
        %v1809 = vstv %s1758
        %v1810 = vmul.f32 %v1809, %v145
        %v1811 = vstv %s1760
        %v1812 = vmul.f32 %v1811, %v142
        %v1813 = vadd.f32 %v1810, %v1812
        %v1814 = vstv %s1762
        %v1815 = vadd.f32 %v1813, %v1814
        %v1816 = vsel %vm1794, %v1785, %v1723
        %v1817 = vsel %vm1794, %v1801, %v1724
        %v1818 = vsel %vm1794, %v1808, %v1725
        %v1819 = vsel %vm1794, %v1815, %v1726
        %vm1820 = vcmp.lt.f32.partialorder %v1816, 1e+09
        %v1821 = vsel %vm1820, 1, 0
        %v1822 = vcvt.s32.f32 %v1821
        %1823 = vst [vmem:[%s130] sm:$0x3] %v1817
        %s1824 = scalar_lea.vmem %s130, 2
        %1825 = vst [vmem:[%s1824] sm:$0x3] %v1818
        %s1826 = scalar_lea.vmem %s130, 4
        %1827 = vst [vmem:[%s1826] sm:$0x3] %v1819
        %s1828 = scalar_lea.vmem %s130, 6
        %1829 = vst [vmem:[%s1828] sm:$0x3] %v1822
        %p1830 = scmp.lt.s32.totalorder %s17, 1
        %s1831 = scalar_select %p1830, %s17, 1
        %p1832 = scmp.lt.s32.totalorder %s18, 0
        %s1833 = scalar_select %p1832, %s18, 0
        %s1834 = smul.addr %s1831, 4
        %s1835 = sadd.s32 %s1833, %s1834
        %s1836 = smul.addr %s1835, 2
        %s1837 = scalar_lea.vmem %s1, %s1836
        // Predicated region
        $region29: #{soft_renderer_forward.3} parent=23 // pred_check
          %p1838 = pneg %p66
        $region30: #{soft_renderer_forward.3} parent=23 // pred_check_branch
          %1840 = sbr.rel (%p1838) target = $region32
        $region31: #{soft_renderer_forward.3} parent=23 // pred_region
          _
        $region32: #{soft_renderer_forward.3} parent=23 // pred_fallthru
          _
      $region24: #{soft_renderer_forward.3} parent=5 // pred_fallthru
        _
      %p1841 = scmp.le.s32.totalorder 2, %s8
      // Predicated region
      $region33: #{soft_renderer_forward.3} parent=5 // pred_check
        %p1842 = pneg %p1841
      $region34: #{soft_renderer_forward.3} parent=5 // pred_check_branch
        %1844 = sbr.rel (%p1842) target = $region36
      $region35: #{soft_renderer_forward.3} parent=5 // pred_region
        %s1845 = ssub.s32 %s8, 2
        // Predicated region
        $region37: #{soft_renderer_forward.3} parent=35 // pred_check
          %p1846 = pneg %p72
        $region38: #{soft_renderer_forward.3} parent=35 // pred_check_branch
          %1848 = sbr.rel (%p1846) target = $region40
        $region39: #{soft_renderer_forward.3} parent=35 // pred_region
          %p1849 = scmp.lt.s32.totalorder %s19, 1
          %s1850 = scalar_select %p1849, %s19, 1
          %p1851 = scmp.lt.s32.totalorder %s20, 0
          %s1852 = scalar_select %p1851, %s20, 0
          %s1853 = smul.addr %s1850, 4
          %s1854 = sadd.s32 %s1852, %s1853
          %s1855 = smul.addr %s1854, 2
          %s1856 = scalar_lea.vmem %s1, %s1855
        $region40: #{soft_renderer_forward.3} parent=35 // pred_fallthru
          _
      $region36: #{soft_renderer_forward.3} parent=5 // pred_fallthru
        _
    $region6: #{soft_renderer_forward.3} parent=1 // loop_footer
      %s12 = sadd.s32 1, %s8
    $region7: #{soft_renderer_forward.3} parent=1 // loop_footer_branch
      %7 = sbr.rel target = $region3
    $region8: #{soft_renderer_forward.3} parent=1 // loop_exit
      _
    %1857 = vsyncpa [#allocation3], 1
    %s1858 = scalar_lea.sflag [#allocation3], 1
    %1859 = vsyncpa %s1858, 1

</llo_original>
